<compile_context>
chip_gen: v5e
topology: v5e:2x2
jax: 0.10.0
libtpu: 0.0.40
codegen_flags: <defaults>
</compile_context>

<pallas_src>
import functools

import jax
import jax.numpy as jnp
from jax.experimental import pallas as pl
from jax.experimental.pallas import tpu as pltpu

# ----- model hyper-parameters (from the PyTorch module) -----
FEATURES_PER_LANDMARK = 2
NUM_LANDMARKS = 21
FEATURES_PER_HAND = NUM_LANDMARKS * FEATURES_PER_LANDMARK
TARGET_FEATURES_PER_FRAME = FEATURES_PER_HAND * 2   # 168
INPUT_SIZE = TARGET_FEATURES_PER_FRAME
HIDDEN_SIZE = 128
NUM_LAYERS = 2
NUM_CLASSES = 5

LANE = 128      # lane-dense padded widths
SUBLANE = 8     # f32 sublane granularity


def _round_up(n, m):
    return ((n + m - 1) // m) * m


def _sigmoid(x):
    # sigmoid(x) == 0.5 * tanh(x/2) + 0.5 : one EUP tanh + two VPU ops.
    return 0.5 * jnp.tanh(0.5 * x) + 0.5


# ----------------------------------------------------------------------------
# Fused Pallas kernel: interleaved 2-layer LSTM recurrence + FC epilogue.
# ----------------------------------------------------------------------------
def fused_lstm_fc_kernel(T, B,
                         x_ref,      # (T*B, F_pad) bf16  time-major rows
                         wih0_ref,   # (F_pad, 4H)  bf16  cols [i|f|o|g]
                         whh0_ref,   # (H, 4H)      bf16  cols [i|f|o|g]
                         b0_ref,     # (1, 4H)      f32   (b_ih0 + b_hh0)
                         w1_ref,     # (2H, 4H)     bf16  [wih1; whh1], [i|f|o|g]
                         b1_ref,     # (1, 4H)      f32   (b_ih1 + b_hh1)
                         wfc_ref,    # (H, LANE)    bf16  (classes zero-padded)
                         bfc_ref,    # (1, LANE)    f32
                         o_ref,      # (B, LANE)    f32
                         gx0_ref):   # (T*B, 4H)    f32   VMEM scratch
    H = whh0_ref.shape[0]

    # ---- hoisted layer-0 input projection -> VMEM scratch ----
    gx0_ref[...] = jnp.dot(x_ref[...], wih0_ref[...],
                           preferred_element_type=jnp.float32) + b0_ref[...]

    # Hoist the layer-1 bias broadcast out of the loop (no CSE in-loop).
    b1 = jnp.broadcast_to(b1_ref[...], (B, 4 * H))

    def gate_update(gates, c):
        # Gate columns pre-permuted to [i | f | o | g]:
        # one fused sigmoid over a contiguous (B,3H) slab + one tanh.
        sig = _sigmoid(gates[:, :3 * H])
        i_g = sig[:, 0 * H:1 * H]
        f_g = sig[:, 1 * H:2 * H]
        o_g = sig[:, 2 * H:3 * H]
        g_g = jnp.tanh(gates[:, 3 * H:4 * H])
        c_new = f_g * c + i_g * g_g          # f32 elementwise (v5e-safe)
        h_new = o_g * jnp.tanh(c_new)
        return h_new, c_new

    h0 = jnp.zeros((B, H), jnp.float32)
    c0 = jnp.zeros((B, H), jnp.float32)
    h1 = jnp.zeros((B, H), jnp.float32)
    c1 = jnp.zeros((B, H), jnp.float32)

    # Interleaved recurrence: layer-1 step t follows layer-0 step t, so its
    # MXU/EUP work fills the latency gaps of layer-0 step t+1.
    # T is tiny & static: fully unrolled (vreg pressure is low now).
    for t in range(T):
        # --- layer 0, step t ---
        gates0 = gx0_ref[pl.ds(t * B, B), :] + jnp.dot(
            h0.astype(jnp.bfloat16), whh0_ref[...],
            preferred_element_type=jnp.float32)              # (B, 4H) f32
        h0, c0 = gate_update(gates0, c0)

        # --- layer 1, step t : [h0_t, h1_{t-1}] @ [wih1; whh1] ---
        # TODO(synk): inter-layer LSTM dropout (p=0.5) not applied (eval mode).
        lhs1 = jnp.concatenate([h0, h1], axis=1).astype(jnp.bfloat16)  # (B,2H)
        gates1 = jnp.dot(lhs1, w1_ref[...],
                         preferred_element_type=jnp.float32) + b1
        h1, c1 = gate_update(gates1, c1)

    # ---- FC epilogue (lane-dense output, classes zero-padded to LANE) ----
    # TODO(synk): nn.Dropout before the FC not applied (eval mode).
    o_ref[...] = jnp.dot(h1.astype(jnp.bfloat16), wfc_ref[...],
                         preferred_element_type=jnp.float32) + bfc_ref[...]


# ----------------------------------------------------------------------------
# Parameter preparation (one-time)
# ----------------------------------------------------------------------------
def _reorder_gate_cols(w_t, H):
    """Permute 4H columns from PyTorch order [i|f|g|o] to [i|f|o|g]."""
    return jnp.concatenate(
        [w_t[:, :2 * H], w_t[:, 3 * H:4 * H], w_t[:, 2 * H:3 * H]], axis=1)


def prepare_params(params):
    """Transpose, reorder gate columns, cast MXU operands to bf16, combine
    biases, stack layer-1 weights, pad F and the FC output lanes."""
    H = HIDDEN_SIZE
    (w_ih0, w_hh0, b_ih0, b_hh0), (w_ih1, w_hh1, b_ih1, b_hh1) = params["lstm"]

    F = w_ih0.shape[1]
    F_pad = _round_up(F, LANE)                      # 168 -> 256 (tile-dense K)

    wih0 = jnp.zeros((F_pad, 4 * H), jnp.float32).at[:F, :].set(
        jnp.transpose(w_ih0))
    wih0 = _reorder_gate_cols(wih0, H).astype(jnp.bfloat16)      # (F_pad, 4H)
    whh0 = _reorder_gate_cols(jnp.transpose(w_hh0), H).astype(jnp.bfloat16)
    b0 = _reorder_gate_cols((b_ih0 + b_hh0).reshape(1, -1),
                            H).astype(jnp.float32)               # (1, 4H)

    w1 = jnp.concatenate([jnp.transpose(w_ih1), jnp.transpose(w_hh1)], axis=0)
    w1 = _reorder_gate_cols(w1, H).astype(jnp.bfloat16)          # (2H, 4H)
    b1 = _reorder_gate_cols((b_ih1 + b_hh1).reshape(1, -1),
                            H).astype(jnp.float32)               # (1, 4H)

    C = params["fc_w"].shape[0]
    wfc = jnp.zeros((H, LANE), jnp.float32).at[:, :C].set(
        jnp.transpose(params["fc_w"]))
    bfc = jnp.zeros((1, LANE), jnp.float32).at[0, :C].set(params["fc_b"])

    return {"wih0": wih0, "whh0": whh0, "b0": b0,
            "w1": w1, "b1": b1,
            "fc_w": wfc.astype(jnp.bfloat16), "fc_b": bfc}


# ----------------------------------------------------------------------------
# Forward wrapper
# ----------------------------------------------------------------------------
@jax.jit
def hand_gesture_lstm_forward(x, prepped):
    """Full forward pass.  x: (B, T, input_size), batch_first like PyTorch."""
    B, T, F = x.shape
    B_pad = max(SUBLANE, _round_up(B, SUBLANE))      # sublane-dense batch
    F_pad = prepped["wih0"].shape[0]                 # lane-dense contraction
    H = prepped["whh0"].shape[0]

    # Pad batch + feature dims, go time-major, flatten (T,B) for the hoisted
    # projection.  Padded rows/cols are zero -> results unchanged.
    x_p = jnp.pad(x, ((0, B_pad - B), (0, 0), (0, F_pad - F)))
    x2d = jnp.transpose(x_p, (1, 0, 2)).reshape(T * B_pad, F_pad)
    x2d = x2d.astype(jnp.bfloat16)

    kernel = functools.partial(fused_lstm_fc_kernel, T, B_pad)
    vmem = lambda: pl.BlockSpec(memory_space=pltpu.MemorySpace.VMEM)
    out = pl.pallas_call(
        kernel,
        out_shape=jax.ShapeDtypeStruct((B_pad, LANE), jnp.float32),
        in_specs=[vmem() for _ in range(8)],     # whole arrays, VMEM-resident
        out_specs=vmem(),
        scratch_shapes=[pltpu.VMEM((T * B_pad, 4 * H), jnp.float32)],
    )(x2d, prepped["wih0"], prepped["whh0"], prepped["b0"],
      prepped["w1"], prepped["b1"], prepped["fc_w"], prepped["fc_b"])

    return out[:B, :NUM_CLASSES]


# ----------------------------------------------------------------------------
# Reference (plain JAX) for verification
# ----------------------------------------------------------------------------
def reference_forward(x, params, matmul_dtype=jnp.float32):
    """Pure-JAX reference.  matmul_dtype=bf16 mirrors the kernel's MXU casts
    (f32 accumulation, f32 elementwise); matmul_dtype=f32 is the exact
    PyTorch-equivalent math."""
    B = x.shape[0]
    seq = jnp.swapaxes(x, 0, 1)                     # (T, B, F)
    for (w_ih, w_hh, b_ih, b_hh) in params["lstm"]:
        H = w_hh.shape[1]
        wih_t = jnp.transpose(w_ih).astype(matmul_dtype)
        whh_t = jnp.transpose(w_hh).astype(matmul_dtype)
        bias = (b_ih + b_hh)[None, :]

        def step(carry, x_t, wih_t=wih_t, whh_t=whh_t, bias=bias):
            h, c = carry
            gates = (jnp.dot(x_t.astype(matmul_dtype), wih_t,
                             preferred_element_type=jnp.float32)
                     + jnp.dot(h.astype(matmul_dtype), whh_t,
                               preferred_element_type=jnp.float32)
                     + bias)
            i, f, g, o = jnp.split(gates, 4, axis=-1)
            c = jax.nn.sigmoid(f) * c + jax.nn.sigmoid(i) * jnp.tanh(g)
            h = jax.nn.sigmoid(o) * jnp.tanh(c)
            return (h, c), h

        init = (jnp.zeros((B, H), jnp.float32),
                jnp.zeros((B, H), jnp.float32))
        _, seq = jax.lax.scan(step, init, seq)
    h_last = seq[-1]
    wfc_t = jnp.transpose(params["fc_w"]).astype(matmul_dtype)
    return (jnp.dot(h_last.astype(matmul_dtype), wfc_t,
                    preferred_element_type=jnp.float32)
            + params["fc_b"][None, :])


# ----------------------------------------------------------------------------
# Deterministic parameter init (PyTorch-style U(-1/sqrt(H), 1/sqrt(H)))
# ----------------------------------------------------------------------------
def init_params(key):
    bound = 1.0 / jnp.sqrt(jnp.float32(HIDDEN_SIZE))
    lstm_params = []
    for layer in range(NUM_LAYERS):
        in_f = INPUT_SIZE if layer == 0 else HIDDEN_SIZE
        key, k1, k2, k3, k4 = jax.random.split(key, 5)
        w_ih = jax.random.uniform(k1, (4 * HIDDEN_SIZE, in_f), jnp.float32,
                                  -bound, bound)
        w_hh = jax.random.uniform(k2, (4 * HIDDEN_SIZE, HIDDEN_SIZE),
                                  jnp.float32, -bound, bound)
        b_ih = jax.random.uniform(k3, (4 * HIDDEN_SIZE,), jnp.float32,
                                  -bound, bound)
        b_hh = jax.random.uniform(k4, (4 * HIDDEN_SIZE,), jnp.float32,
                                  -bound, bound)
        lstm_params.append((w_ih, w_hh, b_ih, b_hh))
    key, k5, k6 = jax.random.split(key, 3)
    fc_w = jax.random.uniform(k5, (NUM_CLASSES, HIDDEN_SIZE), jnp.float32,
                              -bound, bound)
    fc_b = jax.random.uniform(k6, (NUM_CLASSES,), jnp.float32, -bound, bound)
    return {"lstm": lstm_params, "fc_w": fc_w, "fc_b": fc_b}


if __name__ == "__main__":
    key = jax.random.PRNGKey(0)
    key, pkey, xkey = jax.random.split(key, 3)

    params = init_params(pkey)
    prepped = prepare_params(params)          # one-time weight prep

    B, T = 2, 8
    x = jax.random.normal(xkey, (B, T, INPUT_SIZE), jnp.float32)

    out = hand_gesture_lstm_forward(x, prepped)
    out = jax.block_until_ready(out)
    assert out.shape == (B, NUM_CLASSES)

    # Logic check vs. a reference with matching bf16 MXU casts (tight tol).
    ref_bf16 = reference_forward(x, params, matmul_dtype=jnp.bfloat16)
    err = jnp.max(jnp.abs(out - ref_bf16))
    assert jnp.allclose(out, ref_bf16, rtol=5e-3, atol=5e-3), (
        f"mismatch vs bf16-matmul reference: max abs err {err}")

    # Precision sanity check vs. the full-f32 reference (bf16 operands only
    # perturb the 5-class logits slightly; loose tolerance).
    ref_f32 = reference_forward(x, params, matmul_dtype=jnp.float32)
    err32 = jnp.max(jnp.abs(out - ref_f32))
    assert jnp.allclose(out, ref_f32, rtol=5e-2, atol=5e-2), (
        f"mismatch vs f32 reference: max abs err {err32}")

    print("KERNEL_OK")
</pallas_src>

<mosaic_0001>
module attributes {stable_mosaic.version = 11 : i64} {
  func.func @fused_lstm_fc_kernel(%arg0: memref<64x128xbf16, #tpu.memory_space<vmem>>, %arg1: memref<128x512xbf16, #tpu.memory_space<vmem>>, %arg2: memref<128x512xbf16, #tpu.memory_space<vmem>>, %arg3: memref<1x512xf32, #tpu.memory_space<vmem>>, %arg4: memref<256x512xbf16, #tpu.memory_space<vmem>>, %arg5: memref<1x512xf32, #tpu.memory_space<vmem>>, %arg6: memref<128x128xbf16, #tpu.memory_space<vmem>>, %arg7: memref<1x128xf32, #tpu.memory_space<vmem>>, %arg8: memref<8x128xf32, #tpu.memory_space<vmem>>, %arg9: memref<64x512xf32, #tpu.memory_space<vmem>>) attributes {dimension_semantics = [], scalar_prefetch = 0 : i64, scratch_operands = 1 : i64, tpu.core_type = #tpu.core_type<tc>} {
    %c0 = arith.constant 0 : index
    %c0_0 = arith.constant 0 : index
    %0 = vector.load %arg0[%c0, %c0_0] : memref<64x128xbf16, #tpu.memory_space<vmem>>, vector<64x128xbf16>
    %c0_1 = arith.constant 0 : index
    %c0_2 = arith.constant 0 : index
    %1 = vector.load %arg1[%c0_1, %c0_2] : memref<128x512xbf16, #tpu.memory_space<vmem>>, vector<128x512xbf16>
    %cst = arith.constant dense<0.000000e+00> : vector<64x512xf32>
    %2 = tpu.matmul %0, %1, %cst {dimension_numbers = #tpu.dot_dimension_numbers<[1], [0], [0], [1], [0, 0, 1, 1], [], []>} : vector<64x128xbf16>, vector<128x512xbf16>, vector<64x512xf32> -> vector<64x512xf32>
    %c0_3 = arith.constant 0 : index
    %c0_4 = arith.constant 0 : index
    %3 = vector.load %arg3[%c0_3, %c0_4] : memref<1x512xf32, #tpu.memory_space<vmem>>, vector<1x512xf32>
    %4 = vector.broadcast %3 : vector<1x512xf32> to vector<64x512xf32>
    %5 = arith.addf %2, %4 : vector<64x512xf32>
    %c0_5 = arith.constant 0 : index
    %c0_6 = arith.constant 0 : index
    %6 = vector.load %arg9[%c0_5, %c0_6] : memref<64x512xf32, #tpu.memory_space<vmem>>, vector<64x512xf32>
    tpu.vector_store %arg9[%c0_5, %c0_6], %5 {strides = array<i32>} : memref<64x512xf32, #tpu.memory_space<vmem>>, vector<64x512xf32>,
    %c0_7 = arith.constant 0 : index
    %c0_8 = arith.constant 0 : index
    %7 = vector.load %arg5[%c0_7, %c0_8] : memref<1x512xf32, #tpu.memory_space<vmem>>, vector<1x512xf32>
    %8 = vector.shape_cast %7 : vector<1x512xf32> to vector<1x512xf32>
    %9 = vector.broadcast %8 : vector<1x512xf32> to vector<8x512xf32>
    %cst_9 = arith.constant 0.000000e+00 : f32
    %10 = vector.broadcast %cst_9 : f32 to vector<8x128xf32>
    %cst_10 = arith.constant 0.000000e+00 : f32
    %11 = vector.broadcast %cst_10 : f32 to vector<8x128xf32>
    %cst_11 = arith.constant 0.000000e+00 : f32
    %12 = vector.broadcast %cst_11 : f32 to vector<8x128xf32>
    %cst_12 = arith.constant 0.000000e+00 : f32
    %13 = vector.broadcast %cst_12 : f32 to vector<8x128xf32>
    %c0_13 = arith.constant 0 : index
    %c0_14 = arith.constant 0 : index
    %14 = vector.load %arg9[%c0_13, %c0_14] : memref<64x512xf32, #tpu.memory_space<vmem>>, vector<8x512xf32>
    %15 = arith.truncf %10 : vector<8x128xf32> to vector<8x128xbf16>
    %c0_15 = arith.constant 0 : index
    %c0_16 = arith.constant 0 : index
    %16 = vector.load %arg2[%c0_15, %c0_16] : memref<128x512xbf16, #tpu.memory_space<vmem>>, vector<128x512xbf16>
    %cst_17 = arith.constant dense<0.000000e+00> : vector<8x512xf32>
    %17 = tpu.matmul %15, %16, %cst_17 {dimension_numbers = #tpu.dot_dimension_numbers<[1], [0], [0], [1], [0, 0, 1, 1], [], []>} : vector<8x128xbf16>, vector<128x512xbf16>, vector<8x512xf32> -> vector<8x512xf32>
    %18 = arith.addf %14, %17 : vector<8x512xf32>
    %19 = vector.extract_strided_slice %18 {offsets = [0, 0], sizes = [8, 384], strides = [1, 1]} : vector<8x512xf32> to vector<8x384xf32>
    %cst_18 = arith.constant 5.000000e-01 : f32
    %20 = vector.broadcast %cst_18 : f32 to vector<8x384xf32>
    %21 = arith.mulf %20, %19 : vector<8x384xf32>
    %22 = math.tanh %21 : vector<8x384xf32>
    %cst_19 = arith.constant 5.000000e-01 : f32
    %23 = vector.broadcast %cst_19 : f32 to vector<8x384xf32>
    %24 = arith.mulf %23, %22 : vector<8x384xf32>
    %cst_20 = arith.constant 5.000000e-01 : f32
    %25 = vector.broadcast %cst_20 : f32 to vector<8x384xf32>
    %26 = arith.addf %24, %25 : vector<8x384xf32>
    %27 = vector.extract_strided_slice %26 {offsets = [0, 0], sizes = [8, 128], strides = [1, 1]} : vector<8x384xf32> to vector<8x128xf32>
    %28 = vector.extract_strided_slice %26 {offsets = [0, 128], sizes = [8, 128], strides = [1, 1]} : vector<8x384xf32> to vector<8x128xf32>
    %29 = vector.extract_strided_slice %26 {offsets = [0, 256], sizes = [8, 128], strides = [1, 1]} : vector<8x384xf32> to vector<8x128xf32>
    %30 = vector.extract_strided_slice %18 {offsets = [0, 384], sizes = [8, 128], strides = [1, 1]} : vector<8x512xf32> to vector<8x128xf32>
    %31 = math.tanh %30 : vector<8x128xf32>
    %32 = arith.mulf %28, %11 : vector<8x128xf32>
    %33 = arith.mulf %27, %31 : vector<8x128xf32>
    %34 = arith.addf %32, %33 : vector<8x128xf32>
    %35 = math.tanh %34 : vector<8x128xf32>
    %36 = arith.mulf %29, %35 : vector<8x128xf32>
    %37 = tpu.concatenate %36, %12 in 1 : vector<8x128xf32>, vector<8x128xf32> -> vector<8x256xf32>
    %38 = arith.truncf %37 : vector<8x256xf32> to vector<8x256xbf16>
    %c0_21 = arith.constant 0 : index
    %c0_22 = arith.constant 0 : index
    %39 = vector.load %arg4[%c0_21, %c0_22] : memref<256x512xbf16, #tpu.memory_space<vmem>>, vector<256x512xbf16>
    %cst_23 = arith.constant dense<0.000000e+00> : vector<8x512xf32>
    %40 = tpu.matmul %38, %39, %cst_23 {dimension_numbers = #tpu.dot_dimension_numbers<[1], [0], [0], [1], [0, 0, 1, 1], [], []>} : vector<8x256xbf16>, vector<256x512xbf16>, vector<8x512xf32> -> vector<8x512xf32>
    %41 = arith.addf %40, %9 : vector<8x512xf32>
    %42 = vector.extract_strided_slice %41 {offsets = [0, 0], sizes = [8, 384], strides = [1, 1]} : vector<8x512xf32> to vector<8x384xf32>
    %cst_24 = arith.constant 5.000000e-01 : f32
    %43 = vector.broadcast %cst_24 : f32 to vector<8x384xf32>
    %44 = arith.mulf %43, %42 : vector<8x384xf32>
    %45 = math.tanh %44 : vector<8x384xf32>
    %cst_25 = arith.constant 5.000000e-01 : f32
    %46 = vector.broadcast %cst_25 : f32 to vector<8x384xf32>
    %47 = arith.mulf %46, %45 : vector<8x384xf32>
    %cst_26 = arith.constant 5.000000e-01 : f32
    %48 = vector.broadcast %cst_26 : f32 to vector<8x384xf32>
    %49 = arith.addf %47, %48 : vector<8x384xf32>
    %50 = vector.extract_strided_slice %49 {offsets = [0, 0], sizes = [8, 128], strides = [1, 1]} : vector<8x384xf32> to vector<8x128xf32>
    %51 = vector.extract_strided_slice %49 {offsets = [0, 128], sizes = [8, 128], strides = [1, 1]} : vector<8x384xf32> to vector<8x128xf32>
    %52 = vector.extract_strided_slice %49 {offsets = [0, 256], sizes = [8, 128], strides = [1, 1]} : vector<8x384xf32> to vector<8x128xf32>
    %53 = vector.extract_strided_slice %41 {offsets = [0, 384], sizes = [8, 128], strides = [1, 1]} : vector<8x512xf32> to vector<8x128xf32>
    %54 = math.tanh %53 : vector<8x128xf32>
    %55 = arith.mulf %51, %13 : vector<8x128xf32>
    %56 = arith.mulf %50, %54 : vector<8x128xf32>
    %57 = arith.addf %55, %56 : vector<8x128xf32>
    %58 = math.tanh %57 : vector<8x128xf32>
    %59 = arith.mulf %52, %58 : vector<8x128xf32>
    %c8 = arith.constant 8 : index
    %c0_27 = arith.constant 0 : index
    %60 = vector.load %arg9[%c8, %c0_27] : memref<64x512xf32, #tpu.memory_space<vmem>>, vector<8x512xf32>
    %61 = arith.truncf %36 : vector<8x128xf32> to vector<8x128xbf16>
    %c0_28 = arith.constant 0 : index
    %c0_29 = arith.constant 0 : index
    %62 = vector.load %arg2[%c0_28, %c0_29] : memref<128x512xbf16, #tpu.memory_space<vmem>>, vector<128x512xbf16>
    %cst_30 = arith.constant dense<0.000000e+00> : vector<8x512xf32>
    %63 = tpu.matmul %61, %62, %cst_30 {dimension_numbers = #tpu.dot_dimension_numbers<[1], [0], [0], [1], [0, 0, 1, 1], [], []>} : vector<8x128xbf16>, vector<128x512xbf16>, vector<8x512xf32> -> vector<8x512xf32>
    %64 = arith.addf %60, %63 : vector<8x512xf32>
    %65 = vector.extract_strided_slice %64 {offsets = [0, 0], sizes = [8, 384], strides = [1, 1]} : vector<8x512xf32> to vector<8x384xf32>
    %cst_31 = arith.constant 5.000000e-01 : f32
    %66 = vector.broadcast %cst_31 : f32 to vector<8x384xf32>
    %67 = arith.mulf %66, %65 : vector<8x384xf32>
    %68 = math.tanh %67 : vector<8x384xf32>
    %cst_32 = arith.constant 5.000000e-01 : f32
    %69 = vector.broadcast %cst_32 : f32 to vector<8x384xf32>
    %70 = arith.mulf %69, %68 : vector<8x384xf32>
    %cst_33 = arith.constant 5.000000e-01 : f32
    %71 = vector.broadcast %cst_33 : f32 to vector<8x384xf32>
    %72 = arith.addf %70, %71 : vector<8x384xf32>
    %73 = vector.extract_strided_slice %72 {offsets = [0, 0], sizes = [8, 128], strides = [1, 1]} : vector<8x384xf32> to vector<8x128xf32>
    %74 = vector.extract_strided_slice %72 {offsets = [0, 128], sizes = [8, 128], strides = [1, 1]} : vector<8x384xf32> to vector<8x128xf32>
    %75 = vector.extract_strided_slice %72 {offsets = [0, 256], sizes = [8, 128], strides = [1, 1]} : vector<8x384xf32> to vector<8x128xf32>
    %76 = vector.extract_strided_slice %64 {offsets = [0, 384], sizes = [8, 128], strides = [1, 1]} : vector<8x512xf32> to vector<8x128xf32>
    %77 = math.tanh %76 : vector<8x128xf32>
    %78 = arith.mulf %74, %34 : vector<8x128xf32>
    %79 = arith.mulf %73, %77 : vector<8x128xf32>
    %80 = arith.addf %78, %79 : vector<8x128xf32>
    %81 = math.tanh %80 : vector<8x128xf32>
    %82 = arith.mulf %75, %81 : vector<8x128xf32>
    %83 = tpu.concatenate %82, %59 in 1 : vector<8x128xf32>, vector<8x128xf32> -> vector<8x256xf32>
    %84 = arith.truncf %83 : vector<8x256xf32> to vector<8x256xbf16>
    %c0_34 = arith.constant 0 : index
    %c0_35 = arith.constant 0 : index
    %85 = vector.load %arg4[%c0_34, %c0_35] : memref<256x512xbf16, #tpu.memory_space<vmem>>, vector<256x512xbf16>
    %cst_36 = arith.constant dense<0.000000e+00> : vector<8x512xf32>
    %86 = tpu.matmul %84, %85, %cst_36 {dimension_numbers = #tpu.dot_dimension_numbers<[1], [0], [0], [1], [0, 0, 1, 1], [], []>} : vector<8x256xbf16>, vector<256x512xbf16>, vector<8x512xf32> -> vector<8x512xf32>
    %87 = arith.addf %86, %9 : vector<8x512xf32>
    %88 = vector.extract_strided_slice %87 {offsets = [0, 0], sizes = [8, 384], strides = [1, 1]} : vector<8x512xf32> to vector<8x384xf32>
    %cst_37 = arith.constant 5.000000e-01 : f32
    %89 = vector.broadcast %cst_37 : f32 to vector<8x384xf32>
    %90 = arith.mulf %89, %88 : vector<8x384xf32>
    %91 = math.tanh %90 : vector<8x384xf32>
    %cst_38 = arith.constant 5.000000e-01 : f32
    %92 = vector.broadcast %cst_38 : f32 to vector<8x384xf32>
    %93 = arith.mulf %92, %91 : vector<8x384xf32>
    %cst_39 = arith.constant 5.000000e-01 : f32
    %94 = vector.broadcast %cst_39 : f32 to vector<8x384xf32>
    %95 = arith.addf %93, %94 : vector<8x384xf32>
    %96 = vector.extract_strided_slice %95 {offsets = [0, 0], sizes = [8, 128], strides = [1, 1]} : vector<8x384xf32> to vector<8x128xf32>
    %97 = vector.extract_strided_slice %95 {offsets = [0, 128], sizes = [8, 128], strides = [1, 1]} : vector<8x384xf32> to vector<8x128xf32>
    %98 = vector.extract_strided_slice %95 {offsets = [0, 256], sizes = [8, 128], strides = [1, 1]} : vector<8x384xf32> to vector<8x128xf32>
    %99 = vector.extract_strided_slice %87 {offsets = [0, 384], sizes = [8, 128], strides = [1, 1]} : vector<8x512xf32> to vector<8x128xf32>
    %100 = math.tanh %99 : vector<8x128xf32>
    %101 = arith.mulf %97, %57 : vector<8x128xf32>
    %102 = arith.mulf %96, %100 : vector<8x128xf32>
    %103 = arith.addf %101, %102 : vector<8x128xf32>
    %104 = math.tanh %103 : vector<8x128xf32>
    %105 = arith.mulf %98, %104 : vector<8x128xf32>
    %c16 = arith.constant 16 : index
    %c0_40 = arith.constant 0 : index
    %106 = vector.load %arg9[%c16, %c0_40] : memref<64x512xf32, #tpu.memory_space<vmem>>, vector<8x512xf32>
    %107 = arith.truncf %82 : vector<8x128xf32> to vector<8x128xbf16>
    %c0_41 = arith.constant 0 : index
    %c0_42 = arith.constant 0 : index
    %108 = vector.load %arg2[%c0_41, %c0_42] : memref<128x512xbf16, #tpu.memory_space<vmem>>, vector<128x512xbf16>
    %cst_43 = arith.constant dense<0.000000e+00> : vector<8x512xf32>
    %109 = tpu.matmul %107, %108, %cst_43 {dimension_numbers = #tpu.dot_dimension_numbers<[1], [0], [0], [1], [0, 0, 1, 1], [], []>} : vector<8x128xbf16>, vector<128x512xbf16>, vector<8x512xf32> -> vector<8x512xf32>
    %110 = arith.addf %106, %109 : vector<8x512xf32>
    %111 = vector.extract_strided_slice %110 {offsets = [0, 0], sizes = [8, 384], strides = [1, 1]} : vector<8x512xf32> to vector<8x384xf32>
    %cst_44 = arith.constant 5.000000e-01 : f32
    %112 = vector.broadcast %cst_44 : f32 to vector<8x384xf32>
    %113 = arith.mulf %112, %111 : vector<8x384xf32>
    %114 = math.tanh %113 : vector<8x384xf32>
    %cst_45 = arith.constant 5.000000e-01 : f32
    %115 = vector.broadcast %cst_45 : f32 to vector<8x384xf32>
    %116 = arith.mulf %115, %114 : vector<8x384xf32>
    %cst_46 = arith.constant 5.000000e-01 : f32
    %117 = vector.broadcast %cst_46 : f32 to vector<8x384xf32>
    %118 = arith.addf %116, %117 : vector<8x384xf32>
    %119 = vector.extract_strided_slice %118 {offsets = [0, 0], sizes = [8, 128], strides = [1, 1]} : vector<8x384xf32> to vector<8x128xf32>
    %120 = vector.extract_strided_slice %118 {offsets = [0, 128], sizes = [8, 128], strides = [1, 1]} : vector<8x384xf32> to vector<8x128xf32>
    %121 = vector.extract_strided_slice %118 {offsets = [0, 256], sizes = [8, 128], strides = [1, 1]} : vector<8x384xf32> to vector<8x128xf32>
    %122 = vector.extract_strided_slice %110 {offsets = [0, 384], sizes = [8, 128], strides = [1, 1]} : vector<8x512xf32> to vector<8x128xf32>
    %123 = math.tanh %122 : vector<8x128xf32>
    %124 = arith.mulf %120, %80 : vector<8x128xf32>
    %125 = arith.mulf %119, %123 : vector<8x128xf32>
    %126 = arith.addf %124, %125 : vector<8x128xf32>
    %127 = math.tanh %126 : vector<8x128xf32>
    %128 = arith.mulf %121, %127 : vector<8x128xf32>
    %129 = tpu.concatenate %128, %105 in 1 : vector<8x128xf32>, vector<8x128xf32> -> vector<8x256xf32>
    %130 = arith.truncf %129 : vector<8x256xf32> to vector<8x256xbf16>
    %c0_47 = arith.constant 0 : index
    %c0_48 = arith.constant 0 : index
    %131 = vector.load %arg4[%c0_47, %c0_48] : memref<256x512xbf16, #tpu.memory_space<vmem>>, vector<256x512xbf16>
    %cst_49 = arith.constant dense<0.000000e+00> : vector<8x512xf32>
    %132 = tpu.matmul %130, %131, %cst_49 {dimension_numbers = #tpu.dot_dimension_numbers<[1], [0], [0], [1], [0, 0, 1, 1], [], []>} : vector<8x256xbf16>, vector<256x512xbf16>, vector<8x512xf32> -> vector<8x512xf32>
    %133 = arith.addf %132, %9 : vector<8x512xf32>
    %134 = vector.extract_strided_slice %133 {offsets = [0, 0], sizes = [8, 384], strides = [1, 1]} : vector<8x512xf32> to vector<8x384xf32>
    %cst_50 = arith.constant 5.000000e-01 : f32
    %135 = vector.broadcast %cst_50 : f32 to vector<8x384xf32>
    %136 = arith.mulf %135, %134 : vector<8x384xf32>
    %137 = math.tanh %136 : vector<8x384xf32>
    %cst_51 = arith.constant 5.000000e-01 : f32
    %138 = vector.broadcast %cst_51 : f32 to vector<8x384xf32>
    %139 = arith.mulf %138, %137 : vector<8x384xf32>
    %cst_52 = arith.constant 5.000000e-01 : f32
    %140 = vector.broadcast %cst_52 : f32 to vector<8x384xf32>
    %141 = arith.addf %139, %140 : vector<8x384xf32>
    %142 = vector.extract_strided_slice %141 {offsets = [0, 0], sizes = [8, 128], strides = [1, 1]} : vector<8x384xf32> to vector<8x128xf32>
    %143 = vector.extract_strided_slice %141 {offsets = [0, 128], sizes = [8, 128], strides = [1, 1]} : vector<8x384xf32> to vector<8x128xf32>
    %144 = vector.extract_strided_slice %141 {offsets = [0, 256], sizes = [8, 128], strides = [1, 1]} : vector<8x384xf32> to vector<8x128xf32>
    %145 = vector.extract_strided_slice %133 {offsets = [0, 384], sizes = [8, 128], strides = [1, 1]} : vector<8x512xf32> to vector<8x128xf32>
    %146 = math.tanh %145 : vector<8x128xf32>
    %147 = arith.mulf %143, %103 : vector<8x128xf32>
    %148 = arith.mulf %142, %146 : vector<8x128xf32>
    %149 = arith.addf %147, %148 : vector<8x128xf32>
    %150 = math.tanh %149 : vector<8x128xf32>
    %151 = arith.mulf %144, %150 : vector<8x128xf32>
    %c24 = arith.constant 24 : index
    %c0_53 = arith.constant 0 : index
    %152 = vector.load %arg9[%c24, %c0_53] : memref<64x512xf32, #tpu.memory_space<vmem>>, vector<8x512xf32>
    %153 = arith.truncf %128 : vector<8x128xf32> to vector<8x128xbf16>
    %c0_54 = arith.constant 0 : index
    %c0_55 = arith.constant 0 : index
    %154 = vector.load %arg2[%c0_54, %c0_55] : memref<128x512xbf16, #tpu.memory_space<vmem>>, vector<128x512xbf16>
    %cst_56 = arith.constant dense<0.000000e+00> : vector<8x512xf32>
    %155 = tpu.matmul %153, %154, %cst_56 {dimension_numbers = #tpu.dot_dimension_numbers<[1], [0], [0], [1], [0, 0, 1, 1], [], []>} : vector<8x128xbf16>, vector<128x512xbf16>, vector<8x512xf32> -> vector<8x512xf32>
    %156 = arith.addf %152, %155 : vector<8x512xf32>
    %157 = vector.extract_strided_slice %156 {offsets = [0, 0], sizes = [8, 384], strides = [1, 1]} : vector<8x512xf32> to vector<8x384xf32>
    %cst_57 = arith.constant 5.000000e-01 : f32
    %158 = vector.broadcast %cst_57 : f32 to vector<8x384xf32>
    %159 = arith.mulf %158, %157 : vector<8x384xf32>
    %160 = math.tanh %159 : vector<8x384xf32>
    %cst_58 = arith.constant 5.000000e-01 : f32
    %161 = vector.broadcast %cst_58 : f32 to vector<8x384xf32>
    %162 = arith.mulf %161, %160 : vector<8x384xf32>
    %cst_59 = arith.constant 5.000000e-01 : f32
    %163 = vector.broadcast %cst_59 : f32 to vector<8x384xf32>
    %164 = arith.addf %162, %163 : vector<8x384xf32>
    %165 = vector.extract_strided_slice %164 {offsets = [0, 0], sizes = [8, 128], strides = [1, 1]} : vector<8x384xf32> to vector<8x128xf32>
    %166 = vector.extract_strided_slice %164 {offsets = [0, 128], sizes = [8, 128], strides = [1, 1]} : vector<8x384xf32> to vector<8x128xf32>
    %167 = vector.extract_strided_slice %164 {offsets = [0, 256], sizes = [8, 128], strides = [1, 1]} : vector<8x384xf32> to vector<8x128xf32>
    %168 = vector.extract_strided_slice %156 {offsets = [0, 384], sizes = [8, 128], strides = [1, 1]} : vector<8x512xf32> to vector<8x128xf32>
    %169 = math.tanh %168 : vector<8x128xf32>
    %170 = arith.mulf %166, %126 : vector<8x128xf32>
    %171 = arith.mulf %165, %169 : vector<8x128xf32>
    %172 = arith.addf %170, %171 : vector<8x128xf32>
    %173 = math.tanh %172 : vector<8x128xf32>
    %174 = arith.mulf %167, %173 : vector<8x128xf32>
    %175 = tpu.concatenate %174, %151 in 1 : vector<8x128xf32>, vector<8x128xf32> -> vector<8x256xf32>
    %176 = arith.truncf %175 : vector<8x256xf32> to vector<8x256xbf16>
    %c0_60 = arith.constant 0 : index
    %c0_61 = arith.constant 0 : index
    %177 = vector.load %arg4[%c0_60, %c0_61] : memref<256x512xbf16, #tpu.memory_space<vmem>>, vector<256x512xbf16>
    %cst_62 = arith.constant dense<0.000000e+00> : vector<8x512xf32>
    %178 = tpu.matmul %176, %177, %cst_62 {dimension_numbers = #tpu.dot_dimension_numbers<[1], [0], [0], [1], [0, 0, 1, 1], [], []>} : vector<8x256xbf16>, vector<256x512xbf16>, vector<8x512xf32> -> vector<8x512xf32>
    %179 = arith.addf %178, %9 : vector<8x512xf32>
    %180 = vector.extract_strided_slice %179 {offsets = [0, 0], sizes = [8, 384], strides = [1, 1]} : vector<8x512xf32> to vector<8x384xf32>
    %cst_63 = arith.constant 5.000000e-01 : f32
    %181 = vector.broadcast %cst_63 : f32 to vector<8x384xf32>
    %182 = arith.mulf %181, %180 : vector<8x384xf32>
    %183 = math.tanh %182 : vector<8x384xf32>
    %cst_64 = arith.constant 5.000000e-01 : f32
    %184 = vector.broadcast %cst_64 : f32 to vector<8x384xf32>
    %185 = arith.mulf %184, %183 : vector<8x384xf32>
    %cst_65 = arith.constant 5.000000e-01 : f32
    %186 = vector.broadcast %cst_65 : f32 to vector<8x384xf32>
    %187 = arith.addf %185, %186 : vector<8x384xf32>
    %188 = vector.extract_strided_slice %187 {offsets = [0, 0], sizes = [8, 128], strides = [1, 1]} : vector<8x384xf32> to vector<8x128xf32>
    %189 = vector.extract_strided_slice %187 {offsets = [0, 128], sizes = [8, 128], strides = [1, 1]} : vector<8x384xf32> to vector<8x128xf32>
    %190 = vector.extract_strided_slice %187 {offsets = [0, 256], sizes = [8, 128], strides = [1, 1]} : vector<8x384xf32> to vector<8x128xf32>
    %191 = vector.extract_strided_slice %179 {offsets = [0, 384], sizes = [8, 128], strides = [1, 1]} : vector<8x512xf32> to vector<8x128xf32>
    %192 = math.tanh %191 : vector<8x128xf32>
    %193 = arith.mulf %189, %149 : vector<8x128xf32>
    %194 = arith.mulf %188, %192 : vector<8x128xf32>
    %195 = arith.addf %193, %194 : vector<8x128xf32>
    %196 = math.tanh %195 : vector<8x128xf32>
    %197 = arith.mulf %190, %196 : vector<8x128xf32>
    %c32 = arith.constant 32 : index
    %c0_66 = arith.constant 0 : index
    %198 = vector.load %arg9[%c32, %c0_66] : memref<64x512xf32, #tpu.memory_space<vmem>>, vector<8x512xf32>
    %199 = arith.truncf %174 : vector<8x128xf32> to vector<8x128xbf16>
    %c0_67 = arith.constant 0 : index
    %c0_68 = arith.constant 0 : index
    %200 = vector.load %arg2[%c0_67, %c0_68] : memref<128x512xbf16, #tpu.memory_space<vmem>>, vector<128x512xbf16>
    %cst_69 = arith.constant dense<0.000000e+00> : vector<8x512xf32>
    %201 = tpu.matmul %199, %200, %cst_69 {dimension_numbers = #tpu.dot_dimension_numbers<[1], [0], [0], [1], [0, 0, 1, 1], [], []>} : vector<8x128xbf16>, vector<128x512xbf16>, vector<8x512xf32> -> vector<8x512xf32>
    %202 = arith.addf %198, %201 : vector<8x512xf32>
    %203 = vector.extract_strided_slice %202 {offsets = [0, 0], sizes = [8, 384], strides = [1, 1]} : vector<8x512xf32> to vector<8x384xf32>
    %cst_70 = arith.constant 5.000000e-01 : f32
    %204 = vector.broadcast %cst_70 : f32 to vector<8x384xf32>
    %205 = arith.mulf %204, %203 : vector<8x384xf32>
    %206 = math.tanh %205 : vector<8x384xf32>
    %cst_71 = arith.constant 5.000000e-01 : f32
    %207 = vector.broadcast %cst_71 : f32 to vector<8x384xf32>
    %208 = arith.mulf %207, %206 : vector<8x384xf32>
    %cst_72 = arith.constant 5.000000e-01 : f32
    %209 = vector.broadcast %cst_72 : f32 to vector<8x384xf32>
    %210 = arith.addf %208, %209 : vector<8x384xf32>
    %211 = vector.extract_strided_slice %210 {offsets = [0, 0], sizes = [8, 128], strides = [1, 1]} : vector<8x384xf32> to vector<8x128xf32>
    %212 = vector.extract_strided_slice %210 {offsets = [0, 128], sizes = [8, 128], strides = [1, 1]} : vector<8x384xf32> to vector<8x128xf32>
    %213 = vector.extract_strided_slice %210 {offsets = [0, 256], sizes = [8, 128], strides = [1, 1]} : vector<8x384xf32> to vector<8x128xf32>
    %214 = vector.extract_strided_slice %202 {offsets = [0, 384], sizes = [8, 128], strides = [1, 1]} : vector<8x512xf32> to vector<8x128xf32>
    %215 = math.tanh %214 : vector<8x128xf32>
    %216 = arith.mulf %212, %172 : vector<8x128xf32>
    %217 = arith.mulf %211, %215 : vector<8x128xf32>
    %218 = arith.addf %216, %217 : vector<8x128xf32>
    %219 = math.tanh %218 : vector<8x128xf32>
    %220 = arith.mulf %213, %219 : vector<8x128xf32>
    %221 = tpu.concatenate %220, %197 in 1 : vector<8x128xf32>, vector<8x128xf32> -> vector<8x256xf32>
    %222 = arith.truncf %221 : vector<8x256xf32> to vector<8x256xbf16>
    %c0_73 = arith.constant 0 : index
    %c0_74 = arith.constant 0 : index
    %223 = vector.load %arg4[%c0_73, %c0_74] : memref<256x512xbf16, #tpu.memory_space<vmem>>, vector<256x512xbf16>
    %cst_75 = arith.constant dense<0.000000e+00> : vector<8x512xf32>
    %224 = tpu.matmul %222, %223, %cst_75 {dimension_numbers = #tpu.dot_dimension_numbers<[1], [0], [0], [1], [0, 0, 1, 1], [], []>} : vector<8x256xbf16>, vector<256x512xbf16>, vector<8x512xf32> -> vector<8x512xf32>
    %225 = arith.addf %224, %9 : vector<8x512xf32>
    %226 = vector.extract_strided_slice %225 {offsets = [0, 0], sizes = [8, 384], strides = [1, 1]} : vector<8x512xf32> to vector<8x384xf32>
    %cst_76 = arith.constant 5.000000e-01 : f32
    %227 = vector.broadcast %cst_76 : f32 to vector<8x384xf32>
    %228 = arith.mulf %227, %226 : vector<8x384xf32>
    %229 = math.tanh %228 : vector<8x384xf32>
    %cst_77 = arith.constant 5.000000e-01 : f32
    %230 = vector.broadcast %cst_77 : f32 to vector<8x384xf32>
    %231 = arith.mulf %230, %229 : vector<8x384xf32>
    %cst_78 = arith.constant 5.000000e-01 : f32
    %232 = vector.broadcast %cst_78 : f32 to vector<8x384xf32>
    %233 = arith.addf %231, %232 : vector<8x384xf32>
    %234 = vector.extract_strided_slice %233 {offsets = [0, 0], sizes = [8, 128], strides = [1, 1]} : vector<8x384xf32> to vector<8x128xf32>
    %235 = vector.extract_strided_slice %233 {offsets = [0, 128], sizes = [8, 128], strides = [1, 1]} : vector<8x384xf32> to vector<8x128xf32>
    %236 = vector.extract_strided_slice %233 {offsets = [0, 256], sizes = [8, 128], strides = [1, 1]} : vector<8x384xf32> to vector<8x128xf32>
    %237 = vector.extract_strided_slice %225 {offsets = [0, 384], sizes = [8, 128], strides = [1, 1]} : vector<8x512xf32> to vector<8x128xf32>
    %238 = math.tanh %237 : vector<8x128xf32>
    %239 = arith.mulf %235, %195 : vector<8x128xf32>
    %240 = arith.mulf %234, %238 : vector<8x128xf32>
    %241 = arith.addf %239, %240 : vector<8x128xf32>
    %242 = math.tanh %241 : vector<8x128xf32>
    %243 = arith.mulf %236, %242 : vector<8x128xf32>
    %c40 = arith.constant 40 : index
    %c0_79 = arith.constant 0 : index
    %244 = vector.load %arg9[%c40, %c0_79] : memref<64x512xf32, #tpu.memory_space<vmem>>, vector<8x512xf32>
    %245 = arith.truncf %220 : vector<8x128xf32> to vector<8x128xbf16>
    %c0_80 = arith.constant 0 : index
    %c0_81 = arith.constant 0 : index
    %246 = vector.load %arg2[%c0_80, %c0_81] : memref<128x512xbf16, #tpu.memory_space<vmem>>, vector<128x512xbf16>
    %cst_82 = arith.constant dense<0.000000e+00> : vector<8x512xf32>
    %247 = tpu.matmul %245, %246, %cst_82 {dimension_numbers = #tpu.dot_dimension_numbers<[1], [0], [0], [1], [0, 0, 1, 1], [], []>} : vector<8x128xbf16>, vector<128x512xbf16>, vector<8x512xf32> -> vector<8x512xf32>
    %248 = arith.addf %244, %247 : vector<8x512xf32>
    %249 = vector.extract_strided_slice %248 {offsets = [0, 0], sizes = [8, 384], strides = [1, 1]} : vector<8x512xf32> to vector<8x384xf32>
    %cst_83 = arith.constant 5.000000e-01 : f32
    %250 = vector.broadcast %cst_83 : f32 to vector<8x384xf32>
    %251 = arith.mulf %250, %249 : vector<8x384xf32>
    %252 = math.tanh %251 : vector<8x384xf32>
    %cst_84 = arith.constant 5.000000e-01 : f32
    %253 = vector.broadcast %cst_84 : f32 to vector<8x384xf32>
    %254 = arith.mulf %253, %252 : vector<8x384xf32>
    %cst_85 = arith.constant 5.000000e-01 : f32
    %255 = vector.broadcast %cst_85 : f32 to vector<8x384xf32>
    %256 = arith.addf %254, %255 : vector<8x384xf32>
    %257 = vector.extract_strided_slice %256 {offsets = [0, 0], sizes = [8, 128], strides = [1, 1]} : vector<8x384xf32> to vector<8x128xf32>
    %258 = vector.extract_strided_slice %256 {offsets = [0, 128], sizes = [8, 128], strides = [1, 1]} : vector<8x384xf32> to vector<8x128xf32>
    %259 = vector.extract_strided_slice %256 {offsets = [0, 256], sizes = [8, 128], strides = [1, 1]} : vector<8x384xf32> to vector<8x128xf32>
    %260 = vector.extract_strided_slice %248 {offsets = [0, 384], sizes = [8, 128], strides = [1, 1]} : vector<8x512xf32> to vector<8x128xf32>
    %261 = math.tanh %260 : vector<8x128xf32>
    %262 = arith.mulf %258, %218 : vector<8x128xf32>
    %263 = arith.mulf %257, %261 : vector<8x128xf32>
    %264 = arith.addf %262, %263 : vector<8x128xf32>
    %265 = math.tanh %264 : vector<8x128xf32>
    %266 = arith.mulf %259, %265 : vector<8x128xf32>
    %267 = tpu.concatenate %266, %243 in 1 : vector<8x128xf32>, vector<8x128xf32> -> vector<8x256xf32>
    %268 = arith.truncf %267 : vector<8x256xf32> to vector<8x256xbf16>
    %c0_86 = arith.constant 0 : index
    %c0_87 = arith.constant 0 : index
    %269 = vector.load %arg4[%c0_86, %c0_87] : memref<256x512xbf16, #tpu.memory_space<vmem>>, vector<256x512xbf16>
    %cst_88 = arith.constant dense<0.000000e+00> : vector<8x512xf32>
    %270 = tpu.matmul %268, %269, %cst_88 {dimension_numbers = #tpu.dot_dimension_numbers<[1], [0], [0], [1], [0, 0, 1, 1], [], []>} : vector<8x256xbf16>, vector<256x512xbf16>, vector<8x512xf32> -> vector<8x512xf32>
    %271 = arith.addf %270, %9 : vector<8x512xf32>
    %272 = vector.extract_strided_slice %271 {offsets = [0, 0], sizes = [8, 384], strides = [1, 1]} : vector<8x512xf32> to vector<8x384xf32>
    %cst_89 = arith.constant 5.000000e-01 : f32
    %273 = vector.broadcast %cst_89 : f32 to vector<8x384xf32>
    %274 = arith.mulf %273, %272 : vector<8x384xf32>
    %275 = math.tanh %274 : vector<8x384xf32>
    %cst_90 = arith.constant 5.000000e-01 : f32
    %276 = vector.broadcast %cst_90 : f32 to vector<8x384xf32>
    %277 = arith.mulf %276, %275 : vector<8x384xf32>
    %cst_91 = arith.constant 5.000000e-01 : f32
    %278 = vector.broadcast %cst_91 : f32 to vector<8x384xf32>
    %279 = arith.addf %277, %278 : vector<8x384xf32>
    %280 = vector.extract_strided_slice %279 {offsets = [0, 0], sizes = [8, 128], strides = [1, 1]} : vector<8x384xf32> to vector<8x128xf32>
    %281 = vector.extract_strided_slice %279 {offsets = [0, 128], sizes = [8, 128], strides = [1, 1]} : vector<8x384xf32> to vector<8x128xf32>
    %282 = vector.extract_strided_slice %279 {offsets = [0, 256], sizes = [8, 128], strides = [1, 1]} : vector<8x384xf32> to vector<8x128xf32>
    %283 = vector.extract_strided_slice %271 {offsets = [0, 384], sizes = [8, 128], strides = [1, 1]} : vector<8x512xf32> to vector<8x128xf32>
    %284 = math.tanh %283 : vector<8x128xf32>
    %285 = arith.mulf %281, %241 : vector<8x128xf32>
    %286 = arith.mulf %280, %284 : vector<8x128xf32>
    %287 = arith.addf %285, %286 : vector<8x128xf32>
    %288 = math.tanh %287 : vector<8x128xf32>
    %289 = arith.mulf %282, %288 : vector<8x128xf32>
    %c48 = arith.constant 48 : index
    %c0_92 = arith.constant 0 : index
    %290 = vector.load %arg9[%c48, %c0_92] : memref<64x512xf32, #tpu.memory_space<vmem>>, vector<8x512xf32>
    %291 = arith.truncf %266 : vector<8x128xf32> to vector<8x128xbf16>
    %c0_93 = arith.constant 0 : index
    %c0_94 = arith.constant 0 : index
    %292 = vector.load %arg2[%c0_93, %c0_94] : memref<128x512xbf16, #tpu.memory_space<vmem>>, vector<128x512xbf16>
    %cst_95 = arith.constant dense<0.000000e+00> : vector<8x512xf32>
    %293 = tpu.matmul %291, %292, %cst_95 {dimension_numbers = #tpu.dot_dimension_numbers<[1], [0], [0], [1], [0, 0, 1, 1], [], []>} : vector<8x128xbf16>, vector<128x512xbf16>, vector<8x512xf32> -> vector<8x512xf32>
    %294 = arith.addf %290, %293 : vector<8x512xf32>
    %295 = vector.extract_strided_slice %294 {offsets = [0, 0], sizes = [8, 384], strides = [1, 1]} : vector<8x512xf32> to vector<8x384xf32>
    %cst_96 = arith.constant 5.000000e-01 : f32
    %296 = vector.broadcast %cst_96 : f32 to vector<8x384xf32>
    %297 = arith.mulf %296, %295 : vector<8x384xf32>
    %298 = math.tanh %297 : vector<8x384xf32>
    %cst_97 = arith.constant 5.000000e-01 : f32
    %299 = vector.broadcast %cst_97 : f32 to vector<8x384xf32>
    %300 = arith.mulf %299, %298 : vector<8x384xf32>
    %cst_98 = arith.constant 5.000000e-01 : f32
    %301 = vector.broadcast %cst_98 : f32 to vector<8x384xf32>
    %302 = arith.addf %300, %301 : vector<8x384xf32>
    %303 = vector.extract_strided_slice %302 {offsets = [0, 0], sizes = [8, 128], strides = [1, 1]} : vector<8x384xf32> to vector<8x128xf32>
    %304 = vector.extract_strided_slice %302 {offsets = [0, 128], sizes = [8, 128], strides = [1, 1]} : vector<8x384xf32> to vector<8x128xf32>
    %305 = vector.extract_strided_slice %302 {offsets = [0, 256], sizes = [8, 128], strides = [1, 1]} : vector<8x384xf32> to vector<8x128xf32>
    %306 = vector.extract_strided_slice %294 {offsets = [0, 384], sizes = [8, 128], strides = [1, 1]} : vector<8x512xf32> to vector<8x128xf32>
    %307 = math.tanh %306 : vector<8x128xf32>
    %308 = arith.mulf %304, %264 : vector<8x128xf32>
    %309 = arith.mulf %303, %307 : vector<8x128xf32>
    %310 = arith.addf %308, %309 : vector<8x128xf32>
    %311 = math.tanh %310 : vector<8x128xf32>
    %312 = arith.mulf %305, %311 : vector<8x128xf32>
    %313 = tpu.concatenate %312, %289 in 1 : vector<8x128xf32>, vector<8x128xf32> -> vector<8x256xf32>
    %314 = arith.truncf %313 : vector<8x256xf32> to vector<8x256xbf16>
    %c0_99 = arith.constant 0 : index
    %c0_100 = arith.constant 0 : index
    %315 = vector.load %arg4[%c0_99, %c0_100] : memref<256x512xbf16, #tpu.memory_space<vmem>>, vector<256x512xbf16>
    %cst_101 = arith.constant dense<0.000000e+00> : vector<8x512xf32>
    %316 = tpu.matmul %314, %315, %cst_101 {dimension_numbers = #tpu.dot_dimension_numbers<[1], [0], [0], [1], [0, 0, 1, 1], [], []>} : vector<8x256xbf16>, vector<256x512xbf16>, vector<8x512xf32> -> vector<8x512xf32>
    %317 = arith.addf %316, %9 : vector<8x512xf32>
    %318 = vector.extract_strided_slice %317 {offsets = [0, 0], sizes = [8, 384], strides = [1, 1]} : vector<8x512xf32> to vector<8x384xf32>
    %cst_102 = arith.constant 5.000000e-01 : f32
    %319 = vector.broadcast %cst_102 : f32 to vector<8x384xf32>
    %320 = arith.mulf %319, %318 : vector<8x384xf32>
    %321 = math.tanh %320 : vector<8x384xf32>
    %cst_103 = arith.constant 5.000000e-01 : f32
    %322 = vector.broadcast %cst_103 : f32 to vector<8x384xf32>
    %323 = arith.mulf %322, %321 : vector<8x384xf32>
    %cst_104 = arith.constant 5.000000e-01 : f32
    %324 = vector.broadcast %cst_104 : f32 to vector<8x384xf32>
    %325 = arith.addf %323, %324 : vector<8x384xf32>
    %326 = vector.extract_strided_slice %325 {offsets = [0, 0], sizes = [8, 128], strides = [1, 1]} : vector<8x384xf32> to vector<8x128xf32>
    %327 = vector.extract_strided_slice %325 {offsets = [0, 128], sizes = [8, 128], strides = [1, 1]} : vector<8x384xf32> to vector<8x128xf32>
    %328 = vector.extract_strided_slice %325 {offsets = [0, 256], sizes = [8, 128], strides = [1, 1]} : vector<8x384xf32> to vector<8x128xf32>
    %329 = vector.extract_strided_slice %317 {offsets = [0, 384], sizes = [8, 128], strides = [1, 1]} : vector<8x512xf32> to vector<8x128xf32>
    %330 = math.tanh %329 : vector<8x128xf32>
    %331 = arith.mulf %327, %287 : vector<8x128xf32>
    %332 = arith.mulf %326, %330 : vector<8x128xf32>
    %333 = arith.addf %331, %332 : vector<8x128xf32>
    %334 = math.tanh %333 : vector<8x128xf32>
    %335 = arith.mulf %328, %334 : vector<8x128xf32>
    %c56 = arith.constant 56 : index
    %c0_105 = arith.constant 0 : index
    %336 = vector.load %arg9[%c56, %c0_105] : memref<64x512xf32, #tpu.memory_space<vmem>>, vector<8x512xf32>
    %337 = arith.truncf %312 : vector<8x128xf32> to vector<8x128xbf16>
    %c0_106 = arith.constant 0 : index
    %c0_107 = arith.constant 0 : index
    %338 = vector.load %arg2[%c0_106, %c0_107] : memref<128x512xbf16, #tpu.memory_space<vmem>>, vector<128x512xbf16>
    %cst_108 = arith.constant dense<0.000000e+00> : vector<8x512xf32>
    %339 = tpu.matmul %337, %338, %cst_108 {dimension_numbers = #tpu.dot_dimension_numbers<[1], [0], [0], [1], [0, 0, 1, 1], [], []>} : vector<8x128xbf16>, vector<128x512xbf16>, vector<8x512xf32> -> vector<8x512xf32>
    %340 = arith.addf %336, %339 : vector<8x512xf32>
    %341 = vector.extract_strided_slice %340 {offsets = [0, 0], sizes = [8, 384], strides = [1, 1]} : vector<8x512xf32> to vector<8x384xf32>
    %cst_109 = arith.constant 5.000000e-01 : f32
    %342 = vector.broadcast %cst_109 : f32 to vector<8x384xf32>
    %343 = arith.mulf %342, %341 : vector<8x384xf32>
    %344 = math.tanh %343 : vector<8x384xf32>
    %cst_110 = arith.constant 5.000000e-01 : f32
    %345 = vector.broadcast %cst_110 : f32 to vector<8x384xf32>
    %346 = arith.mulf %345, %344 : vector<8x384xf32>
    %cst_111 = arith.constant 5.000000e-01 : f32
    %347 = vector.broadcast %cst_111 : f32 to vector<8x384xf32>
    %348 = arith.addf %346, %347 : vector<8x384xf32>
    %349 = vector.extract_strided_slice %348 {offsets = [0, 0], sizes = [8, 128], strides = [1, 1]} : vector<8x384xf32> to vector<8x128xf32>
    %350 = vector.extract_strided_slice %348 {offsets = [0, 128], sizes = [8, 128], strides = [1, 1]} : vector<8x384xf32> to vector<8x128xf32>
    %351 = vector.extract_strided_slice %348 {offsets = [0, 256], sizes = [8, 128], strides = [1, 1]} : vector<8x384xf32> to vector<8x128xf32>
    %352 = vector.extract_strided_slice %340 {offsets = [0, 384], sizes = [8, 128], strides = [1, 1]} : vector<8x512xf32> to vector<8x128xf32>
    %353 = math.tanh %352 : vector<8x128xf32>
    %354 = arith.mulf %350, %310 : vector<8x128xf32>
    %355 = arith.mulf %349, %353 : vector<8x128xf32>
    %356 = arith.addf %354, %355 : vector<8x128xf32>
    %357 = math.tanh %356 : vector<8x128xf32>
    %358 = arith.mulf %351, %357 : vector<8x128xf32>
    %359 = tpu.concatenate %358, %335 in 1 : vector<8x128xf32>, vector<8x128xf32> -> vector<8x256xf32>
    %360 = arith.truncf %359 : vector<8x256xf32> to vector<8x256xbf16>
    %c0_112 = arith.constant 0 : index
    %c0_113 = arith.constant 0 : index
    %361 = vector.load %arg4[%c0_112, %c0_113] : memref<256x512xbf16, #tpu.memory_space<vmem>>, vector<256x512xbf16>
    %cst_114 = arith.constant dense<0.000000e+00> : vector<8x512xf32>
    %362 = tpu.matmul %360, %361, %cst_114 {dimension_numbers = #tpu.dot_dimension_numbers<[1], [0], [0], [1], [0, 0, 1, 1], [], []>} : vector<8x256xbf16>, vector<256x512xbf16>, vector<8x512xf32> -> vector<8x512xf32>
    %363 = arith.addf %362, %9 : vector<8x512xf32>
    %364 = vector.extract_strided_slice %363 {offsets = [0, 0], sizes = [8, 384], strides = [1, 1]} : vector<8x512xf32> to vector<8x384xf32>
    %cst_115 = arith.constant 5.000000e-01 : f32
    %365 = vector.broadcast %cst_115 : f32 to vector<8x384xf32>
    %366 = arith.mulf %365, %364 : vector<8x384xf32>
    %367 = math.tanh %366 : vector<8x384xf32>
    %cst_116 = arith.constant 5.000000e-01 : f32
    %368 = vector.broadcast %cst_116 : f32 to vector<8x384xf32>
    %369 = arith.mulf %368, %367 : vector<8x384xf32>
    %cst_117 = arith.constant 5.000000e-01 : f32
    %370 = vector.broadcast %cst_117 : f32 to vector<8x384xf32>
    %371 = arith.addf %369, %370 : vector<8x384xf32>
    %372 = vector.extract_strided_slice %371 {offsets = [0, 0], sizes = [8, 128], strides = [1, 1]} : vector<8x384xf32> to vector<8x128xf32>
    %373 = vector.extract_strided_slice %371 {offsets = [0, 128], sizes = [8, 128], strides = [1, 1]} : vector<8x384xf32> to vector<8x128xf32>
    %374 = vector.extract_strided_slice %371 {offsets = [0, 256], sizes = [8, 128], strides = [1, 1]} : vector<8x384xf32> to vector<8x128xf32>
    %375 = vector.extract_strided_slice %363 {offsets = [0, 384], sizes = [8, 128], strides = [1, 1]} : vector<8x512xf32> to vector<8x128xf32>
    %376 = math.tanh %375 : vector<8x128xf32>
    %377 = arith.mulf %373, %333 : vector<8x128xf32>
    %378 = arith.mulf %372, %376 : vector<8x128xf32>
    %379 = arith.addf %377, %378 : vector<8x128xf32>
    %380 = math.tanh %379 : vector<8x128xf32>
    %381 = arith.mulf %374, %380 : vector<8x128xf32>
    %382 = arith.truncf %381 : vector<8x128xf32> to vector<8x128xbf16>
    %c0_118 = arith.constant 0 : index
    %c0_119 = arith.constant 0 : index
    %383 = vector.load %arg6[%c0_118, %c0_119] : memref<128x128xbf16, #tpu.memory_space<vmem>>, vector<128x128xbf16>
    %cst_120 = arith.constant dense<0.000000e+00> : vector<8x128xf32>
    %384 = tpu.matmul %382, %383, %cst_120 {dimension_numbers = #tpu.dot_dimension_numbers<[1], [0], [0], [1], [0, 0, 1, 1], [], []>} : vector<8x128xbf16>, vector<128x128xbf16>, vector<8x128xf32> -> vector<8x128xf32>
    %c0_121 = arith.constant 0 : index
    %c0_122 = arith.constant 0 : index
    %385 = vector.load %arg7[%c0_121, %c0_122] : memref<1x128xf32, #tpu.memory_space<vmem>>, vector<1x128xf32>
    %386 = vector.broadcast %385 : vector<1x128xf32> to vector<8x128xf32>
    %387 = arith.addf %384, %386 : vector<8x128xf32>
    %c0_123 = arith.constant 0 : index
    %c0_124 = arith.constant 0 : index
    %388 = vector.load %arg8[%c0_123, %c0_124] : memref<8x128xf32, #tpu.memory_space<vmem>>, vector<8x128xf32>
    tpu.vector_store %arg8[%c0_123, %c0_124], %387 {strides = array<i32>} : memref<8x128xf32, #tpu.memory_space<vmem>>, vector<8x128xf32>,
    return
  }
}

</mosaic_0001>

<llo_original>
// kernel: hand_gesture_lstm_forward.1
$region0: #{hand_gesture_lstm_forward.1}
  #allocation0 [shape = 'u32[]', space=smem, size = 0x4, offset = 0x4, fixed_abs, tag = 'smem constant byte address 0x4 - core index']
  #allocation1 [shape = 'u32[72,128]{1,0:T(1,128)}', space=vmem, size = 0x9000, scoped, tag = 'internal scratch']
  #allocation2 [shape = 'f32[64,512]{1,0:T(8,128)}', space=vmem, size = 0x20000, scoped, tag = 'scratch operand']
  %s0 = inlined_call_operand.vmem [shape: bf16[64,128], index: 0, kind: input, shape index: {}]
  %s1 = inlined_call_operand.hbm [shape: bf16[128,512], index: 1, kind: input, shape index: {}]
  %s2 = inlined_call_operand.hbm [shape: bf16[128,512], index: 2, kind: input, shape index: {}]
  %s3 = inlined_call_operand.vmem [shape: f32[1,512], index: 3, kind: input, shape index: {}]
  %s4 = inlined_call_operand.hbm [shape: bf16[256,512], index: 4, kind: input, shape index: {}]
  %s5 = inlined_call_operand.vmem [shape: f32[1,512], index: 5, kind: input, shape index: {}]
  %s6 = inlined_call_operand.vmem [shape: bf16[128,128], index: 6, kind: input, shape index: {}]
  %s7 = inlined_call_operand.vmem [shape: f32[1,128], index: 7, kind: input, shape index: {}]
  %s8 = inlined_call_operand.vmem [shape: f32[8,128], index: 8, kind: output, shape index: {}]
  %s9 = sld [smem:[#allocation0]]
  $region54: #{hand_gesture_lstm_forward.1} parent=0
    _
  %s11 = ssub.s32 1, %s9
  %s12 = scalar_select 0, %s11, %s9
  $region1: #{hand_gesture_lstm_forward.1} parent=0
    #allocation3 [shape = 'u8[131072]{0}', space=vmem, size = 0x20000, scoped, tag = 'input window, operand 1, single buffered']
    #allocation4 [shape = 's32[1]{0}', space=sflag, size = 0x4, scoped, tag = 'scoped memory for hand_gesture_lstm_forward.1']
    #allocation5 [shape = 'u8[131072]{0}', space=vmem, size = 0x20000, scoped, tag = 'input window, operand 2, single buffered']
    #allocation6 [shape = 's32[1]{0}', space=sflag, size = 0x4, scoped, tag = 'scoped memory for hand_gesture_lstm_forward.1']
    #allocation7 [shape = 'u8[262144]{0}', space=vmem, size = 0x40000, scoped, tag = 'input window, operand 4, single buffered']
    %13 = vsyncpa [#allocation4], 0
    %14 = vsyncpa [#allocation6], 0
    // Predicated region
    $region2: #{hand_gesture_lstm_forward.1} parent=1 // pred_check
      _
    $region3: #{hand_gesture_lstm_forward.1} parent=1 // pred_check_branch
      %16 = sbr.rel (0) target = $region5
    $region4: #{hand_gesture_lstm_forward.1} parent=1 // pred_region
      _
    $region5: #{hand_gesture_lstm_forward.1} parent=1 // pred_fallthru
      _
    // Predicated region
    $region6: #{hand_gesture_lstm_forward.1} parent=1 // pred_check
      _
    $region7: #{hand_gesture_lstm_forward.1} parent=1 // pred_check_branch
      %18 = sbr.rel (0) target = $region9
    $region8: #{hand_gesture_lstm_forward.1} parent=1 // pred_region
      %20 = vsyncadd [#allocation4], 0
      %s21 = sshll.u32 %s1, 4
      %s22 = int_to_ptr.hbm [resolvable:$true] %s21
      %s23 = sshll.u32 [#allocation3], 4
      %s24 = int_to_ptr.vmem [resolvable:$true] %s23
      %29 = dma.hbm_to_vmem [thread:$0]  %s22, 4096, %s24, [#allocation4], 256, 256, 16
    $region9: #{hand_gesture_lstm_forward.1} parent=1 // pred_fallthru
      _
    // Predicated region
    $region10: #{hand_gesture_lstm_forward.1} parent=1 // pred_check
      _
    $region11: #{hand_gesture_lstm_forward.1} parent=1 // pred_check_branch
      %31 = sbr.rel (0) target = $region13
    $region12: #{hand_gesture_lstm_forward.1} parent=1 // pred_region
      %33 = vsyncadd [#allocation6], 0
      %s34 = sshll.u32 %s2, 4
      %s35 = int_to_ptr.hbm [resolvable:$true] %s34
      %s36 = sshll.u32 [#allocation5], 4
      %s37 = int_to_ptr.vmem [resolvable:$true] %s36
      %42 = dma.hbm_to_vmem [thread:$0]  %s35, 4096, %s37, [#allocation6], 256, 256, 16
    $region13: #{hand_gesture_lstm_forward.1} parent=1 // pred_fallthru
      _
    // Predicated region
    $region14: #{hand_gesture_lstm_forward.1} parent=1 // pred_check
      _
    $region15: #{hand_gesture_lstm_forward.1} parent=1 // pred_check_branch
      %44 = sbr.rel (0) target = $region17
    $region16: #{hand_gesture_lstm_forward.1} parent=1 // pred_region
      _
    $region17: #{hand_gesture_lstm_forward.1} parent=1 // pred_fallthru
      _
    // Predicated region
    $region18: #{hand_gesture_lstm_forward.1} parent=1 // pred_check
      _
    $region19: #{hand_gesture_lstm_forward.1} parent=1 // pred_check_branch
      %46 = sbr.rel (0) target = $region21
    $region20: #{hand_gesture_lstm_forward.1} parent=1 // pred_region
      %48 = vsyncadd [#allocation6], 0
      %s49 = sshll.u32 %s4, 4
      %s50 = int_to_ptr.hbm [resolvable:$true] %s49
      %s51 = sshll.u32 [#allocation7], 4
      %s52 = int_to_ptr.vmem [resolvable:$true] %s51
      %57 = dma.hbm_to_vmem [thread:$0]  %s50, 8192, %s52, [#allocation6], 256, 256, 16
    $region21: #{hand_gesture_lstm_forward.1} parent=1 // pred_fallthru
      _
    // Predicated region
    $region22: #{hand_gesture_lstm_forward.1} parent=1 // pred_check
      _
    $region23: #{hand_gesture_lstm_forward.1} parent=1 // pred_check_branch
      %59 = sbr.rel (0) target = $region25
    $region24: #{hand_gesture_lstm_forward.1} parent=1 // pred_region
      _
    $region25: #{hand_gesture_lstm_forward.1} parent=1 // pred_fallthru
      _
    // Predicated region
    $region26: #{hand_gesture_lstm_forward.1} parent=1 // pred_check
      _
    $region27: #{hand_gesture_lstm_forward.1} parent=1 // pred_check_branch
      %61 = sbr.rel (0) target = $region29
    $region28: #{hand_gesture_lstm_forward.1} parent=1 // pred_region
      _
    $region29: #{hand_gesture_lstm_forward.1} parent=1 // pred_fallthru
      _
    // Predicated region
    $region30: #{hand_gesture_lstm_forward.1} parent=1 // pred_check
      _
    $region31: #{hand_gesture_lstm_forward.1} parent=1 // pred_check_branch
      %63 = sbr.rel (0) target = $region33
    $region32: #{hand_gesture_lstm_forward.1} parent=1 // pred_region
      _
    $region33: #{hand_gesture_lstm_forward.1} parent=1 // pred_fallthru
      _
    // Predicated region
    $region34: #{hand_gesture_lstm_forward.1} parent=1 // pred_check
      _
    $region35: #{hand_gesture_lstm_forward.1} parent=1 // pred_check_branch
      %65 = sbr.rel (0) target = $region37
    $region36: #{hand_gesture_lstm_forward.1} parent=1 // pred_region
      %67 = dma.done [#allocation4], 4096
    $region37: #{hand_gesture_lstm_forward.1} parent=1 // pred_fallthru
      _
    // Predicated region
    $region38: #{hand_gesture_lstm_forward.1} parent=1 // pred_check
      _
    $region39: #{hand_gesture_lstm_forward.1} parent=1 // pred_check_branch
      %69 = sbr.rel (0) target = $region41
    $region40: #{hand_gesture_lstm_forward.1} parent=1 // pred_region
      %71 = dma.done [#allocation6], 4096
    $region41: #{hand_gesture_lstm_forward.1} parent=1 // pred_fallthru
      _
    // Predicated region
    $region42: #{hand_gesture_lstm_forward.1} parent=1 // pred_check
      _
    $region43: #{hand_gesture_lstm_forward.1} parent=1 // pred_check_branch
      %73 = sbr.rel (0) target = $region45
    $region44: #{hand_gesture_lstm_forward.1} parent=1 // pred_region
      %75 = dma.done [#allocation6], 8192
    $region45: #{hand_gesture_lstm_forward.1} parent=1 // pred_fallthru
      _
    %v77 = vld [vmem:[%s0] sm:$0xf]
    %v78 = vld [vmem:[%s0 + $0x4] sm:$0xf]
    %v79 = vld [vmem:[%s0 + $0x8] sm:$0xf]
    %v80 = vld [vmem:[%s0 + $0xc] sm:$0xf]
    %v81 = vld [vmem:[%s0 + $0x10] sm:$0xf]
    %v82 = vld [vmem:[%s0 + $0x14] sm:$0xf]
    %v83 = vld [vmem:[%s0 + $0x18] sm:$0xf]
    %v84 = vld [vmem:[%s0 + $0x1c] sm:$0xf]
    %v85 = vld [vmem:[#allocation3] sm:$0xff]
    %v86 = vld [vmem:[#allocation3 + $0x8] sm:$0xff]
    %v87 = vld [vmem:[#allocation3 + $0x10] sm:$0xff]
    %v88 = vld [vmem:[#allocation3 + $0x18] sm:$0xff]
    %v89 = vld [vmem:[#allocation3 + $0x20] sm:$0xff]
    %v90 = vld [vmem:[#allocation3 + $0x28] sm:$0xff]
    %v91 = vld [vmem:[#allocation3 + $0x30] sm:$0xff]
    %v92 = vld [vmem:[#allocation3 + $0x38] sm:$0xff]
    %v93 = vld [vmem:[#allocation3 + $0x40] sm:$0xff]
    %v94 = vld [vmem:[#allocation3 + $0x48] sm:$0xff]
    %v95 = vld [vmem:[#allocation3 + $0x50] sm:$0xff]
    %v96 = vld [vmem:[#allocation3 + $0x58] sm:$0xff]
    %v97 = vld [vmem:[#allocation3 + $0x60] sm:$0xff]
    %v98 = vld [vmem:[#allocation3 + $0x68] sm:$0xff]
    %v99 = vld [vmem:[#allocation3 + $0x70] sm:$0xff]
    %v100 = vld [vmem:[#allocation3 + $0x78] sm:$0xff]
    %v101 = vld [vmem:[#allocation3 + $0x80] sm:$0xff]
    %v102 = vld [vmem:[#allocation3 + $0x88] sm:$0xff]
    %v103 = vld [vmem:[#allocation3 + $0x90] sm:$0xff]
    %v104 = vld [vmem:[#allocation3 + $0x98] sm:$0xff]
    %v105 = vld [vmem:[#allocation3 + $0xa0] sm:$0xff]
    %v106 = vld [vmem:[#allocation3 + $0xa8] sm:$0xff]
    %v107 = vld [vmem:[#allocation3 + $0xb0] sm:$0xff]
    %v108 = vld [vmem:[#allocation3 + $0xb8] sm:$0xff]
    %v109 = vld [vmem:[#allocation3 + $0xc0] sm:$0xff]
    %v110 = vld [vmem:[#allocation3 + $0xc8] sm:$0xff]
    %v111 = vld [vmem:[#allocation3 + $0xd0] sm:$0xff]
    %v112 = vld [vmem:[#allocation3 + $0xd8] sm:$0xff]
    %v113 = vld [vmem:[#allocation3 + $0xe0] sm:$0xff]
    %v114 = vld [vmem:[#allocation3 + $0xe8] sm:$0xff]
    %v115 = vld [vmem:[#allocation3 + $0xf0] sm:$0xff]
    %v116 = vld [vmem:[#allocation3 + $0xf8] sm:$0xff]
    %v117 = vld [vmem:[%s3] sm:$0xf]
    %v119 = vperm.slane %v117, 0
    %v120 = vperm.slane %v117, 1
    %v121 = vperm.slane %v117, 2
    %v122 = vperm.slane %v117, 3
    %v135 = vunpack.c.l.b16 %v77
    %v136 = vunpack.c.l.b16 %v78
    %v137 = vunpack.c.l.b16 %v79
    %v138 = vunpack.c.l.b16 %v80
    %v139 = vunpack.c.l.b16 %v81
    %v140 = vunpack.c.l.b16 %v82
    %v141 = vunpack.c.l.b16 %v83
    %v142 = vunpack.c.l.b16 %v84
    %v143 = vpack.c.b16 %v136, %v135
    %v144 = vpack.c.b16 %v138, %v137
    %v145 = vpack.c.b16 %v140, %v139
    %v146 = vpack.c.b16 %v142, %v141
    %v183 = vunpack.c.l.b16 %v85
    %v184 = vunpack.c.h.b16 %v85
    %v185 = vunpack.c.l.b16 %v86
    %v186 = vunpack.c.h.b16 %v86
    %v187 = vunpack.c.l.b16 %v87
    %v188 = vunpack.c.h.b16 %v87
    %v189 = vunpack.c.l.b16 %v88
    %v190 = vunpack.c.h.b16 %v88
    %v191 = vunpack.c.l.b16 %v89
    %v192 = vunpack.c.h.b16 %v89
    %v193 = vunpack.c.l.b16 %v90
    %v194 = vunpack.c.h.b16 %v90
    %v195 = vunpack.c.l.b16 %v91
    %v196 = vunpack.c.h.b16 %v91
    %v197 = vunpack.c.l.b16 %v92
    %v198 = vunpack.c.h.b16 %v92
    %v199 = vunpack.c.l.b16 %v93
    %v200 = vunpack.c.h.b16 %v93
    %v201 = vunpack.c.l.b16 %v94
    %v202 = vunpack.c.h.b16 %v94
    %v203 = vunpack.c.l.b16 %v95
    %v204 = vunpack.c.h.b16 %v95
    %v205 = vunpack.c.l.b16 %v96
    %v206 = vunpack.c.h.b16 %v96
    %v207 = vunpack.c.l.b16 %v97
    %v208 = vunpack.c.h.b16 %v97
    %v209 = vunpack.c.l.b16 %v98
    %v210 = vunpack.c.h.b16 %v98
    %v211 = vunpack.c.l.b16 %v99
    %v212 = vunpack.c.h.b16 %v99
    %v213 = vunpack.c.l.b16 %v100
    %v214 = vunpack.c.h.b16 %v100
    %v215 = vunpack.c.l.b16 %v101
    %v216 = vunpack.c.h.b16 %v101
    %v217 = vunpack.c.l.b16 %v102
    %v218 = vunpack.c.h.b16 %v102
    %v219 = vunpack.c.l.b16 %v103
    %v220 = vunpack.c.h.b16 %v103
    %v221 = vunpack.c.l.b16 %v104
    %v222 = vunpack.c.h.b16 %v104
    %v223 = vunpack.c.l.b16 %v105
    %v224 = vunpack.c.h.b16 %v105
    %v225 = vunpack.c.l.b16 %v106
    %v226 = vunpack.c.h.b16 %v106
    %v227 = vunpack.c.l.b16 %v107
    %v228 = vunpack.c.h.b16 %v107
    %v229 = vunpack.c.l.b16 %v108
    %v230 = vunpack.c.h.b16 %v108
    %v231 = vunpack.c.l.b16 %v109
    %v232 = vunpack.c.h.b16 %v109
    %v233 = vunpack.c.l.b16 %v110
    %v234 = vunpack.c.h.b16 %v110
    %v235 = vunpack.c.l.b16 %v111
    %v236 = vunpack.c.h.b16 %v111
    %v237 = vunpack.c.l.b16 %v112
    %v238 = vunpack.c.h.b16 %v112
    %v239 = vunpack.c.l.b16 %v113
    %v240 = vunpack.c.h.b16 %v113
    %v241 = vunpack.c.l.b16 %v114
    %v242 = vunpack.c.h.b16 %v114
    %v243 = vunpack.c.l.b16 %v115
    %v244 = vunpack.c.h.b16 %v115
    %v245 = vunpack.c.l.b16 %v116
    %v246 = vunpack.c.h.b16 %v116
    %v247 = vpack.c.b16 %v187, %v183
    %v248 = vpack.c.b16 %v188, %v184
    %v249 = vpack.c.b16 %v189, %v185
    %v250 = vpack.c.b16 %v190, %v186
    %v251 = vpack.c.b16 %v195, %v191
    %v252 = vpack.c.b16 %v196, %v192
    %v253 = vpack.c.b16 %v197, %v193
    %v254 = vpack.c.b16 %v198, %v194
    %v255 = vpack.c.b16 %v203, %v199
    %v256 = vpack.c.b16 %v204, %v200
    %v257 = vpack.c.b16 %v205, %v201
    %v258 = vpack.c.b16 %v206, %v202
    %v259 = vpack.c.b16 %v211, %v207
    %v260 = vpack.c.b16 %v212, %v208
    %v261 = vpack.c.b16 %v213, %v209
    %v262 = vpack.c.b16 %v214, %v210
    %v263 = vpack.c.b16 %v219, %v215
    %v264 = vpack.c.b16 %v220, %v216
    %v265 = vpack.c.b16 %v221, %v217
    %v266 = vpack.c.b16 %v222, %v218
    %v267 = vpack.c.b16 %v227, %v223
    %v268 = vpack.c.b16 %v228, %v224
    %v269 = vpack.c.b16 %v229, %v225
    %v270 = vpack.c.b16 %v230, %v226
    %v271 = vpack.c.b16 %v235, %v231
    %v272 = vpack.c.b16 %v236, %v232
    %v273 = vpack.c.b16 %v237, %v233
    %v274 = vpack.c.b16 %v238, %v234
    %v275 = vpack.c.b16 %v243, %v239
    %v276 = vpack.c.b16 %v244, %v240
    %v277 = vpack.c.b16 %v245, %v241
    %v278 = vpack.c.b16 %v246, %v242
    %311 = vmatpush.bf16.msra.mxu0 %v275
    %312 = vmatpush.bf16.msra.mxu0 %v271
    %313 = vmatpush.bf16.msra.mxu0 %v267
    %314 = vmatpush.bf16.msra.mxu0 %v263
    %315 = vmatpush.bf16.msra.mxu0 %v259
    %316 = vmatpush.bf16.msra.mxu0 %v255
    %317 = vmatpush.bf16.msra.mxu0 %v251
    %318 = vmatpush.bf16.msra.mxu0 %v247
    %319 = vmatmul.bf16.gmra.mxu0 %v143
    %v320 = vpop.f32.mrf.mxu0
    %v321 = vadd.f32 %v119, %v320
    %v322 = vpop.f32.mrf.mxu0
    %v323 = vadd.f32 %v119, %v322
    %324 = vmatmul.bf16.gmra.mxu0 %v144
    %v325 = vpop.f32.mrf.mxu0
    %v326 = vadd.f32 %v119, %v325
    %v327 = vpop.f32.mrf.mxu0
    %v328 = vadd.f32 %v119, %v327
    %329 = vmatmul.bf16.gmra.mxu0 %v145
    %v330 = vpop.f32.mrf.mxu0
    %v331 = vadd.f32 %v119, %v330
    %v332 = vpop.f32.mrf.mxu0
    %v333 = vadd.f32 %v119, %v332
    %334 = vmatmul.bf16.gmra.mxu0 %v146
    %v335 = vpop.f32.mrf.mxu0
    %v336 = vadd.f32 %v119, %v335
    %v337 = vpop.f32.mrf.mxu0
    %v338 = vadd.f32 %v119, %v337
    %339 = vdwg.mxu0
    %340 = vmatpush.bf16.msra.mxu0 %v276
    %341 = vmatpush.bf16.msra.mxu0 %v272
    %342 = vmatpush.bf16.msra.mxu0 %v268
    %343 = vmatpush.bf16.msra.mxu0 %v264
    %344 = vmatpush.bf16.msra.mxu0 %v260
    %345 = vmatpush.bf16.msra.mxu0 %v256
    %346 = vmatpush.bf16.msra.mxu0 %v252
    %347 = vmatpush.bf16.msra.mxu0 %v248
    %348 = vmatmul.bf16.gmra.mxu0 %v143
    %v349 = vpop.f32.mrf.mxu0
    %v350 = vadd.f32 %v120, %v349
    %v351 = vpop.f32.mrf.mxu0
    %v352 = vadd.f32 %v120, %v351
    %353 = vmatmul.bf16.gmra.mxu0 %v144
    %v354 = vpop.f32.mrf.mxu0
    %v355 = vadd.f32 %v120, %v354
    %v356 = vpop.f32.mrf.mxu0
    %v357 = vadd.f32 %v120, %v356
    %358 = vmatmul.bf16.gmra.mxu0 %v145
    %v359 = vpop.f32.mrf.mxu0
    %v360 = vadd.f32 %v120, %v359
    %v361 = vpop.f32.mrf.mxu0
    %v362 = vadd.f32 %v120, %v361
    %363 = vmatmul.bf16.gmra.mxu0 %v146
    %v364 = vpop.f32.mrf.mxu0
    %v365 = vadd.f32 %v120, %v364
    %v366 = vpop.f32.mrf.mxu0
    %v367 = vadd.f32 %v120, %v366
    %368 = vdwg.mxu0
    %369 = vmatpush.bf16.msra.mxu0 %v277
    %370 = vmatpush.bf16.msra.mxu0 %v273
    %371 = vmatpush.bf16.msra.mxu0 %v269
    %372 = vmatpush.bf16.msra.mxu0 %v265
    %373 = vmatpush.bf16.msra.mxu0 %v261
    %374 = vmatpush.bf16.msra.mxu0 %v257
    %375 = vmatpush.bf16.msra.mxu0 %v253
    %376 = vmatpush.bf16.msra.mxu0 %v249
    %377 = vmatmul.bf16.gmra.mxu0 %v143
    %v378 = vpop.f32.mrf.mxu0
    %v379 = vadd.f32 %v121, %v378
    %v380 = vpop.f32.mrf.mxu0
    %v381 = vadd.f32 %v121, %v380
    %382 = vmatmul.bf16.gmra.mxu0 %v144
    %v383 = vpop.f32.mrf.mxu0
    %v384 = vadd.f32 %v121, %v383
    %v385 = vpop.f32.mrf.mxu0
    %v386 = vadd.f32 %v121, %v385
    %387 = vmatmul.bf16.gmra.mxu0 %v145
    %v388 = vpop.f32.mrf.mxu0
    %v389 = vadd.f32 %v121, %v388
    %v390 = vpop.f32.mrf.mxu0
    %v391 = vadd.f32 %v121, %v390
    %392 = vmatmul.bf16.gmra.mxu0 %v146
    %v393 = vpop.f32.mrf.mxu0
    %v394 = vadd.f32 %v121, %v393
    %v395 = vpop.f32.mrf.mxu0
    %v396 = vadd.f32 %v121, %v395
    %397 = vdwg.mxu0
    %398 = vmatpush.bf16.msra.mxu0 %v278
    %399 = vmatpush.bf16.msra.mxu0 %v274
    %400 = vmatpush.bf16.msra.mxu0 %v270
    %401 = vmatpush.bf16.msra.mxu0 %v266
    %402 = vmatpush.bf16.msra.mxu0 %v262
    %403 = vmatpush.bf16.msra.mxu0 %v258
    %404 = vmatpush.bf16.msra.mxu0 %v254
    %405 = vmatpush.bf16.msra.mxu0 %v250
    %406 = vmatmul.bf16.gmra.mxu0 %v143
    %v407 = vpop.f32.mrf.mxu0
    %v408 = vadd.f32 %v122, %v407
    %v409 = vpop.f32.mrf.mxu0
    %v410 = vadd.f32 %v122, %v409
    %411 = vmatmul.bf16.gmra.mxu0 %v144
    %v412 = vpop.f32.mrf.mxu0
    %v413 = vadd.f32 %v122, %v412
    %v414 = vpop.f32.mrf.mxu0
    %v415 = vadd.f32 %v122, %v414
    %416 = vmatmul.bf16.gmra.mxu0 %v145
    %v417 = vpop.f32.mrf.mxu0
    %v418 = vadd.f32 %v122, %v417
    %v419 = vpop.f32.mrf.mxu0
    %v420 = vadd.f32 %v122, %v419
    %421 = vmatmul.bf16.gmra.mxu0 %v146
    %v422 = vpop.f32.mrf.mxu0
    %v423 = vadd.f32 %v122, %v422
    %v424 = vpop.f32.mrf.mxu0
    %v425 = vadd.f32 %v122, %v424
    %426 = vdwg.mxu0
    %427 = vst [vmem:[#allocation2] sm:$0xff] %v321
    %428 = vst [vmem:[#allocation2 + $0x8] sm:$0xff] %v350
    %429 = vst [vmem:[#allocation2 + $0x10] sm:$0xff] %v379
    %430 = vst [vmem:[#allocation2 + $0x18] sm:$0xff] %v408
    %431 = vst [vmem:[#allocation2 + $0x20] sm:$0xff] %v323
    %432 = vst [vmem:[#allocation2 + $0x28] sm:$0xff] %v352
    %433 = vst [vmem:[#allocation2 + $0x30] sm:$0xff] %v381
    %434 = vst [vmem:[#allocation2 + $0x38] sm:$0xff] %v410
    %435 = vst [vmem:[#allocation2 + $0x40] sm:$0xff] %v326
    %436 = vst [vmem:[#allocation2 + $0x48] sm:$0xff] %v355
    %437 = vst [vmem:[#allocation2 + $0x50] sm:$0xff] %v384
    %438 = vst [vmem:[#allocation2 + $0x58] sm:$0xff] %v413
    %439 = vst [vmem:[#allocation2 + $0x60] sm:$0xff] %v328
    %440 = vst [vmem:[#allocation2 + $0x68] sm:$0xff] %v357
    %441 = vst [vmem:[#allocation2 + $0x70] sm:$0xff] %v386
    %442 = vst [vmem:[#allocation2 + $0x78] sm:$0xff] %v415
    %443 = vst [vmem:[#allocation2 + $0x80] sm:$0xff] %v331
    %444 = vst [vmem:[#allocation2 + $0x88] sm:$0xff] %v360
    %445 = vst [vmem:[#allocation2 + $0x90] sm:$0xff] %v389
    %446 = vst [vmem:[#allocation2 + $0x98] sm:$0xff] %v418
    %447 = vst [vmem:[#allocation2 + $0xa0] sm:$0xff] %v333
    %448 = vst [vmem:[#allocation2 + $0xa8] sm:$0xff] %v362
    %449 = vst [vmem:[#allocation2 + $0xb0] sm:$0xff] %v391
    %450 = vst [vmem:[#allocation2 + $0xb8] sm:$0xff] %v420
    %451 = vst [vmem:[#allocation2 + $0xc0] sm:$0xff] %v336
    %452 = vst [vmem:[#allocation2 + $0xc8] sm:$0xff] %v365
    %453 = vst [vmem:[#allocation2 + $0xd0] sm:$0xff] %v394
    %454 = vst [vmem:[#allocation2 + $0xd8] sm:$0xff] %v423
    %455 = vst [vmem:[#allocation2 + $0xe0] sm:$0xff] %v338
    %456 = vst [vmem:[#allocation2 + $0xe8] sm:$0xff] %v367
    %457 = vst [vmem:[#allocation2 + $0xf0] sm:$0xff] %v396
    %458 = vst [vmem:[#allocation2 + $0xf8] sm:$0xff] %v425
    %v459 = vld [vmem:[%s5] sm:$0xf]
    %v461 = vperm.slane %v459, 0
    %v462 = vperm.slane %v459, 1
    %v463 = vperm.slane %v459, 2
    %v464 = vperm.slane %v459, 3
    %v469 = vld [vmem:[#allocation2] sm:$0xff]
    %v470 = vld [vmem:[#allocation2 + $0x8] sm:$0xff]
    %v471 = vld [vmem:[#allocation2 + $0x10] sm:$0xff]
    %v472 = vld [vmem:[#allocation2 + $0x18] sm:$0xff]
    %v473 = vld [vmem:[#allocation5] sm:$0xff]
    %v474 = vld [vmem:[#allocation5 + $0x8] sm:$0xff]
    %v475 = vld [vmem:[#allocation5 + $0x10] sm:$0xff]
    %v476 = vld [vmem:[#allocation5 + $0x18] sm:$0xff]
    %v477 = vld [vmem:[#allocation5 + $0x20] sm:$0xff]
    %v478 = vld [vmem:[#allocation5 + $0x28] sm:$0xff]
    %v479 = vld [vmem:[#allocation5 + $0x30] sm:$0xff]
    %v480 = vld [vmem:[#allocation5 + $0x38] sm:$0xff]
    %v481 = vld [vmem:[#allocation5 + $0x40] sm:$0xff]
    %v482 = vld [vmem:[#allocation5 + $0x48] sm:$0xff]
    %v483 = vld [vmem:[#allocation5 + $0x50] sm:$0xff]
    %v484 = vld [vmem:[#allocation5 + $0x58] sm:$0xff]
    %v485 = vld [vmem:[#allocation5 + $0x60] sm:$0xff]
    %v486 = vld [vmem:[#allocation5 + $0x68] sm:$0xff]
    %v487 = vld [vmem:[#allocation5 + $0x70] sm:$0xff]
    %v488 = vld [vmem:[#allocation5 + $0x78] sm:$0xff]
    %v489 = vld [vmem:[#allocation5 + $0x80] sm:$0xff]
    %v490 = vld [vmem:[#allocation5 + $0x88] sm:$0xff]
    %v491 = vld [vmem:[#allocation5 + $0x90] sm:$0xff]
    %v492 = vld [vmem:[#allocation5 + $0x98] sm:$0xff]
    %v493 = vld [vmem:[#allocation5 + $0xa0] sm:$0xff]
    %v494 = vld [vmem:[#allocation5 + $0xa8] sm:$0xff]
    %v495 = vld [vmem:[#allocation5 + $0xb0] sm:$0xff]
    %v496 = vld [vmem:[#allocation5 + $0xb8] sm:$0xff]
    %v497 = vld [vmem:[#allocation5 + $0xc0] sm:$0xff]
    %v498 = vld [vmem:[#allocation5 + $0xc8] sm:$0xff]
    %v499 = vld [vmem:[#allocation5 + $0xd0] sm:$0xff]
    %v500 = vld [vmem:[#allocation5 + $0xd8] sm:$0xff]
    %v501 = vld [vmem:[#allocation5 + $0xe0] sm:$0xff]
    %v502 = vld [vmem:[#allocation5 + $0xe8] sm:$0xff]
    %v503 = vld [vmem:[#allocation5 + $0xf0] sm:$0xff]
    %v504 = vld [vmem:[#allocation5 + $0xf8] sm:$0xff]
    %v537 = vunpack.c.l.b16 %v473
    %v538 = vunpack.c.h.b16 %v473
    %v539 = vunpack.c.l.b16 %v474
    %v540 = vunpack.c.h.b16 %v474
    %v541 = vunpack.c.l.b16 %v475
    %v542 = vunpack.c.h.b16 %v475
    %v543 = vunpack.c.l.b16 %v476
    %v544 = vunpack.c.h.b16 %v476
    %v545 = vunpack.c.l.b16 %v477
    %v546 = vunpack.c.h.b16 %v477
    %v547 = vunpack.c.l.b16 %v478
    %v548 = vunpack.c.h.b16 %v478
    %v549 = vunpack.c.l.b16 %v479
    %v550 = vunpack.c.h.b16 %v479
    %v551 = vunpack.c.l.b16 %v480
    %v552 = vunpack.c.h.b16 %v480
    %v553 = vunpack.c.l.b16 %v481
    %v554 = vunpack.c.h.b16 %v481
    %v555 = vunpack.c.l.b16 %v482
    %v556 = vunpack.c.h.b16 %v482
    %v557 = vunpack.c.l.b16 %v483
    %v558 = vunpack.c.h.b16 %v483
    %v559 = vunpack.c.l.b16 %v484
    %v560 = vunpack.c.h.b16 %v484
    %v561 = vunpack.c.l.b16 %v485
    %v562 = vunpack.c.h.b16 %v485
    %v563 = vunpack.c.l.b16 %v486
    %v564 = vunpack.c.h.b16 %v486
    %v565 = vunpack.c.l.b16 %v487
    %v566 = vunpack.c.h.b16 %v487
    %v567 = vunpack.c.l.b16 %v488
    %v568 = vunpack.c.h.b16 %v488
    %v569 = vunpack.c.l.b16 %v489
    %v570 = vunpack.c.h.b16 %v489
    %v571 = vunpack.c.l.b16 %v490
    %v572 = vunpack.c.h.b16 %v490
    %v573 = vunpack.c.l.b16 %v491
    %v574 = vunpack.c.h.b16 %v491
    %v575 = vunpack.c.l.b16 %v492
    %v576 = vunpack.c.h.b16 %v492
    %v577 = vunpack.c.l.b16 %v493
    %v578 = vunpack.c.h.b16 %v493
    %v579 = vunpack.c.l.b16 %v494
    %v580 = vunpack.c.h.b16 %v494
    %v581 = vunpack.c.l.b16 %v495
    %v582 = vunpack.c.h.b16 %v495
    %v583 = vunpack.c.l.b16 %v496
    %v584 = vunpack.c.h.b16 %v496
    %v585 = vunpack.c.l.b16 %v497
    %v586 = vunpack.c.h.b16 %v497
    %v587 = vunpack.c.l.b16 %v498
    %v588 = vunpack.c.h.b16 %v498
    %v589 = vunpack.c.l.b16 %v499
    %v590 = vunpack.c.h.b16 %v499
    %v591 = vunpack.c.l.b16 %v500
    %v592 = vunpack.c.h.b16 %v500
    %v593 = vunpack.c.l.b16 %v501
    %v594 = vunpack.c.h.b16 %v501
    %v595 = vunpack.c.l.b16 %v502
    %v596 = vunpack.c.h.b16 %v502
    %v597 = vunpack.c.l.b16 %v503
    %v598 = vunpack.c.h.b16 %v503
    %v599 = vunpack.c.l.b16 %v504
    %v600 = vunpack.c.h.b16 %v504
    %v601 = vpack.c.b16 %v541, %v537
    %v602 = vpack.c.b16 %v542, %v538
    %v603 = vpack.c.b16 %v543, %v539
    %v604 = vpack.c.b16 %v544, %v540
    %v605 = vpack.c.b16 %v549, %v545
    %v606 = vpack.c.b16 %v550, %v546
    %v607 = vpack.c.b16 %v551, %v547
    %v608 = vpack.c.b16 %v552, %v548
    %v609 = vpack.c.b16 %v557, %v553
    %v610 = vpack.c.b16 %v558, %v554
    %v611 = vpack.c.b16 %v559, %v555
    %v612 = vpack.c.b16 %v560, %v556
    %v613 = vpack.c.b16 %v565, %v561
    %v614 = vpack.c.b16 %v566, %v562
    %v615 = vpack.c.b16 %v567, %v563
    %v616 = vpack.c.b16 %v568, %v564
    %v617 = vpack.c.b16 %v573, %v569
    %v618 = vpack.c.b16 %v574, %v570
    %v619 = vpack.c.b16 %v575, %v571
    %v620 = vpack.c.b16 %v576, %v572
    %v621 = vpack.c.b16 %v581, %v577
    %v622 = vpack.c.b16 %v582, %v578
    %v623 = vpack.c.b16 %v583, %v579
    %v624 = vpack.c.b16 %v584, %v580
    %v625 = vpack.c.b16 %v589, %v585
    %v626 = vpack.c.b16 %v590, %v586
    %v627 = vpack.c.b16 %v591, %v587
    %v628 = vpack.c.b16 %v592, %v588
    %v629 = vpack.c.b16 %v597, %v593
    %v630 = vpack.c.b16 %v598, %v594
    %v631 = vpack.c.b16 %v599, %v595
    %v632 = vpack.c.b16 %v600, %v596
    %665 = vmatpush.bf16.msra.mxu0 %v629
    %666 = vmatpush.bf16.msra.mxu0 %v625
    %667 = vmatpush.bf16.msra.mxu0 %v621
    %668 = vmatpush.bf16.msra.mxu0 %v617
    %669 = vmatpush.bf16.msra.mxu0 %v613
    %670 = vmatpush.bf16.msra.mxu0 %v609
    %671 = vmatpush.bf16.msra.mxu0 %v605
    %672 = vmatpush.bf16.msra.mxu0 %v601
    %673 = vmatmul.bf16.gmra.mxu0 0
    %v674 = vpop.f32.mrf.mxu0
    %v675 = vadd.f32 0.0, %v674
    %v676 = vpop.f32.mrf.mxu0
    %677 = vdwg.mxu0
    %678 = vmatpush.bf16.msra.mxu0 %v630
    %679 = vmatpush.bf16.msra.mxu0 %v626
    %680 = vmatpush.bf16.msra.mxu0 %v622
    %681 = vmatpush.bf16.msra.mxu0 %v618
    %682 = vmatpush.bf16.msra.mxu0 %v614
    %683 = vmatpush.bf16.msra.mxu0 %v610
    %684 = vmatpush.bf16.msra.mxu0 %v606
    %685 = vmatpush.bf16.msra.mxu0 %v602
    %686 = vmatmul.bf16.gmra.mxu0 0
    %v687 = vpop.f32.mrf.mxu0
    %v688 = vadd.f32 0.0, %v687
    %v689 = vpop.f32.mrf.mxu0
    %690 = vdwg.mxu0
    %691 = vmatpush.bf16.msra.mxu0 %v631
    %692 = vmatpush.bf16.msra.mxu0 %v627
    %693 = vmatpush.bf16.msra.mxu0 %v623
    %694 = vmatpush.bf16.msra.mxu0 %v619
    %695 = vmatpush.bf16.msra.mxu0 %v615
    %696 = vmatpush.bf16.msra.mxu0 %v611
    %697 = vmatpush.bf16.msra.mxu0 %v607
    %698 = vmatpush.bf16.msra.mxu0 %v603
    %699 = vmatmul.bf16.gmra.mxu0 0
    %v700 = vpop.f32.mrf.mxu0
    %v701 = vadd.f32 0.0, %v700
    %v702 = vpop.f32.mrf.mxu0
    %703 = vdwg.mxu0
    %704 = vmatpush.bf16.msra.mxu0 %v632
    %705 = vmatpush.bf16.msra.mxu0 %v628
    %706 = vmatpush.bf16.msra.mxu0 %v624
    %707 = vmatpush.bf16.msra.mxu0 %v620
    %708 = vmatpush.bf16.msra.mxu0 %v616
    %709 = vmatpush.bf16.msra.mxu0 %v612
    %710 = vmatpush.bf16.msra.mxu0 %v608
    %711 = vmatpush.bf16.msra.mxu0 %v604
    %712 = vmatmul.bf16.gmra.mxu0 0
    %v713 = vpop.f32.mrf.mxu0
    %v714 = vadd.f32 0.0, %v713
    %v715 = vpop.f32.mrf.mxu0
    %716 = vdwg.mxu0
    %v717 = vadd.f32 %v469, %v675
    %v718 = vadd.f32 %v470, %v688
    %v719 = vadd.f32 %v471, %v701
    %v720 = vadd.f32 %v472, %v714
    %v721 = vmul.f32 %v717, 0.5
    %v722 = vmul.f32 %v718, 0.5
    %v723 = vmul.f32 %v719, 0.5
    %v724 = vtanh.pop %v721
    %v725 = vtanh.pop %v722
    %v726 = vtanh.pop %v723
    %v727 = vmul.f32 %v724, 0.5
    %v728 = vmul.f32 %v725, 0.5
    %v729 = vmul.f32 %v726, 0.5
    %v730 = vadd.f32 %v727, 0.5
    %v731 = vadd.f32 %v728, 0.5
    %v732 = vadd.f32 %v729, 0.5
    %v733 = vtanh.pop %v720
    %v734 = vmul.f32 %v731, 0.0
    %v735 = vmul.f32 %v730, %v733
    %v736 = vadd.f32 %v734, %v735
    %v737 = vtanh.pop %v736
    %v738 = vmul.f32 %v732, %v737
    %v739 = vpack.c.bf16 %v738, %v738
    %v740 = vpack.c.bf16 0.0, 0.0
    %v741 = vld [vmem:[#allocation7] sm:$0xff]
    %v742 = vld [vmem:[#allocation7 + $0x8] sm:$0xff]
    %v743 = vld [vmem:[#allocation7 + $0x10] sm:$0xff]
    %v744 = vld [vmem:[#allocation7 + $0x18] sm:$0xff]
    %v745 = vld [vmem:[#allocation7 + $0x20] sm:$0xff]
    %v746 = vld [vmem:[#allocation7 + $0x28] sm:$0xff]
    %v747 = vld [vmem:[#allocation7 + $0x30] sm:$0xff]
    %v748 = vld [vmem:[#allocation7 + $0x38] sm:$0xff]
    %v749 = vld [vmem:[#allocation7 + $0x40] sm:$0xff]
    %v750 = vld [vmem:[#allocation7 + $0x48] sm:$0xff]
    %v751 = vld [vmem:[#allocation7 + $0x50] sm:$0xff]
    %v752 = vld [vmem:[#allocation7 + $0x58] sm:$0xff]
    %v753 = vld [vmem:[#allocation7 + $0x60] sm:$0xff]
    %v754 = vld [vmem:[#allocation7 + $0x68] sm:$0xff]
    %v755 = vld [vmem:[#allocation7 + $0x70] sm:$0xff]
    %v756 = vld [vmem:[#allocation7 + $0x78] sm:$0xff]
    %v757 = vld [vmem:[#allocation7 + $0x80] sm:$0xff]
    %v758 = vld [vmem:[#allocation7 + $0x88] sm:$0xff]
    %v759 = vld [vmem:[#allocation7 + $0x90] sm:$0xff]
    %v760 = vld [vmem:[#allocation7 + $0x98] sm:$0xff]
    %v761 = vld [vmem:[#allocation7 + $0xa0] sm:$0xff]
    %v762 = vld [vmem:[#allocation7 + $0xa8] sm:$0xff]
    %v763 = vld [vmem:[#allocation7 + $0xb0] sm:$0xff]
    %v764 = vld [vmem:[#allocation7 + $0xb8] sm:$0xff]
    %v765 = vld [vmem:[#allocation7 + $0xc0] sm:$0xff]
    %v766 = vld [vmem:[#allocation7 + $0xc8] sm:$0xff]
    %v767 = vld [vmem:[#allocation7 + $0xd0] sm:$0xff]
    %v768 = vld [vmem:[#allocation7 + $0xd8] sm:$0xff]
    %v769 = vld [vmem:[#allocation7 + $0xe0] sm:$0xff]
    %v770 = vld [vmem:[#allocation7 + $0xe8] sm:$0xff]
    %v771 = vld [vmem:[#allocation7 + $0xf0] sm:$0xff]
    %v772 = vld [vmem:[#allocation7 + $0xf8] sm:$0xff]
    %v773 = vld [vmem:[#allocation7 + $0x100] sm:$0xff]
    %v774 = vld [vmem:[#allocation7 + $0x108] sm:$0xff]
    %v775 = vld [vmem:[#allocation7 + $0x110] sm:$0xff]
    %v776 = vld [vmem:[#allocation7 + $0x118] sm:$0xff]
    %v777 = vld [vmem:[#allocation7 + $0x120] sm:$0xff]
    %v778 = vld [vmem:[#allocation7 + $0x128] sm:$0xff]
    %v779 = vld [vmem:[#allocation7 + $0x130] sm:$0xff]
    %v780 = vld [vmem:[#allocation7 + $0x138] sm:$0xff]
    %v781 = vld [vmem:[#allocation7 + $0x140] sm:$0xff]
    %v782 = vld [vmem:[#allocation7 + $0x148] sm:$0xff]
    %v783 = vld [vmem:[#allocation7 + $0x150] sm:$0xff]
    %v784 = vld [vmem:[#allocation7 + $0x158] sm:$0xff]
    %v785 = vld [vmem:[#allocation7 + $0x160] sm:$0xff]
    %v786 = vld [vmem:[#allocation7 + $0x168] sm:$0xff]
    %v787 = vld [vmem:[#allocation7 + $0x170] sm:$0xff]
    %v788 = vld [vmem:[#allocation7 + $0x178] sm:$0xff]
    %v789 = vld [vmem:[#allocation7 + $0x180] sm:$0xff]
    %v790 = vld [vmem:[#allocation7 + $0x188] sm:$0xff]
    %v791 = vld [vmem:[#allocation7 + $0x190] sm:$0xff]
    %v792 = vld [vmem:[#allocation7 + $0x198] sm:$0xff]
    %v793 = vld [vmem:[#allocation7 + $0x1a0] sm:$0xff]
    %v794 = vld [vmem:[#allocation7 + $0x1a8] sm:$0xff]
    %v795 = vld [vmem:[#allocation7 + $0x1b0] sm:$0xff]
    %v796 = vld [vmem:[#allocation7 + $0x1b8] sm:$0xff]
    %v797 = vld [vmem:[#allocation7 + $0x1c0] sm:$0xff]
    %v798 = vld [vmem:[#allocation7 + $0x1c8] sm:$0xff]
    %v799 = vld [vmem:[#allocation7 + $0x1d0] sm:$0xff]
    %v800 = vld [vmem:[#allocation7 + $0x1d8] sm:$0xff]
    %v801 = vld [vmem:[#allocation7 + $0x1e0] sm:$0xff]
    %v802 = vld [vmem:[#allocation7 + $0x1e8] sm:$0xff]
    %v803 = vld [vmem:[#allocation7 + $0x1f0] sm:$0xff]
    %v804 = vld [vmem:[#allocation7 + $0x1f8] sm:$0xff]
    %v869 = vunpack.c.l.b16 %v741
    %v870 = vunpack.c.h.b16 %v741
    %v871 = vunpack.c.l.b16 %v742
    %v872 = vunpack.c.h.b16 %v742
    %v873 = vunpack.c.l.b16 %v743
    %v874 = vunpack.c.h.b16 %v743
    %v875 = vunpack.c.l.b16 %v744
    %v876 = vunpack.c.h.b16 %v744
    %v877 = vunpack.c.l.b16 %v745
    %v878 = vunpack.c.h.b16 %v745
    %v879 = vunpack.c.l.b16 %v746
    %v880 = vunpack.c.h.b16 %v746
    %v881 = vunpack.c.l.b16 %v747
    %v882 = vunpack.c.h.b16 %v747
    %v883 = vunpack.c.l.b16 %v748
    %v884 = vunpack.c.h.b16 %v748
    %v885 = vunpack.c.l.b16 %v749
    %v886 = vunpack.c.h.b16 %v749
    %v887 = vunpack.c.l.b16 %v750
    %v888 = vunpack.c.h.b16 %v750
    %v889 = vunpack.c.l.b16 %v751
    %v890 = vunpack.c.h.b16 %v751
    %v891 = vunpack.c.l.b16 %v752
    %v892 = vunpack.c.h.b16 %v752
    %v893 = vunpack.c.l.b16 %v753
    %v894 = vunpack.c.h.b16 %v753
    %v895 = vunpack.c.l.b16 %v754
    %v896 = vunpack.c.h.b16 %v754
    %v897 = vunpack.c.l.b16 %v755
    %v898 = vunpack.c.h.b16 %v755
    %v899 = vunpack.c.l.b16 %v756
    %v900 = vunpack.c.h.b16 %v756
    %v901 = vunpack.c.l.b16 %v757
    %v902 = vunpack.c.h.b16 %v757
    %v903 = vunpack.c.l.b16 %v758
    %v904 = vunpack.c.h.b16 %v758
    %v905 = vunpack.c.l.b16 %v759
    %v906 = vunpack.c.h.b16 %v759
    %v907 = vunpack.c.l.b16 %v760
    %v908 = vunpack.c.h.b16 %v760
    %v909 = vunpack.c.l.b16 %v761
    %v910 = vunpack.c.h.b16 %v761
    %v911 = vunpack.c.l.b16 %v762
    %v912 = vunpack.c.h.b16 %v762
    %v913 = vunpack.c.l.b16 %v763
    %v914 = vunpack.c.h.b16 %v763
    %v915 = vunpack.c.l.b16 %v764
    %v916 = vunpack.c.h.b16 %v764
    %v917 = vunpack.c.l.b16 %v765
    %v918 = vunpack.c.h.b16 %v765
    %v919 = vunpack.c.l.b16 %v766
    %v920 = vunpack.c.h.b16 %v766
    %v921 = vunpack.c.l.b16 %v767
    %v922 = vunpack.c.h.b16 %v767
    %v923 = vunpack.c.l.b16 %v768
    %v924 = vunpack.c.h.b16 %v768
    %v925 = vunpack.c.l.b16 %v769
    %v926 = vunpack.c.h.b16 %v769
    %v927 = vunpack.c.l.b16 %v770
    %v928 = vunpack.c.h.b16 %v770
    %v929 = vunpack.c.l.b16 %v771
    %v930 = vunpack.c.h.b16 %v771
    %v931 = vunpack.c.l.b16 %v772
    %v932 = vunpack.c.h.b16 %v772
    %v933 = vunpack.c.l.b16 %v773
    %v934 = vunpack.c.h.b16 %v773
    %v935 = vunpack.c.l.b16 %v774
    %v936 = vunpack.c.h.b16 %v774
    %v937 = vunpack.c.l.b16 %v775
    %v938 = vunpack.c.h.b16 %v775
    %v939 = vunpack.c.l.b16 %v776
    %v940 = vunpack.c.h.b16 %v776
    %v941 = vunpack.c.l.b16 %v777
    %v942 = vunpack.c.h.b16 %v777
    %v943 = vunpack.c.l.b16 %v778
    %v944 = vunpack.c.h.b16 %v778
    %v945 = vunpack.c.l.b16 %v779
    %v946 = vunpack.c.h.b16 %v779
    %v947 = vunpack.c.l.b16 %v780
    %v948 = vunpack.c.h.b16 %v780
    %v949 = vunpack.c.l.b16 %v781
    %v950 = vunpack.c.h.b16 %v781
    %v951 = vunpack.c.l.b16 %v782
    %v952 = vunpack.c.h.b16 %v782
    %v953 = vunpack.c.l.b16 %v783
    %v954 = vunpack.c.h.b16 %v783
    %v955 = vunpack.c.l.b16 %v784
    %v956 = vunpack.c.h.b16 %v784
    %v957 = vunpack.c.l.b16 %v785
    %v958 = vunpack.c.h.b16 %v785
    %v959 = vunpack.c.l.b16 %v786
    %v960 = vunpack.c.h.b16 %v786
    %v961 = vunpack.c.l.b16 %v787
    %v962 = vunpack.c.h.b16 %v787
    %v963 = vunpack.c.l.b16 %v788
    %v964 = vunpack.c.h.b16 %v788
    %v965 = vunpack.c.l.b16 %v789
    %v966 = vunpack.c.h.b16 %v789
    %v967 = vunpack.c.l.b16 %v790
    %v968 = vunpack.c.h.b16 %v790
    %v969 = vunpack.c.l.b16 %v791
    %v970 = vunpack.c.h.b16 %v791
    %v971 = vunpack.c.l.b16 %v792
    %v972 = vunpack.c.h.b16 %v792
    %v973 = vunpack.c.l.b16 %v793
    %v974 = vunpack.c.h.b16 %v793
    %v975 = vunpack.c.l.b16 %v794
    %v976 = vunpack.c.h.b16 %v794
    %v977 = vunpack.c.l.b16 %v795
    %v978 = vunpack.c.h.b16 %v795
    %v979 = vunpack.c.l.b16 %v796
    %v980 = vunpack.c.h.b16 %v796
    %v981 = vunpack.c.l.b16 %v797
    %v982 = vunpack.c.h.b16 %v797
    %v983 = vunpack.c.l.b16 %v798
    %v984 = vunpack.c.h.b16 %v798
    %v985 = vunpack.c.l.b16 %v799
    %v986 = vunpack.c.h.b16 %v799
    %v987 = vunpack.c.l.b16 %v800
    %v988 = vunpack.c.h.b16 %v800
    %v989 = vunpack.c.l.b16 %v801
    %v990 = vunpack.c.h.b16 %v801
    %v991 = vunpack.c.l.b16 %v802
    %v992 = vunpack.c.h.b16 %v802
    %v993 = vunpack.c.l.b16 %v803
    %v994 = vunpack.c.h.b16 %v803
    %v995 = vunpack.c.l.b16 %v804
    %v996 = vunpack.c.h.b16 %v804
    %v997 = vpack.c.b16 %v873, %v869
    %v998 = vpack.c.b16 %v874, %v870
    %v999 = vpack.c.b16 %v875, %v871
    %v1000 = vpack.c.b16 %v876, %v872
    %v1001 = vpack.c.b16 %v881, %v877
    %v1002 = vpack.c.b16 %v882, %v878
    %v1003 = vpack.c.b16 %v883, %v879
    %v1004 = vpack.c.b16 %v884, %v880
    %v1005 = vpack.c.b16 %v889, %v885
    %v1006 = vpack.c.b16 %v890, %v886
    %v1007 = vpack.c.b16 %v891, %v887
    %v1008 = vpack.c.b16 %v892, %v888
    %v1009 = vpack.c.b16 %v897, %v893
    %v1010 = vpack.c.b16 %v898, %v894
    %v1011 = vpack.c.b16 %v899, %v895
    %v1012 = vpack.c.b16 %v900, %v896
    %v1013 = vpack.c.b16 %v905, %v901
    %v1014 = vpack.c.b16 %v906, %v902
    %v1015 = vpack.c.b16 %v907, %v903
    %v1016 = vpack.c.b16 %v908, %v904
    %v1017 = vpack.c.b16 %v913, %v909
    %v1018 = vpack.c.b16 %v914, %v910
    %v1019 = vpack.c.b16 %v915, %v911
    %v1020 = vpack.c.b16 %v916, %v912
    %v1021 = vpack.c.b16 %v921, %v917
    %v1022 = vpack.c.b16 %v922, %v918
    %v1023 = vpack.c.b16 %v923, %v919
    %v1024 = vpack.c.b16 %v924, %v920
    %v1025 = vpack.c.b16 %v929, %v925
    %v1026 = vpack.c.b16 %v930, %v926
    %v1027 = vpack.c.b16 %v931, %v927
    %v1028 = vpack.c.b16 %v932, %v928
    %v1029 = vpack.c.b16 %v937, %v933
    %v1030 = vpack.c.b16 %v938, %v934
    %v1031 = vpack.c.b16 %v939, %v935
    %v1032 = vpack.c.b16 %v940, %v936
    %v1033 = vpack.c.b16 %v945, %v941
    %v1034 = vpack.c.b16 %v946, %v942
    %v1035 = vpack.c.b16 %v947, %v943
    %v1036 = vpack.c.b16 %v948, %v944
    %v1037 = vpack.c.b16 %v953, %v949
    %v1038 = vpack.c.b16 %v954, %v950
    %v1039 = vpack.c.b16 %v955, %v951
    %v1040 = vpack.c.b16 %v956, %v952
    %v1041 = vpack.c.b16 %v961, %v957
    %v1042 = vpack.c.b16 %v962, %v958
    %v1043 = vpack.c.b16 %v963, %v959
    %v1044 = vpack.c.b16 %v964, %v960
    %v1045 = vpack.c.b16 %v969, %v965
    %v1046 = vpack.c.b16 %v970, %v966
    %v1047 = vpack.c.b16 %v971, %v967
    %v1048 = vpack.c.b16 %v972, %v968
    %v1049 = vpack.c.b16 %v977, %v973
    %v1050 = vpack.c.b16 %v978, %v974
    %v1051 = vpack.c.b16 %v979, %v975
    %v1052 = vpack.c.b16 %v980, %v976
    %v1053 = vpack.c.b16 %v985, %v981
    %v1054 = vpack.c.b16 %v986, %v982
    %v1055 = vpack.c.b16 %v987, %v983
    %v1056 = vpack.c.b16 %v988, %v984
    %v1057 = vpack.c.b16 %v993, %v989
    %v1058 = vpack.c.b16 %v994, %v990
    %v1059 = vpack.c.b16 %v995, %v991
    %v1060 = vpack.c.b16 %v996, %v992
    %1125 = vmatpush.bf16.msra.mxu0 %v1025
    %1126 = vmatpush.bf16.msra.mxu0 %v1021
    %1127 = vmatpush.bf16.msra.mxu0 %v1017
    %1128 = vmatpush.bf16.msra.mxu0 %v1013
    %1129 = vmatpush.bf16.msra.mxu0 %v1009
    %1130 = vmatpush.bf16.msra.mxu0 %v1005
    %1131 = vmatpush.bf16.msra.mxu0 %v1001
    %1132 = vmatpush.bf16.msra.mxu0 %v997
    %1133 = vmatmul.bf16.gmra.mxu0 %v739
    %v1134 = vpop.f32.mrf.mxu0
    %v1135 = vadd.f32 %v461, %v1134
    %v1136 = vpop.f32.mrf.mxu0
    %1137 = vdwg.mxu0
    %1138 = vmatpush.bf16.msra.mxu0 %v1057
    %1139 = vmatpush.bf16.msra.mxu0 %v1053
    %1140 = vmatpush.bf16.msra.mxu0 %v1049
    %1141 = vmatpush.bf16.msra.mxu0 %v1045
    %1142 = vmatpush.bf16.msra.mxu0 %v1041
    %1143 = vmatpush.bf16.msra.mxu0 %v1037
    %1144 = vmatpush.bf16.msra.mxu0 %v1033
    %1145 = vmatpush.bf16.msra.mxu0 %v1029
    %1146 = vmatmul.bf16.gmra.mxu0 %v740
    %v1147 = vpop.f32.mrf.mxu0
    %v1148 = vadd.f32 %v1135, %v1147
    %v1149 = vpop.f32.mrf.mxu0
    %1150 = vdwg.mxu0
    %1151 = vmatpush.bf16.msra.mxu0 %v1026
    %1152 = vmatpush.bf16.msra.mxu0 %v1022
    %1153 = vmatpush.bf16.msra.mxu0 %v1018
    %1154 = vmatpush.bf16.msra.mxu0 %v1014
    %1155 = vmatpush.bf16.msra.mxu0 %v1010
    %1156 = vmatpush.bf16.msra.mxu0 %v1006
    %1157 = vmatpush.bf16.msra.mxu0 %v1002
    %1158 = vmatpush.bf16.msra.mxu0 %v998
    %1159 = vmatmul.bf16.gmra.mxu0 %v739
    %v1160 = vpop.f32.mrf.mxu0
    %v1161 = vadd.f32 %v462, %v1160
    %v1162 = vpop.f32.mrf.mxu0
    %1163 = vdwg.mxu0
    %1164 = vmatpush.bf16.msra.mxu0 %v1058
    %1165 = vmatpush.bf16.msra.mxu0 %v1054
    %1166 = vmatpush.bf16.msra.mxu0 %v1050
    %1167 = vmatpush.bf16.msra.mxu0 %v1046
    %1168 = vmatpush.bf16.msra.mxu0 %v1042
    %1169 = vmatpush.bf16.msra.mxu0 %v1038
    %1170 = vmatpush.bf16.msra.mxu0 %v1034
    %1171 = vmatpush.bf16.msra.mxu0 %v1030
    %1172 = vmatmul.bf16.gmra.mxu0 %v740
    %v1173 = vpop.f32.mrf.mxu0
    %v1174 = vadd.f32 %v1161, %v1173
    %v1175 = vpop.f32.mrf.mxu0
    %1176 = vdwg.mxu0
    %1177 = vmatpush.bf16.msra.mxu0 %v1027
    %1178 = vmatpush.bf16.msra.mxu0 %v1023
    %1179 = vmatpush.bf16.msra.mxu0 %v1019
    %1180 = vmatpush.bf16.msra.mxu0 %v1015
    %1181 = vmatpush.bf16.msra.mxu0 %v1011
    %1182 = vmatpush.bf16.msra.mxu0 %v1007
    %1183 = vmatpush.bf16.msra.mxu0 %v1003
    %1184 = vmatpush.bf16.msra.mxu0 %v999
    %1185 = vmatmul.bf16.gmra.mxu0 %v739
    %v1186 = vpop.f32.mrf.mxu0
    %v1187 = vadd.f32 %v463, %v1186
    %v1188 = vpop.f32.mrf.mxu0
    %1189 = vdwg.mxu0
    %1190 = vmatpush.bf16.msra.mxu0 %v1059
    %1191 = vmatpush.bf16.msra.mxu0 %v1055
    %1192 = vmatpush.bf16.msra.mxu0 %v1051
    %1193 = vmatpush.bf16.msra.mxu0 %v1047
    %1194 = vmatpush.bf16.msra.mxu0 %v1043
    %1195 = vmatpush.bf16.msra.mxu0 %v1039
    %1196 = vmatpush.bf16.msra.mxu0 %v1035
    %1197 = vmatpush.bf16.msra.mxu0 %v1031
    %1198 = vmatmul.bf16.gmra.mxu0 %v740
    %v1199 = vpop.f32.mrf.mxu0
    %v1200 = vadd.f32 %v1187, %v1199
    %v1201 = vpop.f32.mrf.mxu0
    %1202 = vdwg.mxu0
    %1203 = vmatpush.bf16.msra.mxu0 %v1028
    %1204 = vmatpush.bf16.msra.mxu0 %v1024
    %1205 = vmatpush.bf16.msra.mxu0 %v1020
    %1206 = vmatpush.bf16.msra.mxu0 %v1016
    %1207 = vmatpush.bf16.msra.mxu0 %v1012
    %1208 = vmatpush.bf16.msra.mxu0 %v1008
    %1209 = vmatpush.bf16.msra.mxu0 %v1004
    %1210 = vmatpush.bf16.msra.mxu0 %v1000
    %1211 = vmatmul.bf16.gmra.mxu0 %v739
    %v1212 = vpop.f32.mrf.mxu0
    %v1213 = vadd.f32 %v464, %v1212
    %v1214 = vpop.f32.mrf.mxu0
    %1215 = vdwg.mxu0
    %1216 = vmatpush.bf16.msra.mxu0 %v1060
    %1217 = vmatpush.bf16.msra.mxu0 %v1056
    %1218 = vmatpush.bf16.msra.mxu0 %v1052
    %1219 = vmatpush.bf16.msra.mxu0 %v1048
    %1220 = vmatpush.bf16.msra.mxu0 %v1044
    %1221 = vmatpush.bf16.msra.mxu0 %v1040
    %1222 = vmatpush.bf16.msra.mxu0 %v1036
    %1223 = vmatpush.bf16.msra.mxu0 %v1032
    %1224 = vmatmul.bf16.gmra.mxu0 %v740
    %v1225 = vpop.f32.mrf.mxu0
    %v1226 = vadd.f32 %v1213, %v1225
    %v1227 = vpop.f32.mrf.mxu0
    %1228 = vdwg.mxu0
    %v1229 = vmul.f32 %v1148, 0.5
    %v1230 = vmul.f32 %v1174, 0.5
    %v1231 = vmul.f32 %v1200, 0.5
    %v1232 = vtanh.pop %v1229
    %v1233 = vtanh.pop %v1230
    %v1234 = vtanh.pop %v1231
    %v1235 = vmul.f32 %v1232, 0.5
    %v1236 = vmul.f32 %v1233, 0.5
    %v1237 = vmul.f32 %v1234, 0.5
    %v1238 = vadd.f32 %v1235, 0.5
    %v1239 = vadd.f32 %v1236, 0.5
    %v1240 = vadd.f32 %v1237, 0.5
    %v1241 = vtanh.pop %v1226
    %v1242 = vmul.f32 %v1239, 0.0
    %v1243 = vmul.f32 %v1238, %v1241
    %v1244 = vadd.f32 %v1242, %v1243
    %v1245 = vtanh.pop %v1244
    %v1246 = vmul.f32 %v1240, %v1245
    %v1247 = vld [vmem:[#allocation2 + $0x20] sm:$0xff]
    %v1248 = vld [vmem:[#allocation2 + $0x28] sm:$0xff]
    %v1249 = vld [vmem:[#allocation2 + $0x30] sm:$0xff]
    %v1250 = vld [vmem:[#allocation2 + $0x38] sm:$0xff]
    %1251 = vmatpush.bf16.msra.mxu0 %v629
    %1252 = vmatpush.bf16.msra.mxu0 %v625
    %1253 = vmatpush.bf16.msra.mxu0 %v621
    %1254 = vmatpush.bf16.msra.mxu0 %v617
    %1255 = vmatpush.bf16.msra.mxu0 %v613
    %1256 = vmatpush.bf16.msra.mxu0 %v609
    %1257 = vmatpush.bf16.msra.mxu0 %v605
    %1258 = vmatpush.bf16.msra.mxu0 %v601
    %1259 = vmatmul.bf16.gmra.mxu0 %v739
    %v1260 = vpop.f32.mrf.mxu0
    %v1261 = vadd.f32 0.0, %v1260
    %v1262 = vpop.f32.mrf.mxu0
    %1263 = vdwg.mxu0
    %1264 = vmatpush.bf16.msra.mxu0 %v630
    %1265 = vmatpush.bf16.msra.mxu0 %v626
    %1266 = vmatpush.bf16.msra.mxu0 %v622
    %1267 = vmatpush.bf16.msra.mxu0 %v618
    %1268 = vmatpush.bf16.msra.mxu0 %v614
    %1269 = vmatpush.bf16.msra.mxu0 %v610
    %1270 = vmatpush.bf16.msra.mxu0 %v606
    %1271 = vmatpush.bf16.msra.mxu0 %v602
    %1272 = vmatmul.bf16.gmra.mxu0 %v739
    %v1273 = vpop.f32.mrf.mxu0
    %v1274 = vadd.f32 0.0, %v1273
    %v1275 = vpop.f32.mrf.mxu0
    %1276 = vdwg.mxu0
    %1277 = vmatpush.bf16.msra.mxu0 %v631
    %1278 = vmatpush.bf16.msra.mxu0 %v627
    %1279 = vmatpush.bf16.msra.mxu0 %v623
    %1280 = vmatpush.bf16.msra.mxu0 %v619
    %1281 = vmatpush.bf16.msra.mxu0 %v615
    %1282 = vmatpush.bf16.msra.mxu0 %v611
    %1283 = vmatpush.bf16.msra.mxu0 %v607
    %1284 = vmatpush.bf16.msra.mxu0 %v603
    %1285 = vmatmul.bf16.gmra.mxu0 %v739
    %v1286 = vpop.f32.mrf.mxu0
    %v1287 = vadd.f32 0.0, %v1286
    %v1288 = vpop.f32.mrf.mxu0
    %1289 = vdwg.mxu0
    %1290 = vmatpush.bf16.msra.mxu0 %v632
    %1291 = vmatpush.bf16.msra.mxu0 %v628
    %1292 = vmatpush.bf16.msra.mxu0 %v624
    %1293 = vmatpush.bf16.msra.mxu0 %v620
    %1294 = vmatpush.bf16.msra.mxu0 %v616
    %1295 = vmatpush.bf16.msra.mxu0 %v612
    %1296 = vmatpush.bf16.msra.mxu0 %v608
    %1297 = vmatpush.bf16.msra.mxu0 %v604
    %1298 = vmatmul.bf16.gmra.mxu0 %v739
    %v1299 = vpop.f32.mrf.mxu0
    %v1300 = vadd.f32 0.0, %v1299
    %v1301 = vpop.f32.mrf.mxu0
    %1302 = vdwg.mxu0
    %v1303 = vadd.f32 %v1247, %v1261
    %v1304 = vadd.f32 %v1248, %v1274
    %v1305 = vadd.f32 %v1249, %v1287
    %v1306 = vadd.f32 %v1250, %v1300
    %v1307 = vmul.f32 %v1303, 0.5
    %v1308 = vmul.f32 %v1304, 0.5
    %v1309 = vmul.f32 %v1305, 0.5
    %v1310 = vtanh.pop %v1307
    %v1311 = vtanh.pop %v1308
    %v1312 = vtanh.pop %v1309
    %v1313 = vmul.f32 %v1310, 0.5
    %v1314 = vmul.f32 %v1311, 0.5
    %v1315 = vmul.f32 %v1312, 0.5
    %v1316 = vadd.f32 %v1313, 0.5
    %v1317 = vadd.f32 %v1314, 0.5
    %v1318 = vadd.f32 %v1315, 0.5
    %v1319 = vtanh.pop %v1306
    %v1320 = vmul.f32 %v1317, %v736
    %v1321 = vmul.f32 %v1316, %v1319
    %v1322 = vadd.f32 %v1320, %v1321
    %v1323 = vtanh.pop %v1322
    %v1324 = vmul.f32 %v1318, %v1323
    %v1325 = vpack.c.bf16 %v1324, %v1324
    %v1326 = vpack.c.bf16 %v1246, %v1246
    %1327 = vmatpush.bf16.msra.mxu0 %v1025
    %1328 = vmatpush.bf16.msra.mxu0 %v1021
    %1329 = vmatpush.bf16.msra.mxu0 %v1017
    %1330 = vmatpush.bf16.msra.mxu0 %v1013
    %1331 = vmatpush.bf16.msra.mxu0 %v1009
    %1332 = vmatpush.bf16.msra.mxu0 %v1005
    %1333 = vmatpush.bf16.msra.mxu0 %v1001
    %1334 = vmatpush.bf16.msra.mxu0 %v997
    %1335 = vmatmul.bf16.gmra.mxu0 %v1325
    %v1336 = vpop.f32.mrf.mxu0
    %v1337 = vadd.f32 %v461, %v1336
    %v1338 = vpop.f32.mrf.mxu0
    %1339 = vdwg.mxu0
    %1340 = vmatpush.bf16.msra.mxu0 %v1057
    %1341 = vmatpush.bf16.msra.mxu0 %v1053
    %1342 = vmatpush.bf16.msra.mxu0 %v1049
    %1343 = vmatpush.bf16.msra.mxu0 %v1045
    %1344 = vmatpush.bf16.msra.mxu0 %v1041
    %1345 = vmatpush.bf16.msra.mxu0 %v1037
    %1346 = vmatpush.bf16.msra.mxu0 %v1033
    %1347 = vmatpush.bf16.msra.mxu0 %v1029
    %1348 = vmatmul.bf16.gmra.mxu0 %v1326
    %v1349 = vpop.f32.mrf.mxu0
    %v1350 = vadd.f32 %v1337, %v1349
    %v1351 = vpop.f32.mrf.mxu0
    %1352 = vdwg.mxu0
    %1353 = vmatpush.bf16.msra.mxu0 %v1026
    %1354 = vmatpush.bf16.msra.mxu0 %v1022
    %1355 = vmatpush.bf16.msra.mxu0 %v1018
    %1356 = vmatpush.bf16.msra.mxu0 %v1014
    %1357 = vmatpush.bf16.msra.mxu0 %v1010
    %1358 = vmatpush.bf16.msra.mxu0 %v1006
    %1359 = vmatpush.bf16.msra.mxu0 %v1002
    %1360 = vmatpush.bf16.msra.mxu0 %v998
    %1361 = vmatmul.bf16.gmra.mxu0 %v1325
    %v1362 = vpop.f32.mrf.mxu0
    %v1363 = vadd.f32 %v462, %v1362
    %v1364 = vpop.f32.mrf.mxu0
    %1365 = vdwg.mxu0
    %1366 = vmatpush.bf16.msra.mxu0 %v1058
    %1367 = vmatpush.bf16.msra.mxu0 %v1054
    %1368 = vmatpush.bf16.msra.mxu0 %v1050
    %1369 = vmatpush.bf16.msra.mxu0 %v1046
    %1370 = vmatpush.bf16.msra.mxu0 %v1042
    %1371 = vmatpush.bf16.msra.mxu0 %v1038
    %1372 = vmatpush.bf16.msra.mxu0 %v1034
    %1373 = vmatpush.bf16.msra.mxu0 %v1030
    %1374 = vmatmul.bf16.gmra.mxu0 %v1326
    %v1375 = vpop.f32.mrf.mxu0
    %v1376 = vadd.f32 %v1363, %v1375
    %v1377 = vpop.f32.mrf.mxu0
    %1378 = vdwg.mxu0
    %1379 = vmatpush.bf16.msra.mxu0 %v1027
    %1380 = vmatpush.bf16.msra.mxu0 %v1023
    %1381 = vmatpush.bf16.msra.mxu0 %v1019
    %1382 = vmatpush.bf16.msra.mxu0 %v1015
    %1383 = vmatpush.bf16.msra.mxu0 %v1011
    %1384 = vmatpush.bf16.msra.mxu0 %v1007
    %1385 = vmatpush.bf16.msra.mxu0 %v1003
    %1386 = vmatpush.bf16.msra.mxu0 %v999
    %1387 = vmatmul.bf16.gmra.mxu0 %v1325
    %v1388 = vpop.f32.mrf.mxu0
    %v1389 = vadd.f32 %v463, %v1388
    %v1390 = vpop.f32.mrf.mxu0
    %1391 = vdwg.mxu0
    %1392 = vmatpush.bf16.msra.mxu0 %v1059
    %1393 = vmatpush.bf16.msra.mxu0 %v1055
    %1394 = vmatpush.bf16.msra.mxu0 %v1051
    %1395 = vmatpush.bf16.msra.mxu0 %v1047
    %1396 = vmatpush.bf16.msra.mxu0 %v1043
    %1397 = vmatpush.bf16.msra.mxu0 %v1039
    %1398 = vmatpush.bf16.msra.mxu0 %v1035
    %1399 = vmatpush.bf16.msra.mxu0 %v1031
    %1400 = vmatmul.bf16.gmra.mxu0 %v1326
    %v1401 = vpop.f32.mrf.mxu0
    %v1402 = vadd.f32 %v1389, %v1401
    %v1403 = vpop.f32.mrf.mxu0
    %1404 = vdwg.mxu0
    %1405 = vmatpush.bf16.msra.mxu0 %v1028
    %1406 = vmatpush.bf16.msra.mxu0 %v1024
    %1407 = vmatpush.bf16.msra.mxu0 %v1020
    %1408 = vmatpush.bf16.msra.mxu0 %v1016
    %1409 = vmatpush.bf16.msra.mxu0 %v1012
    %1410 = vmatpush.bf16.msra.mxu0 %v1008
    %1411 = vmatpush.bf16.msra.mxu0 %v1004
    %1412 = vmatpush.bf16.msra.mxu0 %v1000
    %1413 = vmatmul.bf16.gmra.mxu0 %v1325
    %v1414 = vpop.f32.mrf.mxu0
    %v1415 = vadd.f32 %v464, %v1414
    %v1416 = vpop.f32.mrf.mxu0
    %1417 = vdwg.mxu0
    %1418 = vmatpush.bf16.msra.mxu0 %v1060
    %1419 = vmatpush.bf16.msra.mxu0 %v1056
    %1420 = vmatpush.bf16.msra.mxu0 %v1052
    %1421 = vmatpush.bf16.msra.mxu0 %v1048
    %1422 = vmatpush.bf16.msra.mxu0 %v1044
    %1423 = vmatpush.bf16.msra.mxu0 %v1040
    %1424 = vmatpush.bf16.msra.mxu0 %v1036
    %1425 = vmatpush.bf16.msra.mxu0 %v1032
    %1426 = vmatmul.bf16.gmra.mxu0 %v1326
    %v1427 = vpop.f32.mrf.mxu0
    %v1428 = vadd.f32 %v1415, %v1427
    %v1429 = vpop.f32.mrf.mxu0
    %1430 = vdwg.mxu0
    %v1431 = vmul.f32 %v1350, 0.5
    %v1432 = vmul.f32 %v1376, 0.5
    %v1433 = vmul.f32 %v1402, 0.5
    %v1434 = vtanh.pop %v1431
    %v1435 = vtanh.pop %v1432
    %v1436 = vtanh.pop %v1433
    %v1437 = vmul.f32 %v1434, 0.5
    %v1438 = vmul.f32 %v1435, 0.5
    %v1439 = vmul.f32 %v1436, 0.5
    %v1440 = vadd.f32 %v1437, 0.5
    %v1441 = vadd.f32 %v1438, 0.5
    %v1442 = vadd.f32 %v1439, 0.5
    %v1443 = vtanh.pop %v1428
    %v1444 = vmul.f32 %v1441, %v1244
    %v1445 = vmul.f32 %v1440, %v1443
    %v1446 = vadd.f32 %v1444, %v1445
    %v1447 = vtanh.pop %v1446
    %v1448 = vmul.f32 %v1442, %v1447
    %v1449 = vld [vmem:[#allocation2 + $0x40] sm:$0xff]
    %v1450 = vld [vmem:[#allocation2 + $0x48] sm:$0xff]
    %v1451 = vld [vmem:[#allocation2 + $0x50] sm:$0xff]
    %v1452 = vld [vmem:[#allocation2 + $0x58] sm:$0xff]
    %1453 = vmatpush.bf16.msra.mxu0 %v629
    %1454 = vmatpush.bf16.msra.mxu0 %v625
    %1455 = vmatpush.bf16.msra.mxu0 %v621
    %1456 = vmatpush.bf16.msra.mxu0 %v617
    %1457 = vmatpush.bf16.msra.mxu0 %v613
    %1458 = vmatpush.bf16.msra.mxu0 %v609
    %1459 = vmatpush.bf16.msra.mxu0 %v605
    %1460 = vmatpush.bf16.msra.mxu0 %v601
    %1461 = vmatmul.bf16.gmra.mxu0 %v1325
    %v1462 = vpop.f32.mrf.mxu0
    %v1463 = vadd.f32 0.0, %v1462
    %v1464 = vpop.f32.mrf.mxu0
    %1465 = vdwg.mxu0
    %1466 = vmatpush.bf16.msra.mxu0 %v630
    %1467 = vmatpush.bf16.msra.mxu0 %v626
    %1468 = vmatpush.bf16.msra.mxu0 %v622
    %1469 = vmatpush.bf16.msra.mxu0 %v618
    %1470 = vmatpush.bf16.msra.mxu0 %v614
    %1471 = vmatpush.bf16.msra.mxu0 %v610
    %1472 = vmatpush.bf16.msra.mxu0 %v606
    %1473 = vmatpush.bf16.msra.mxu0 %v602
    %1474 = vmatmul.bf16.gmra.mxu0 %v1325
    %v1475 = vpop.f32.mrf.mxu0
    %v1476 = vadd.f32 0.0, %v1475
    %v1477 = vpop.f32.mrf.mxu0
    %1478 = vdwg.mxu0
    %1479 = vmatpush.bf16.msra.mxu0 %v631
    %1480 = vmatpush.bf16.msra.mxu0 %v627
    %1481 = vmatpush.bf16.msra.mxu0 %v623
    %1482 = vmatpush.bf16.msra.mxu0 %v619
    %1483 = vmatpush.bf16.msra.mxu0 %v615
    %1484 = vmatpush.bf16.msra.mxu0 %v611
    %1485 = vmatpush.bf16.msra.mxu0 %v607
    %1486 = vmatpush.bf16.msra.mxu0 %v603
    %1487 = vmatmul.bf16.gmra.mxu0 %v1325
    %v1488 = vpop.f32.mrf.mxu0
    %v1489 = vadd.f32 0.0, %v1488
    %v1490 = vpop.f32.mrf.mxu0
    %1491 = vdwg.mxu0
    %1492 = vmatpush.bf16.msra.mxu0 %v632
    %1493 = vmatpush.bf16.msra.mxu0 %v628
    %1494 = vmatpush.bf16.msra.mxu0 %v624
    %1495 = vmatpush.bf16.msra.mxu0 %v620
    %1496 = vmatpush.bf16.msra.mxu0 %v616
    %1497 = vmatpush.bf16.msra.mxu0 %v612
    %1498 = vmatpush.bf16.msra.mxu0 %v608
    %1499 = vmatpush.bf16.msra.mxu0 %v604
    %1500 = vmatmul.bf16.gmra.mxu0 %v1325
    %v1501 = vpop.f32.mrf.mxu0
    %v1502 = vadd.f32 0.0, %v1501
    %v1503 = vpop.f32.mrf.mxu0
    %1504 = vdwg.mxu0
    %v1505 = vadd.f32 %v1449, %v1463
    %v1506 = vadd.f32 %v1450, %v1476
    %v1507 = vadd.f32 %v1451, %v1489
    %v1508 = vadd.f32 %v1452, %v1502
    %v1509 = vmul.f32 %v1505, 0.5
    %v1510 = vmul.f32 %v1506, 0.5
    %v1511 = vmul.f32 %v1507, 0.5
    %v1512 = vtanh.pop %v1509
    %v1513 = vtanh.pop %v1510
    %v1514 = vtanh.pop %v1511
    %v1515 = vmul.f32 %v1512, 0.5
    %v1516 = vmul.f32 %v1513, 0.5
    %v1517 = vmul.f32 %v1514, 0.5
    %v1518 = vadd.f32 %v1515, 0.5
    %v1519 = vadd.f32 %v1516, 0.5
    %v1520 = vadd.f32 %v1517, 0.5
    %v1521 = vtanh.pop %v1508
    %v1522 = vmul.f32 %v1519, %v1322
    %v1523 = vmul.f32 %v1518, %v1521
    %v1524 = vadd.f32 %v1522, %v1523
    %v1525 = vtanh.pop %v1524
    %v1526 = vmul.f32 %v1520, %v1525
    %v1527 = vpack.c.bf16 %v1526, %v1526
    %v1528 = vpack.c.bf16 %v1448, %v1448
    %1529 = vmatpush.bf16.msra.mxu0 %v1025
    %1530 = vmatpush.bf16.msra.mxu0 %v1021
    %1531 = vmatpush.bf16.msra.mxu0 %v1017
    %1532 = vmatpush.bf16.msra.mxu0 %v1013
    %1533 = vmatpush.bf16.msra.mxu0 %v1009
    %1534 = vmatpush.bf16.msra.mxu0 %v1005
    %1535 = vmatpush.bf16.msra.mxu0 %v1001
    %1536 = vmatpush.bf16.msra.mxu0 %v997
    %1537 = vmatmul.bf16.gmra.mxu0 %v1527
    %v1538 = vpop.f32.mrf.mxu0
    %v1539 = vadd.f32 %v461, %v1538
    %v1540 = vpop.f32.mrf.mxu0
    %1541 = vdwg.mxu0
    %1542 = vmatpush.bf16.msra.mxu0 %v1057
    %1543 = vmatpush.bf16.msra.mxu0 %v1053
    %1544 = vmatpush.bf16.msra.mxu0 %v1049
    %1545 = vmatpush.bf16.msra.mxu0 %v1045
    %1546 = vmatpush.bf16.msra.mxu0 %v1041
    %1547 = vmatpush.bf16.msra.mxu0 %v1037
    %1548 = vmatpush.bf16.msra.mxu0 %v1033
    %1549 = vmatpush.bf16.msra.mxu0 %v1029
    %1550 = vmatmul.bf16.gmra.mxu0 %v1528
    %v1551 = vpop.f32.mrf.mxu0
    %v1552 = vadd.f32 %v1539, %v1551
    %v1553 = vpop.f32.mrf.mxu0
    %1554 = vdwg.mxu0
    %1555 = vmatpush.bf16.msra.mxu0 %v1026
    %1556 = vmatpush.bf16.msra.mxu0 %v1022
    %1557 = vmatpush.bf16.msra.mxu0 %v1018
    %1558 = vmatpush.bf16.msra.mxu0 %v1014
    %1559 = vmatpush.bf16.msra.mxu0 %v1010
    %1560 = vmatpush.bf16.msra.mxu0 %v1006
    %1561 = vmatpush.bf16.msra.mxu0 %v1002
    %1562 = vmatpush.bf16.msra.mxu0 %v998
    %1563 = vmatmul.bf16.gmra.mxu0 %v1527
    %v1564 = vpop.f32.mrf.mxu0
    %v1565 = vadd.f32 %v462, %v1564
    %v1566 = vpop.f32.mrf.mxu0
    %1567 = vdwg.mxu0
    %1568 = vmatpush.bf16.msra.mxu0 %v1058
    %1569 = vmatpush.bf16.msra.mxu0 %v1054
    %1570 = vmatpush.bf16.msra.mxu0 %v1050
    %1571 = vmatpush.bf16.msra.mxu0 %v1046
    %1572 = vmatpush.bf16.msra.mxu0 %v1042
    %1573 = vmatpush.bf16.msra.mxu0 %v1038
    %1574 = vmatpush.bf16.msra.mxu0 %v1034
    %1575 = vmatpush.bf16.msra.mxu0 %v1030
    %1576 = vmatmul.bf16.gmra.mxu0 %v1528
    %v1577 = vpop.f32.mrf.mxu0
    %v1578 = vadd.f32 %v1565, %v1577
    %v1579 = vpop.f32.mrf.mxu0
    %1580 = vdwg.mxu0
    %1581 = vmatpush.bf16.msra.mxu0 %v1027
    %1582 = vmatpush.bf16.msra.mxu0 %v1023
    %1583 = vmatpush.bf16.msra.mxu0 %v1019
    %1584 = vmatpush.bf16.msra.mxu0 %v1015
    %1585 = vmatpush.bf16.msra.mxu0 %v1011
    %1586 = vmatpush.bf16.msra.mxu0 %v1007
    %1587 = vmatpush.bf16.msra.mxu0 %v1003
    %1588 = vmatpush.bf16.msra.mxu0 %v999
    %1589 = vmatmul.bf16.gmra.mxu0 %v1527
    %v1590 = vpop.f32.mrf.mxu0
    %v1591 = vadd.f32 %v463, %v1590
    %v1592 = vpop.f32.mrf.mxu0
    %1593 = vdwg.mxu0
    %1594 = vmatpush.bf16.msra.mxu0 %v1059
    %1595 = vmatpush.bf16.msra.mxu0 %v1055
    %1596 = vmatpush.bf16.msra.mxu0 %v1051
    %1597 = vmatpush.bf16.msra.mxu0 %v1047
    %1598 = vmatpush.bf16.msra.mxu0 %v1043
    %1599 = vmatpush.bf16.msra.mxu0 %v1039
    %1600 = vmatpush.bf16.msra.mxu0 %v1035
    %1601 = vmatpush.bf16.msra.mxu0 %v1031
    %1602 = vmatmul.bf16.gmra.mxu0 %v1528
    %v1603 = vpop.f32.mrf.mxu0
    %v1604 = vadd.f32 %v1591, %v1603
    %v1605 = vpop.f32.mrf.mxu0
    %1606 = vdwg.mxu0
    %1607 = vmatpush.bf16.msra.mxu0 %v1028
    %1608 = vmatpush.bf16.msra.mxu0 %v1024
    %1609 = vmatpush.bf16.msra.mxu0 %v1020
    %1610 = vmatpush.bf16.msra.mxu0 %v1016
    %1611 = vmatpush.bf16.msra.mxu0 %v1012
    %1612 = vmatpush.bf16.msra.mxu0 %v1008
    %1613 = vmatpush.bf16.msra.mxu0 %v1004
    %1614 = vmatpush.bf16.msra.mxu0 %v1000
    %1615 = vmatmul.bf16.gmra.mxu0 %v1527
    %v1616 = vpop.f32.mrf.mxu0
    %v1617 = vadd.f32 %v464, %v1616
    %v1618 = vpop.f32.mrf.mxu0
    %1619 = vdwg.mxu0
    %1620 = vmatpush.bf16.msra.mxu0 %v1060
    %1621 = vmatpush.bf16.msra.mxu0 %v1056
    %1622 = vmatpush.bf16.msra.mxu0 %v1052
    %1623 = vmatpush.bf16.msra.mxu0 %v1048
    %1624 = vmatpush.bf16.msra.mxu0 %v1044
    %1625 = vmatpush.bf16.msra.mxu0 %v1040
    %1626 = vmatpush.bf16.msra.mxu0 %v1036
    %1627 = vmatpush.bf16.msra.mxu0 %v1032
    %1628 = vmatmul.bf16.gmra.mxu0 %v1528
    %v1629 = vpop.f32.mrf.mxu0
    %v1630 = vadd.f32 %v1617, %v1629
    %v1631 = vpop.f32.mrf.mxu0
    %1632 = vdwg.mxu0
    %v1633 = vmul.f32 %v1552, 0.5
    %v1634 = vmul.f32 %v1578, 0.5
    %v1635 = vmul.f32 %v1604, 0.5
    %v1636 = vtanh.pop %v1633
    %v1637 = vtanh.pop %v1634
    %v1638 = vtanh.pop %v1635
    %v1639 = vmul.f32 %v1636, 0.5
    %v1640 = vmul.f32 %v1637, 0.5
    %v1641 = vmul.f32 %v1638, 0.5
    %v1642 = vadd.f32 %v1639, 0.5
    %v1643 = vadd.f32 %v1640, 0.5
    %v1644 = vadd.f32 %v1641, 0.5
    %v1645 = vtanh.pop %v1630
    %v1646 = vmul.f32 %v1643, %v1446
    %v1647 = vmul.f32 %v1642, %v1645
    %v1648 = vadd.f32 %v1646, %v1647
    %v1649 = vtanh.pop %v1648
    %v1650 = vmul.f32 %v1644, %v1649
    %v1651 = vld [vmem:[#allocation2 + $0x60] sm:$0xff]
    %v1652 = vld [vmem:[#allocation2 + $0x68] sm:$0xff]
    %v1653 = vld [vmem:[#allocation2 + $0x70] sm:$0xff]
    %v1654 = vld [vmem:[#allocation2 + $0x78] sm:$0xff]
    %1655 = vmatpush.bf16.msra.mxu0 %v629
    %1656 = vmatpush.bf16.msra.mxu0 %v625
    %1657 = vmatpush.bf16.msra.mxu0 %v621
    %1658 = vmatpush.bf16.msra.mxu0 %v617
    %1659 = vmatpush.bf16.msra.mxu0 %v613
    %1660 = vmatpush.bf16.msra.mxu0 %v609
    %1661 = vmatpush.bf16.msra.mxu0 %v605
    %1662 = vmatpush.bf16.msra.mxu0 %v601
    %1663 = vmatmul.bf16.gmra.mxu0 %v1527
    %v1664 = vpop.f32.mrf.mxu0
    %v1665 = vadd.f32 0.0, %v1664
    %v1666 = vpop.f32.mrf.mxu0
    %1667 = vdwg.mxu0
    %1668 = vmatpush.bf16.msra.mxu0 %v630
    %1669 = vmatpush.bf16.msra.mxu0 %v626
    %1670 = vmatpush.bf16.msra.mxu0 %v622
    %1671 = vmatpush.bf16.msra.mxu0 %v618
    %1672 = vmatpush.bf16.msra.mxu0 %v614
    %1673 = vmatpush.bf16.msra.mxu0 %v610
    %1674 = vmatpush.bf16.msra.mxu0 %v606
    %1675 = vmatpush.bf16.msra.mxu0 %v602
    %1676 = vmatmul.bf16.gmra.mxu0 %v1527
    %v1677 = vpop.f32.mrf.mxu0
    %v1678 = vadd.f32 0.0, %v1677
    %v1679 = vpop.f32.mrf.mxu0
    %1680 = vdwg.mxu0
    %1681 = vmatpush.bf16.msra.mxu0 %v631
    %1682 = vmatpush.bf16.msra.mxu0 %v627
    %1683 = vmatpush.bf16.msra.mxu0 %v623
    %1684 = vmatpush.bf16.msra.mxu0 %v619
    %1685 = vmatpush.bf16.msra.mxu0 %v615
    %1686 = vmatpush.bf16.msra.mxu0 %v611
    %1687 = vmatpush.bf16.msra.mxu0 %v607
    %1688 = vmatpush.bf16.msra.mxu0 %v603
    %1689 = vmatmul.bf16.gmra.mxu0 %v1527
    %v1690 = vpop.f32.mrf.mxu0
    %v1691 = vadd.f32 0.0, %v1690
    %v1692 = vpop.f32.mrf.mxu0
    %1693 = vdwg.mxu0
    %1694 = vmatpush.bf16.msra.mxu0 %v632
    %1695 = vmatpush.bf16.msra.mxu0 %v628
    %1696 = vmatpush.bf16.msra.mxu0 %v624
    %1697 = vmatpush.bf16.msra.mxu0 %v620
    %1698 = vmatpush.bf16.msra.mxu0 %v616
    %1699 = vmatpush.bf16.msra.mxu0 %v612
    %1700 = vmatpush.bf16.msra.mxu0 %v608
    %1701 = vmatpush.bf16.msra.mxu0 %v604
    %1702 = vmatmul.bf16.gmra.mxu0 %v1527
    %v1703 = vpop.f32.mrf.mxu0
    %v1704 = vadd.f32 0.0, %v1703
    %v1705 = vpop.f32.mrf.mxu0
    %1706 = vdwg.mxu0
    %v1707 = vadd.f32 %v1651, %v1665
    %v1708 = vadd.f32 %v1652, %v1678
    %v1709 = vadd.f32 %v1653, %v1691
    %v1710 = vadd.f32 %v1654, %v1704
    %v1711 = vmul.f32 %v1707, 0.5
    %v1712 = vmul.f32 %v1708, 0.5
    %v1713 = vmul.f32 %v1709, 0.5
    %v1714 = vtanh.pop %v1711
    %v1715 = vtanh.pop %v1712
    %v1716 = vtanh.pop %v1713
    %v1717 = vmul.f32 %v1714, 0.5
    %v1718 = vmul.f32 %v1715, 0.5
    %v1719 = vmul.f32 %v1716, 0.5
    %v1720 = vadd.f32 %v1717, 0.5
    %v1721 = vadd.f32 %v1718, 0.5
    %v1722 = vadd.f32 %v1719, 0.5
    %v1723 = vtanh.pop %v1710
    %v1724 = vmul.f32 %v1721, %v1524
    %v1725 = vmul.f32 %v1720, %v1723
    %v1726 = vadd.f32 %v1724, %v1725
    %v1727 = vtanh.pop %v1726
    %v1728 = vmul.f32 %v1722, %v1727
    %v1729 = vpack.c.bf16 %v1728, %v1728
    %v1730 = vpack.c.bf16 %v1650, %v1650
    %1731 = vmatpush.bf16.msra.mxu0 %v1025
    %1732 = vmatpush.bf16.msra.mxu0 %v1021
    %1733 = vmatpush.bf16.msra.mxu0 %v1017
    %1734 = vmatpush.bf16.msra.mxu0 %v1013
    %1735 = vmatpush.bf16.msra.mxu0 %v1009
    %1736 = vmatpush.bf16.msra.mxu0 %v1005
    %1737 = vmatpush.bf16.msra.mxu0 %v1001
    %1738 = vmatpush.bf16.msra.mxu0 %v997
    %1739 = vmatmul.bf16.gmra.mxu0 %v1729
    %v1740 = vpop.f32.mrf.mxu0
    %v1741 = vadd.f32 %v461, %v1740
    %v1742 = vpop.f32.mrf.mxu0
    %1743 = vdwg.mxu0
    %1744 = vmatpush.bf16.msra.mxu0 %v1057
    %1745 = vmatpush.bf16.msra.mxu0 %v1053
    %1746 = vmatpush.bf16.msra.mxu0 %v1049
    %1747 = vmatpush.bf16.msra.mxu0 %v1045
    %1748 = vmatpush.bf16.msra.mxu0 %v1041
    %1749 = vmatpush.bf16.msra.mxu0 %v1037
    %1750 = vmatpush.bf16.msra.mxu0 %v1033
    %1751 = vmatpush.bf16.msra.mxu0 %v1029
    %1752 = vmatmul.bf16.gmra.mxu0 %v1730
    %v1753 = vpop.f32.mrf.mxu0
    %v1754 = vadd.f32 %v1741, %v1753
    %v1755 = vpop.f32.mrf.mxu0
    %1756 = vdwg.mxu0
    %1757 = vmatpush.bf16.msra.mxu0 %v1026
    %1758 = vmatpush.bf16.msra.mxu0 %v1022
    %1759 = vmatpush.bf16.msra.mxu0 %v1018
    %1760 = vmatpush.bf16.msra.mxu0 %v1014
    %1761 = vmatpush.bf16.msra.mxu0 %v1010
    %1762 = vmatpush.bf16.msra.mxu0 %v1006
    %1763 = vmatpush.bf16.msra.mxu0 %v1002
    %1764 = vmatpush.bf16.msra.mxu0 %v998
    %1765 = vmatmul.bf16.gmra.mxu0 %v1729
    %v1766 = vpop.f32.mrf.mxu0
    %v1767 = vadd.f32 %v462, %v1766
    %v1768 = vpop.f32.mrf.mxu0
    %1769 = vdwg.mxu0
    %1770 = vmatpush.bf16.msra.mxu0 %v1058
    %1771 = vmatpush.bf16.msra.mxu0 %v1054
    %1772 = vmatpush.bf16.msra.mxu0 %v1050
    %1773 = vmatpush.bf16.msra.mxu0 %v1046
    %1774 = vmatpush.bf16.msra.mxu0 %v1042
    %1775 = vmatpush.bf16.msra.mxu0 %v1038
    %1776 = vmatpush.bf16.msra.mxu0 %v1034
    %1777 = vmatpush.bf16.msra.mxu0 %v1030
    %1778 = vmatmul.bf16.gmra.mxu0 %v1730
    %v1779 = vpop.f32.mrf.mxu0
    %v1780 = vadd.f32 %v1767, %v1779
    %v1781 = vpop.f32.mrf.mxu0
    %1782 = vdwg.mxu0
    %1783 = vmatpush.bf16.msra.mxu0 %v1027
    %1784 = vmatpush.bf16.msra.mxu0 %v1023
    %1785 = vmatpush.bf16.msra.mxu0 %v1019
    %1786 = vmatpush.bf16.msra.mxu0 %v1015
    %1787 = vmatpush.bf16.msra.mxu0 %v1011
    %1788 = vmatpush.bf16.msra.mxu0 %v1007
    %1789 = vmatpush.bf16.msra.mxu0 %v1003
    %1790 = vmatpush.bf16.msra.mxu0 %v999
    %1791 = vmatmul.bf16.gmra.mxu0 %v1729
    %v1792 = vpop.f32.mrf.mxu0
    %v1793 = vadd.f32 %v463, %v1792
    %v1794 = vpop.f32.mrf.mxu0
    %1795 = vdwg.mxu0
    %1796 = vmatpush.bf16.msra.mxu0 %v1059
    %1797 = vmatpush.bf16.msra.mxu0 %v1055
    %1798 = vmatpush.bf16.msra.mxu0 %v1051
    %1799 = vmatpush.bf16.msra.mxu0 %v1047
    %1800 = vmatpush.bf16.msra.mxu0 %v1043
    %1801 = vmatpush.bf16.msra.mxu0 %v1039
    %1802 = vmatpush.bf16.msra.mxu0 %v1035
    %1803 = vmatpush.bf16.msra.mxu0 %v1031
    %1804 = vmatmul.bf16.gmra.mxu0 %v1730
    %v1805 = vpop.f32.mrf.mxu0
    %v1806 = vadd.f32 %v1793, %v1805
    %v1807 = vpop.f32.mrf.mxu0
    %1808 = vdwg.mxu0
    %1809 = vmatpush.bf16.msra.mxu0 %v1028
    %1810 = vmatpush.bf16.msra.mxu0 %v1024
    %1811 = vmatpush.bf16.msra.mxu0 %v1020
    %1812 = vmatpush.bf16.msra.mxu0 %v1016
    %1813 = vmatpush.bf16.msra.mxu0 %v1012
    %1814 = vmatpush.bf16.msra.mxu0 %v1008
    %1815 = vmatpush.bf16.msra.mxu0 %v1004
    %1816 = vmatpush.bf16.msra.mxu0 %v1000
    %1817 = vmatmul.bf16.gmra.mxu0 %v1729
    %v1818 = vpop.f32.mrf.mxu0
    %v1819 = vadd.f32 %v464, %v1818
    %v1820 = vpop.f32.mrf.mxu0
    %1821 = vdwg.mxu0
    %1822 = vmatpush.bf16.msra.mxu0 %v1060
    %1823 = vmatpush.bf16.msra.mxu0 %v1056
    %1824 = vmatpush.bf16.msra.mxu0 %v1052
    %1825 = vmatpush.bf16.msra.mxu0 %v1048
    %1826 = vmatpush.bf16.msra.mxu0 %v1044
    %1827 = vmatpush.bf16.msra.mxu0 %v1040
    %1828 = vmatpush.bf16.msra.mxu0 %v1036
    %1829 = vmatpush.bf16.msra.mxu0 %v1032
    %1830 = vmatmul.bf16.gmra.mxu0 %v1730
    %v1831 = vpop.f32.mrf.mxu0
    %v1832 = vadd.f32 %v1819, %v1831
    %v1833 = vpop.f32.mrf.mxu0
    %1834 = vdwg.mxu0
    %v1835 = vmul.f32 %v1754, 0.5
    %v1836 = vmul.f32 %v1780, 0.5
    %v1837 = vmul.f32 %v1806, 0.5
    %v1838 = vtanh.pop %v1835
    %v1839 = vtanh.pop %v1836
    %v1840 = vtanh.pop %v1837
    %v1841 = vmul.f32 %v1838, 0.5
    %v1842 = vmul.f32 %v1839, 0.5
    %v1843 = vmul.f32 %v1840, 0.5
    %v1844 = vadd.f32 %v1841, 0.5
    %v1845 = vadd.f32 %v1842, 0.5
    %v1846 = vadd.f32 %v1843, 0.5
    %v1847 = vtanh.pop %v1832
    %v1848 = vmul.f32 %v1845, %v1648
    %v1849 = vmul.f32 %v1844, %v1847
    %v1850 = vadd.f32 %v1848, %v1849
    %v1851 = vtanh.pop %v1850
    %v1852 = vmul.f32 %v1846, %v1851
    %v1853 = vld [vmem:[#allocation2 + $0x80] sm:$0xff]
    %v1854 = vld [vmem:[#allocation2 + $0x88] sm:$0xff]
    %v1855 = vld [vmem:[#allocation2 + $0x90] sm:$0xff]
    %v1856 = vld [vmem:[#allocation2 + $0x98] sm:$0xff]
    %1857 = vmatpush.bf16.msra.mxu0 %v629
    %1858 = vmatpush.bf16.msra.mxu0 %v625
    %1859 = vmatpush.bf16.msra.mxu0 %v621
    %1860 = vmatpush.bf16.msra.mxu0 %v617
    %1861 = vmatpush.bf16.msra.mxu0 %v613
    %1862 = vmatpush.bf16.msra.mxu0 %v609
    %1863 = vmatpush.bf16.msra.mxu0 %v605
    %1864 = vmatpush.bf16.msra.mxu0 %v601
    %1865 = vmatmul.bf16.gmra.mxu0 %v1729
    %v1866 = vpop.f32.mrf.mxu0
    %v1867 = vadd.f32 0.0, %v1866
    %v1868 = vpop.f32.mrf.mxu0
    %1869 = vdwg.mxu0
    %1870 = vmatpush.bf16.msra.mxu0 %v630
    %1871 = vmatpush.bf16.msra.mxu0 %v626
    %1872 = vmatpush.bf16.msra.mxu0 %v622
    %1873 = vmatpush.bf16.msra.mxu0 %v618
    %1874 = vmatpush.bf16.msra.mxu0 %v614
    %1875 = vmatpush.bf16.msra.mxu0 %v610
    %1876 = vmatpush.bf16.msra.mxu0 %v606
    %1877 = vmatpush.bf16.msra.mxu0 %v602
    %1878 = vmatmul.bf16.gmra.mxu0 %v1729
    %v1879 = vpop.f32.mrf.mxu0
    %v1880 = vadd.f32 0.0, %v1879
    %v1881 = vpop.f32.mrf.mxu0
    %1882 = vdwg.mxu0
    %1883 = vmatpush.bf16.msra.mxu0 %v631
    %1884 = vmatpush.bf16.msra.mxu0 %v627
    %1885 = vmatpush.bf16.msra.mxu0 %v623
    %1886 = vmatpush.bf16.msra.mxu0 %v619
    %1887 = vmatpush.bf16.msra.mxu0 %v615
    %1888 = vmatpush.bf16.msra.mxu0 %v611
    %1889 = vmatpush.bf16.msra.mxu0 %v607
    %1890 = vmatpush.bf16.msra.mxu0 %v603
    %1891 = vmatmul.bf16.gmra.mxu0 %v1729
    %v1892 = vpop.f32.mrf.mxu0
    %v1893 = vadd.f32 0.0, %v1892
    %v1894 = vpop.f32.mrf.mxu0
    %1895 = vdwg.mxu0
    %1896 = vmatpush.bf16.msra.mxu0 %v632
    %1897 = vmatpush.bf16.msra.mxu0 %v628
    %1898 = vmatpush.bf16.msra.mxu0 %v624
    %1899 = vmatpush.bf16.msra.mxu0 %v620
    %1900 = vmatpush.bf16.msra.mxu0 %v616
    %1901 = vmatpush.bf16.msra.mxu0 %v612
    %1902 = vmatpush.bf16.msra.mxu0 %v608
    %1903 = vmatpush.bf16.msra.mxu0 %v604
    %1904 = vmatmul.bf16.gmra.mxu0 %v1729
    %v1905 = vpop.f32.mrf.mxu0
    %v1906 = vadd.f32 0.0, %v1905
    %v1907 = vpop.f32.mrf.mxu0
    %1908 = vdwg.mxu0
    %v1909 = vadd.f32 %v1853, %v1867
    %v1910 = vadd.f32 %v1854, %v1880
    %v1911 = vadd.f32 %v1855, %v1893
    %v1912 = vadd.f32 %v1856, %v1906
    %v1913 = vmul.f32 %v1909, 0.5
    %v1914 = vmul.f32 %v1910, 0.5
    %v1915 = vmul.f32 %v1911, 0.5
    %v1916 = vtanh.pop %v1913
    %v1917 = vtanh.pop %v1914
    %v1918 = vtanh.pop %v1915
    %v1919 = vmul.f32 %v1916, 0.5
    %v1920 = vmul.f32 %v1917, 0.5
    %v1921 = vmul.f32 %v1918, 0.5
    %v1922 = vadd.f32 %v1919, 0.5
    %v1923 = vadd.f32 %v1920, 0.5
    %v1924 = vadd.f32 %v1921, 0.5
    %v1925 = vtanh.pop %v1912
    %v1926 = vmul.f32 %v1923, %v1726
    %v1927 = vmul.f32 %v1922, %v1925
    %v1928 = vadd.f32 %v1926, %v1927
    %v1929 = vtanh.pop %v1928
    %v1930 = vmul.f32 %v1924, %v1929
    %v1931 = vpack.c.bf16 %v1930, %v1930
    %v1932 = vpack.c.bf16 %v1852, %v1852
    %1933 = vmatpush.bf16.msra.mxu0 %v1025
    %1934 = vmatpush.bf16.msra.mxu0 %v1021
    %1935 = vmatpush.bf16.msra.mxu0 %v1017
    %1936 = vmatpush.bf16.msra.mxu0 %v1013
    %1937 = vmatpush.bf16.msra.mxu0 %v1009
    %1938 = vmatpush.bf16.msra.mxu0 %v1005
    %1939 = vmatpush.bf16.msra.mxu0 %v1001
    %1940 = vmatpush.bf16.msra.mxu0 %v997
    %1941 = vmatmul.bf16.gmra.mxu0 %v1931
    %v1942 = vpop.f32.mrf.mxu0
    %v1943 = vadd.f32 %v461, %v1942
    %v1944 = vpop.f32.mrf.mxu0
    %1945 = vdwg.mxu0
    %1946 = vmatpush.bf16.msra.mxu0 %v1057
    %1947 = vmatpush.bf16.msra.mxu0 %v1053
    %1948 = vmatpush.bf16.msra.mxu0 %v1049
    %1949 = vmatpush.bf16.msra.mxu0 %v1045
    %1950 = vmatpush.bf16.msra.mxu0 %v1041
    %1951 = vmatpush.bf16.msra.mxu0 %v1037
    %1952 = vmatpush.bf16.msra.mxu0 %v1033
    %1953 = vmatpush.bf16.msra.mxu0 %v1029
    %1954 = vmatmul.bf16.gmra.mxu0 %v1932
    %v1955 = vpop.f32.mrf.mxu0
    %v1956 = vadd.f32 %v1943, %v1955
    %v1957 = vpop.f32.mrf.mxu0
    %1958 = vdwg.mxu0
    %1959 = vmatpush.bf16.msra.mxu0 %v1026
    %1960 = vmatpush.bf16.msra.mxu0 %v1022
    %1961 = vmatpush.bf16.msra.mxu0 %v1018
    %1962 = vmatpush.bf16.msra.mxu0 %v1014
    %1963 = vmatpush.bf16.msra.mxu0 %v1010
    %1964 = vmatpush.bf16.msra.mxu0 %v1006
    %1965 = vmatpush.bf16.msra.mxu0 %v1002
    %1966 = vmatpush.bf16.msra.mxu0 %v998
    %1967 = vmatmul.bf16.gmra.mxu0 %v1931
    %v1968 = vpop.f32.mrf.mxu0
    %v1969 = vadd.f32 %v462, %v1968
    %v1970 = vpop.f32.mrf.mxu0
    %1971 = vdwg.mxu0
    %1972 = vmatpush.bf16.msra.mxu0 %v1058
    %1973 = vmatpush.bf16.msra.mxu0 %v1054
    %1974 = vmatpush.bf16.msra.mxu0 %v1050
    %1975 = vmatpush.bf16.msra.mxu0 %v1046
    %1976 = vmatpush.bf16.msra.mxu0 %v1042
    %1977 = vmatpush.bf16.msra.mxu0 %v1038
    %1978 = vmatpush.bf16.msra.mxu0 %v1034
    %1979 = vmatpush.bf16.msra.mxu0 %v1030
    %1980 = vmatmul.bf16.gmra.mxu0 %v1932
    %v1981 = vpop.f32.mrf.mxu0
    %v1982 = vadd.f32 %v1969, %v1981
    %v1983 = vpop.f32.mrf.mxu0
    %1984 = vdwg.mxu0
    %1985 = vmatpush.bf16.msra.mxu0 %v1027
    %1986 = vmatpush.bf16.msra.mxu0 %v1023
    %1987 = vmatpush.bf16.msra.mxu0 %v1019
    %1988 = vmatpush.bf16.msra.mxu0 %v1015
    %1989 = vmatpush.bf16.msra.mxu0 %v1011
    %1990 = vmatpush.bf16.msra.mxu0 %v1007
    %1991 = vmatpush.bf16.msra.mxu0 %v1003
    %1992 = vmatpush.bf16.msra.mxu0 %v999
    %1993 = vmatmul.bf16.gmra.mxu0 %v1931
    %v1994 = vpop.f32.mrf.mxu0
    %v1995 = vadd.f32 %v463, %v1994
    %v1996 = vpop.f32.mrf.mxu0
    %1997 = vdwg.mxu0
    %1998 = vmatpush.bf16.msra.mxu0 %v1059
    %1999 = vmatpush.bf16.msra.mxu0 %v1055
    %2000 = vmatpush.bf16.msra.mxu0 %v1051
    %2001 = vmatpush.bf16.msra.mxu0 %v1047
    %2002 = vmatpush.bf16.msra.mxu0 %v1043
    %2003 = vmatpush.bf16.msra.mxu0 %v1039
    %2004 = vmatpush.bf16.msra.mxu0 %v1035
    %2005 = vmatpush.bf16.msra.mxu0 %v1031
    %2006 = vmatmul.bf16.gmra.mxu0 %v1932
    %v2007 = vpop.f32.mrf.mxu0
    %v2008 = vadd.f32 %v1995, %v2007
    %v2009 = vpop.f32.mrf.mxu0
    %2010 = vdwg.mxu0
    %2011 = vmatpush.bf16.msra.mxu0 %v1028
    %2012 = vmatpush.bf16.msra.mxu0 %v1024
    %2013 = vmatpush.bf16.msra.mxu0 %v1020
    %2014 = vmatpush.bf16.msra.mxu0 %v1016
    %2015 = vmatpush.bf16.msra.mxu0 %v1012
    %2016 = vmatpush.bf16.msra.mxu0 %v1008
    %2017 = vmatpush.bf16.msra.mxu0 %v1004
    %2018 = vmatpush.bf16.msra.mxu0 %v1000
    %2019 = vmatmul.bf16.gmra.mxu0 %v1931
    %v2020 = vpop.f32.mrf.mxu0
    %v2021 = vadd.f32 %v464, %v2020
    %v2022 = vpop.f32.mrf.mxu0
    %2023 = vdwg.mxu0
    %2024 = vmatpush.bf16.msra.mxu0 %v1060
    %2025 = vmatpush.bf16.msra.mxu0 %v1056
    %2026 = vmatpush.bf16.msra.mxu0 %v1052
    %2027 = vmatpush.bf16.msra.mxu0 %v1048
    %2028 = vmatpush.bf16.msra.mxu0 %v1044
    %2029 = vmatpush.bf16.msra.mxu0 %v1040
    %2030 = vmatpush.bf16.msra.mxu0 %v1036
    %2031 = vmatpush.bf16.msra.mxu0 %v1032
    %2032 = vmatmul.bf16.gmra.mxu0 %v1932
    %v2033 = vpop.f32.mrf.mxu0
    %v2034 = vadd.f32 %v2021, %v2033
    %v2035 = vpop.f32.mrf.mxu0
    %2036 = vdwg.mxu0
    %v2037 = vmul.f32 %v1956, 0.5
    %v2038 = vmul.f32 %v1982, 0.5
    %v2039 = vmul.f32 %v2008, 0.5
    %v2040 = vtanh.pop %v2037
    %v2041 = vtanh.pop %v2038
    %v2042 = vtanh.pop %v2039
    %v2043 = vmul.f32 %v2040, 0.5
    %v2044 = vmul.f32 %v2041, 0.5
    %v2045 = vmul.f32 %v2042, 0.5
    %v2046 = vadd.f32 %v2043, 0.5
    %v2047 = vadd.f32 %v2044, 0.5
    %v2048 = vadd.f32 %v2045, 0.5
    %v2049 = vtanh.pop %v2034
    %v2050 = vmul.f32 %v2047, %v1850
    %v2051 = vmul.f32 %v2046, %v2049
    %v2052 = vadd.f32 %v2050, %v2051
    %v2053 = vtanh.pop %v2052
    %v2054 = vmul.f32 %v2048, %v2053
    %v2055 = vld [vmem:[#allocation2 + $0xa0] sm:$0xff]
    %v2056 = vld [vmem:[#allocation2 + $0xa8] sm:$0xff]
    %v2057 = vld [vmem:[#allocation2 + $0xb0] sm:$0xff]
    %v2058 = vld [vmem:[#allocation2 + $0xb8] sm:$0xff]
    %2059 = vmatpush.bf16.msra.mxu0 %v629
    %2060 = vmatpush.bf16.msra.mxu0 %v625
    %2061 = vmatpush.bf16.msra.mxu0 %v621
    %2062 = vmatpush.bf16.msra.mxu0 %v617
    %2063 = vmatpush.bf16.msra.mxu0 %v613
    %2064 = vmatpush.bf16.msra.mxu0 %v609
    %2065 = vmatpush.bf16.msra.mxu0 %v605
    %2066 = vmatpush.bf16.msra.mxu0 %v601
    %2067 = vmatmul.bf16.gmra.mxu0 %v1931
    %v2068 = vpop.f32.mrf.mxu0
    %v2069 = vadd.f32 0.0, %v2068
    %v2070 = vpop.f32.mrf.mxu0
    %2071 = vdwg.mxu0
    %2072 = vmatpush.bf16.msra.mxu0 %v630
    %2073 = vmatpush.bf16.msra.mxu0 %v626
    %2074 = vmatpush.bf16.msra.mxu0 %v622
    %2075 = vmatpush.bf16.msra.mxu0 %v618
    %2076 = vmatpush.bf16.msra.mxu0 %v614
    %2077 = vmatpush.bf16.msra.mxu0 %v610
    %2078 = vmatpush.bf16.msra.mxu0 %v606
    %2079 = vmatpush.bf16.msra.mxu0 %v602
    %2080 = vmatmul.bf16.gmra.mxu0 %v1931
    %v2081 = vpop.f32.mrf.mxu0
    %v2082 = vadd.f32 0.0, %v2081
    %v2083 = vpop.f32.mrf.mxu0
    %2084 = vdwg.mxu0
    %2085 = vmatpush.bf16.msra.mxu0 %v631
    %2086 = vmatpush.bf16.msra.mxu0 %v627
    %2087 = vmatpush.bf16.msra.mxu0 %v623
    %2088 = vmatpush.bf16.msra.mxu0 %v619
    %2089 = vmatpush.bf16.msra.mxu0 %v615
    %2090 = vmatpush.bf16.msra.mxu0 %v611
    %2091 = vmatpush.bf16.msra.mxu0 %v607
    %2092 = vmatpush.bf16.msra.mxu0 %v603
    %2093 = vmatmul.bf16.gmra.mxu0 %v1931
    %v2094 = vpop.f32.mrf.mxu0
    %v2095 = vadd.f32 0.0, %v2094
    %v2096 = vpop.f32.mrf.mxu0
    %2097 = vdwg.mxu0
    %2098 = vmatpush.bf16.msra.mxu0 %v632
    %2099 = vmatpush.bf16.msra.mxu0 %v628
    %2100 = vmatpush.bf16.msra.mxu0 %v624
    %2101 = vmatpush.bf16.msra.mxu0 %v620
    %2102 = vmatpush.bf16.msra.mxu0 %v616
    %2103 = vmatpush.bf16.msra.mxu0 %v612
    %2104 = vmatpush.bf16.msra.mxu0 %v608
    %2105 = vmatpush.bf16.msra.mxu0 %v604
    %2106 = vmatmul.bf16.gmra.mxu0 %v1931
    %v2107 = vpop.f32.mrf.mxu0
    %v2108 = vadd.f32 0.0, %v2107
    %v2109 = vpop.f32.mrf.mxu0
    %2110 = vdwg.mxu0
    %v2111 = vadd.f32 %v2055, %v2069
    %v2112 = vadd.f32 %v2056, %v2082
    %v2113 = vadd.f32 %v2057, %v2095
    %v2114 = vadd.f32 %v2058, %v2108
    %v2115 = vmul.f32 %v2111, 0.5
    %v2116 = vmul.f32 %v2112, 0.5
    %v2117 = vmul.f32 %v2113, 0.5
    %v2118 = vtanh.pop %v2115
    %v2119 = vtanh.pop %v2116
    %v2120 = vtanh.pop %v2117
    %v2121 = vmul.f32 %v2118, 0.5
    %v2122 = vmul.f32 %v2119, 0.5
    %v2123 = vmul.f32 %v2120, 0.5
    %v2124 = vadd.f32 %v2121, 0.5
    %v2125 = vadd.f32 %v2122, 0.5
    %v2126 = vadd.f32 %v2123, 0.5
    %v2127 = vtanh.pop %v2114
    %v2128 = vmul.f32 %v2125, %v1928
    %v2129 = vmul.f32 %v2124, %v2127
    %v2130 = vadd.f32 %v2128, %v2129
    %v2131 = vtanh.pop %v2130
    %v2132 = vmul.f32 %v2126, %v2131
    %v2133 = vpack.c.bf16 %v2132, %v2132
    %v2134 = vpack.c.bf16 %v2054, %v2054
    %2135 = vmatpush.bf16.msra.mxu0 %v1025
    %2136 = vmatpush.bf16.msra.mxu0 %v1021
    %2137 = vmatpush.bf16.msra.mxu0 %v1017
    %2138 = vmatpush.bf16.msra.mxu0 %v1013
    %2139 = vmatpush.bf16.msra.mxu0 %v1009
    %2140 = vmatpush.bf16.msra.mxu0 %v1005
    %2141 = vmatpush.bf16.msra.mxu0 %v1001
    %2142 = vmatpush.bf16.msra.mxu0 %v997
    %2143 = vmatmul.bf16.gmra.mxu0 %v2133
    %v2144 = vpop.f32.mrf.mxu0
    %v2145 = vadd.f32 %v461, %v2144
    %v2146 = vpop.f32.mrf.mxu0
    %2147 = vdwg.mxu0
    %2148 = vmatpush.bf16.msra.mxu0 %v1057
    %2149 = vmatpush.bf16.msra.mxu0 %v1053
    %2150 = vmatpush.bf16.msra.mxu0 %v1049
    %2151 = vmatpush.bf16.msra.mxu0 %v1045
    %2152 = vmatpush.bf16.msra.mxu0 %v1041
    %2153 = vmatpush.bf16.msra.mxu0 %v1037
    %2154 = vmatpush.bf16.msra.mxu0 %v1033
    %2155 = vmatpush.bf16.msra.mxu0 %v1029
    %2156 = vmatmul.bf16.gmra.mxu0 %v2134
    %v2157 = vpop.f32.mrf.mxu0
    %v2158 = vadd.f32 %v2145, %v2157
    %v2159 = vpop.f32.mrf.mxu0
    %2160 = vdwg.mxu0
    %2161 = vmatpush.bf16.msra.mxu0 %v1026
    %2162 = vmatpush.bf16.msra.mxu0 %v1022
    %2163 = vmatpush.bf16.msra.mxu0 %v1018
    %2164 = vmatpush.bf16.msra.mxu0 %v1014
    %2165 = vmatpush.bf16.msra.mxu0 %v1010
    %2166 = vmatpush.bf16.msra.mxu0 %v1006
    %2167 = vmatpush.bf16.msra.mxu0 %v1002
    %2168 = vmatpush.bf16.msra.mxu0 %v998
    %2169 = vmatmul.bf16.gmra.mxu0 %v2133
    %v2170 = vpop.f32.mrf.mxu0
    %v2171 = vadd.f32 %v462, %v2170
    %v2172 = vpop.f32.mrf.mxu0
    %2173 = vdwg.mxu0
    %2174 = vmatpush.bf16.msra.mxu0 %v1058
    %2175 = vmatpush.bf16.msra.mxu0 %v1054
    %2176 = vmatpush.bf16.msra.mxu0 %v1050
    %2177 = vmatpush.bf16.msra.mxu0 %v1046
    %2178 = vmatpush.bf16.msra.mxu0 %v1042
    %2179 = vmatpush.bf16.msra.mxu0 %v1038
    %2180 = vmatpush.bf16.msra.mxu0 %v1034
    %2181 = vmatpush.bf16.msra.mxu0 %v1030
    %2182 = vmatmul.bf16.gmra.mxu0 %v2134
    %v2183 = vpop.f32.mrf.mxu0
    %v2184 = vadd.f32 %v2171, %v2183
    %v2185 = vpop.f32.mrf.mxu0
    %2186 = vdwg.mxu0
    %2187 = vmatpush.bf16.msra.mxu0 %v1027
    %2188 = vmatpush.bf16.msra.mxu0 %v1023
    %2189 = vmatpush.bf16.msra.mxu0 %v1019
    %2190 = vmatpush.bf16.msra.mxu0 %v1015
    %2191 = vmatpush.bf16.msra.mxu0 %v1011
    %2192 = vmatpush.bf16.msra.mxu0 %v1007
    %2193 = vmatpush.bf16.msra.mxu0 %v1003
    %2194 = vmatpush.bf16.msra.mxu0 %v999
    %2195 = vmatmul.bf16.gmra.mxu0 %v2133
    %v2196 = vpop.f32.mrf.mxu0
    %v2197 = vadd.f32 %v463, %v2196
    %v2198 = vpop.f32.mrf.mxu0
    %2199 = vdwg.mxu0
    %2200 = vmatpush.bf16.msra.mxu0 %v1059
    %2201 = vmatpush.bf16.msra.mxu0 %v1055
    %2202 = vmatpush.bf16.msra.mxu0 %v1051
    %2203 = vmatpush.bf16.msra.mxu0 %v1047
    %2204 = vmatpush.bf16.msra.mxu0 %v1043
    %2205 = vmatpush.bf16.msra.mxu0 %v1039
    %2206 = vmatpush.bf16.msra.mxu0 %v1035
    %2207 = vmatpush.bf16.msra.mxu0 %v1031
    %2208 = vmatmul.bf16.gmra.mxu0 %v2134
    %v2209 = vpop.f32.mrf.mxu0
    %v2210 = vadd.f32 %v2197, %v2209
    %v2211 = vpop.f32.mrf.mxu0
    %2212 = vdwg.mxu0
    %2213 = vmatpush.bf16.msra.mxu0 %v1028
    %2214 = vmatpush.bf16.msra.mxu0 %v1024
    %2215 = vmatpush.bf16.msra.mxu0 %v1020
    %2216 = vmatpush.bf16.msra.mxu0 %v1016
    %2217 = vmatpush.bf16.msra.mxu0 %v1012
    %2218 = vmatpush.bf16.msra.mxu0 %v1008
    %2219 = vmatpush.bf16.msra.mxu0 %v1004
    %2220 = vmatpush.bf16.msra.mxu0 %v1000
    %2221 = vmatmul.bf16.gmra.mxu0 %v2133
    %v2222 = vpop.f32.mrf.mxu0
    %v2223 = vadd.f32 %v464, %v2222
    %v2224 = vpop.f32.mrf.mxu0
    %2225 = vdwg.mxu0
    %2226 = vmatpush.bf16.msra.mxu0 %v1060
    %2227 = vmatpush.bf16.msra.mxu0 %v1056
    %2228 = vmatpush.bf16.msra.mxu0 %v1052
    %2229 = vmatpush.bf16.msra.mxu0 %v1048
    %2230 = vmatpush.bf16.msra.mxu0 %v1044
    %2231 = vmatpush.bf16.msra.mxu0 %v1040
    %2232 = vmatpush.bf16.msra.mxu0 %v1036
    %2233 = vmatpush.bf16.msra.mxu0 %v1032
    %2234 = vmatmul.bf16.gmra.mxu0 %v2134
    %v2235 = vpop.f32.mrf.mxu0
    %v2236 = vadd.f32 %v2223, %v2235
    %v2237 = vpop.f32.mrf.mxu0
    %2238 = vdwg.mxu0
    %v2239 = vmul.f32 %v2158, 0.5
    %v2240 = vmul.f32 %v2184, 0.5
    %v2241 = vmul.f32 %v2210, 0.5
    %v2242 = vtanh.pop %v2239
    %v2243 = vtanh.pop %v2240
    %v2244 = vtanh.pop %v2241
    %v2245 = vmul.f32 %v2242, 0.5
    %v2246 = vmul.f32 %v2243, 0.5
    %v2247 = vmul.f32 %v2244, 0.5
    %v2248 = vadd.f32 %v2245, 0.5
    %v2249 = vadd.f32 %v2246, 0.5
    %v2250 = vadd.f32 %v2247, 0.5
    %v2251 = vtanh.pop %v2236
    %v2252 = vmul.f32 %v2249, %v2052
    %v2253 = vmul.f32 %v2248, %v2251
    %v2254 = vadd.f32 %v2252, %v2253
    %v2255 = vtanh.pop %v2254
    %v2256 = vmul.f32 %v2250, %v2255
    %v2257 = vld [vmem:[#allocation2 + $0xc0] sm:$0xff]
    %v2258 = vld [vmem:[#allocation2 + $0xc8] sm:$0xff]
    %v2259 = vld [vmem:[#allocation2 + $0xd0] sm:$0xff]
    %v2260 = vld [vmem:[#allocation2 + $0xd8] sm:$0xff]
    %2261 = vmatpush.bf16.msra.mxu0 %v629
    %2262 = vmatpush.bf16.msra.mxu0 %v625
    %2263 = vmatpush.bf16.msra.mxu0 %v621
    %2264 = vmatpush.bf16.msra.mxu0 %v617
    %2265 = vmatpush.bf16.msra.mxu0 %v613
    %2266 = vmatpush.bf16.msra.mxu0 %v609
    %2267 = vmatpush.bf16.msra.mxu0 %v605
    %2268 = vmatpush.bf16.msra.mxu0 %v601
    %2269 = vmatmul.bf16.gmra.mxu0 %v2133
    %v2270 = vpop.f32.mrf.mxu0
    %v2271 = vadd.f32 0.0, %v2270
    %v2272 = vpop.f32.mrf.mxu0
    %2273 = vdwg.mxu0
    %2274 = vmatpush.bf16.msra.mxu0 %v630
    %2275 = vmatpush.bf16.msra.mxu0 %v626
    %2276 = vmatpush.bf16.msra.mxu0 %v622
    %2277 = vmatpush.bf16.msra.mxu0 %v618
    %2278 = vmatpush.bf16.msra.mxu0 %v614
    %2279 = vmatpush.bf16.msra.mxu0 %v610
    %2280 = vmatpush.bf16.msra.mxu0 %v606
    %2281 = vmatpush.bf16.msra.mxu0 %v602
    %2282 = vmatmul.bf16.gmra.mxu0 %v2133
    %v2283 = vpop.f32.mrf.mxu0
    %v2284 = vadd.f32 0.0, %v2283
    %v2285 = vpop.f32.mrf.mxu0
    %2286 = vdwg.mxu0
    %2287 = vmatpush.bf16.msra.mxu0 %v631
    %2288 = vmatpush.bf16.msra.mxu0 %v627
    %2289 = vmatpush.bf16.msra.mxu0 %v623
    %2290 = vmatpush.bf16.msra.mxu0 %v619
    %2291 = vmatpush.bf16.msra.mxu0 %v615
    %2292 = vmatpush.bf16.msra.mxu0 %v611
    %2293 = vmatpush.bf16.msra.mxu0 %v607
    %2294 = vmatpush.bf16.msra.mxu0 %v603
    %2295 = vmatmul.bf16.gmra.mxu0 %v2133
    %v2296 = vpop.f32.mrf.mxu0
    %v2297 = vadd.f32 0.0, %v2296
    %v2298 = vpop.f32.mrf.mxu0
    %2299 = vdwg.mxu0
    %2300 = vmatpush.bf16.msra.mxu0 %v632
    %2301 = vmatpush.bf16.msra.mxu0 %v628
    %2302 = vmatpush.bf16.msra.mxu0 %v624
    %2303 = vmatpush.bf16.msra.mxu0 %v620
    %2304 = vmatpush.bf16.msra.mxu0 %v616
    %2305 = vmatpush.bf16.msra.mxu0 %v612
    %2306 = vmatpush.bf16.msra.mxu0 %v608
    %2307 = vmatpush.bf16.msra.mxu0 %v604
    %2308 = vmatmul.bf16.gmra.mxu0 %v2133
    %v2309 = vpop.f32.mrf.mxu0
    %v2310 = vadd.f32 0.0, %v2309
    %v2311 = vpop.f32.mrf.mxu0
    %2312 = vdwg.mxu0
    %v2313 = vadd.f32 %v2257, %v2271
    %v2314 = vadd.f32 %v2258, %v2284
    %v2315 = vadd.f32 %v2259, %v2297
    %v2316 = vadd.f32 %v2260, %v2310
    %v2317 = vmul.f32 %v2313, 0.5
    %v2318 = vmul.f32 %v2314, 0.5
    %v2319 = vmul.f32 %v2315, 0.5
    %v2320 = vtanh.pop %v2317
    %v2321 = vtanh.pop %v2318
    %v2322 = vtanh.pop %v2319
    %v2323 = vmul.f32 %v2320, 0.5
    %v2324 = vmul.f32 %v2321, 0.5
    %v2325 = vmul.f32 %v2322, 0.5
    %v2326 = vadd.f32 %v2323, 0.5
    %v2327 = vadd.f32 %v2324, 0.5
    %v2328 = vadd.f32 %v2325, 0.5
    %v2329 = vtanh.pop %v2316
    %v2330 = vmul.f32 %v2327, %v2130
    %v2331 = vmul.f32 %v2326, %v2329
    %v2332 = vadd.f32 %v2330, %v2331
    %v2333 = vtanh.pop %v2332
    %v2334 = vmul.f32 %v2328, %v2333
    %v2335 = vpack.c.bf16 %v2334, %v2334
    %v2336 = vpack.c.bf16 %v2256, %v2256
    %2337 = vmatpush.bf16.msra.mxu0 %v1025
    %2338 = vmatpush.bf16.msra.mxu0 %v1021
    %2339 = vmatpush.bf16.msra.mxu0 %v1017
    %2340 = vmatpush.bf16.msra.mxu0 %v1013
    %2341 = vmatpush.bf16.msra.mxu0 %v1009
    %2342 = vmatpush.bf16.msra.mxu0 %v1005
    %2343 = vmatpush.bf16.msra.mxu0 %v1001
    %2344 = vmatpush.bf16.msra.mxu0 %v997
    %2345 = vmatmul.bf16.gmra.mxu0 %v2335
    %v2346 = vpop.f32.mrf.mxu0
    %v2347 = vadd.f32 %v461, %v2346
    %v2348 = vpop.f32.mrf.mxu0
    %2349 = vdwg.mxu0
    %2350 = vmatpush.bf16.msra.mxu0 %v1057
    %2351 = vmatpush.bf16.msra.mxu0 %v1053
    %2352 = vmatpush.bf16.msra.mxu0 %v1049
    %2353 = vmatpush.bf16.msra.mxu0 %v1045
    %2354 = vmatpush.bf16.msra.mxu0 %v1041
    %2355 = vmatpush.bf16.msra.mxu0 %v1037
    %2356 = vmatpush.bf16.msra.mxu0 %v1033
    %2357 = vmatpush.bf16.msra.mxu0 %v1029
    %2358 = vmatmul.bf16.gmra.mxu0 %v2336
    %v2359 = vpop.f32.mrf.mxu0
    %v2360 = vadd.f32 %v2347, %v2359
    %v2361 = vpop.f32.mrf.mxu0
    %2362 = vdwg.mxu0
    %2363 = vmatpush.bf16.msra.mxu0 %v1026
    %2364 = vmatpush.bf16.msra.mxu0 %v1022
    %2365 = vmatpush.bf16.msra.mxu0 %v1018
    %2366 = vmatpush.bf16.msra.mxu0 %v1014
    %2367 = vmatpush.bf16.msra.mxu0 %v1010
    %2368 = vmatpush.bf16.msra.mxu0 %v1006
    %2369 = vmatpush.bf16.msra.mxu0 %v1002
    %2370 = vmatpush.bf16.msra.mxu0 %v998
    %2371 = vmatmul.bf16.gmra.mxu0 %v2335
    %v2372 = vpop.f32.mrf.mxu0
    %v2373 = vadd.f32 %v462, %v2372
    %v2374 = vpop.f32.mrf.mxu0
    %2375 = vdwg.mxu0
    %2376 = vmatpush.bf16.msra.mxu0 %v1058
    %2377 = vmatpush.bf16.msra.mxu0 %v1054
    %2378 = vmatpush.bf16.msra.mxu0 %v1050
    %2379 = vmatpush.bf16.msra.mxu0 %v1046
    %2380 = vmatpush.bf16.msra.mxu0 %v1042
    %2381 = vmatpush.bf16.msra.mxu0 %v1038
    %2382 = vmatpush.bf16.msra.mxu0 %v1034
    %2383 = vmatpush.bf16.msra.mxu0 %v1030
    %2384 = vmatmul.bf16.gmra.mxu0 %v2336
    %v2385 = vpop.f32.mrf.mxu0
    %v2386 = vadd.f32 %v2373, %v2385
    %v2387 = vpop.f32.mrf.mxu0
    %2388 = vdwg.mxu0
    %2389 = vmatpush.bf16.msra.mxu0 %v1027
    %2390 = vmatpush.bf16.msra.mxu0 %v1023
    %2391 = vmatpush.bf16.msra.mxu0 %v1019
    %2392 = vmatpush.bf16.msra.mxu0 %v1015
    %2393 = vmatpush.bf16.msra.mxu0 %v1011
    %2394 = vmatpush.bf16.msra.mxu0 %v1007
    %2395 = vmatpush.bf16.msra.mxu0 %v1003
    %2396 = vmatpush.bf16.msra.mxu0 %v999
    %2397 = vmatmul.bf16.gmra.mxu0 %v2335
    %v2398 = vpop.f32.mrf.mxu0
    %v2399 = vadd.f32 %v463, %v2398
    %v2400 = vpop.f32.mrf.mxu0
    %2401 = vdwg.mxu0
    %2402 = vmatpush.bf16.msra.mxu0 %v1059
    %2403 = vmatpush.bf16.msra.mxu0 %v1055
    %2404 = vmatpush.bf16.msra.mxu0 %v1051
    %2405 = vmatpush.bf16.msra.mxu0 %v1047
    %2406 = vmatpush.bf16.msra.mxu0 %v1043
    %2407 = vmatpush.bf16.msra.mxu0 %v1039
    %2408 = vmatpush.bf16.msra.mxu0 %v1035
    %2409 = vmatpush.bf16.msra.mxu0 %v1031
    %2410 = vmatmul.bf16.gmra.mxu0 %v2336
    %v2411 = vpop.f32.mrf.mxu0
    %v2412 = vadd.f32 %v2399, %v2411
    %v2413 = vpop.f32.mrf.mxu0
    %2414 = vdwg.mxu0
    %2415 = vmatpush.bf16.msra.mxu0 %v1028
    %2416 = vmatpush.bf16.msra.mxu0 %v1024
    %2417 = vmatpush.bf16.msra.mxu0 %v1020
    %2418 = vmatpush.bf16.msra.mxu0 %v1016
    %2419 = vmatpush.bf16.msra.mxu0 %v1012
    %2420 = vmatpush.bf16.msra.mxu0 %v1008
    %2421 = vmatpush.bf16.msra.mxu0 %v1004
    %2422 = vmatpush.bf16.msra.mxu0 %v1000
    %2423 = vmatmul.bf16.gmra.mxu0 %v2335
    %v2424 = vpop.f32.mrf.mxu0
    %v2425 = vadd.f32 %v464, %v2424
    %v2426 = vpop.f32.mrf.mxu0
    %2427 = vdwg.mxu0
    %2428 = vmatpush.bf16.msra.mxu0 %v1060
    %2429 = vmatpush.bf16.msra.mxu0 %v1056
    %2430 = vmatpush.bf16.msra.mxu0 %v1052
    %2431 = vmatpush.bf16.msra.mxu0 %v1048
    %2432 = vmatpush.bf16.msra.mxu0 %v1044
    %2433 = vmatpush.bf16.msra.mxu0 %v1040
    %2434 = vmatpush.bf16.msra.mxu0 %v1036
    %2435 = vmatpush.bf16.msra.mxu0 %v1032
    %2436 = vmatmul.bf16.gmra.mxu0 %v2336
    %v2437 = vpop.f32.mrf.mxu0
    %v2438 = vadd.f32 %v2425, %v2437
    %v2439 = vpop.f32.mrf.mxu0
    %2440 = vdwg.mxu0
    %v2441 = vmul.f32 %v2360, 0.5
    %v2442 = vmul.f32 %v2386, 0.5
    %v2443 = vmul.f32 %v2412, 0.5
    %v2444 = vtanh.pop %v2441
    %v2445 = vtanh.pop %v2442
    %v2446 = vtanh.pop %v2443
    %v2447 = vmul.f32 %v2444, 0.5
    %v2448 = vmul.f32 %v2445, 0.5
    %v2449 = vmul.f32 %v2446, 0.5
    %v2450 = vadd.f32 %v2447, 0.5
    %v2451 = vadd.f32 %v2448, 0.5
    %v2452 = vadd.f32 %v2449, 0.5
    %v2453 = vtanh.pop %v2438
    %v2454 = vmul.f32 %v2451, %v2254
    %v2455 = vmul.f32 %v2450, %v2453
    %v2456 = vadd.f32 %v2454, %v2455
    %v2457 = vtanh.pop %v2456
    %v2458 = vmul.f32 %v2452, %v2457
    %v2459 = vld [vmem:[#allocation2 + $0xe0] sm:$0xff]
    %v2460 = vld [vmem:[#allocation2 + $0xe8] sm:$0xff]
    %v2461 = vld [vmem:[#allocation2 + $0xf0] sm:$0xff]
    %v2462 = vld [vmem:[#allocation2 + $0xf8] sm:$0xff]
    %2463 = vmatpush.bf16.msra.mxu0 %v629
    %2464 = vmatpush.bf16.msra.mxu0 %v625
    %2465 = vmatpush.bf16.msra.mxu0 %v621
    %2466 = vmatpush.bf16.msra.mxu0 %v617
    %2467 = vmatpush.bf16.msra.mxu0 %v613
    %2468 = vmatpush.bf16.msra.mxu0 %v609
    %2469 = vmatpush.bf16.msra.mxu0 %v605
    %2470 = vmatpush.bf16.msra.mxu0 %v601
    %2471 = vmatmul.bf16.gmra.mxu0 %v2335
    %v2472 = vpop.f32.mrf.mxu0
    %v2473 = vadd.f32 0.0, %v2472
    %v2474 = vpop.f32.mrf.mxu0
    %2475 = vdwg.mxu0
    %2476 = vmatpush.bf16.msra.mxu0 %v630
    %2477 = vmatpush.bf16.msra.mxu0 %v626
    %2478 = vmatpush.bf16.msra.mxu0 %v622
    %2479 = vmatpush.bf16.msra.mxu0 %v618
    %2480 = vmatpush.bf16.msra.mxu0 %v614
    %2481 = vmatpush.bf16.msra.mxu0 %v610
    %2482 = vmatpush.bf16.msra.mxu0 %v606
    %2483 = vmatpush.bf16.msra.mxu0 %v602
    %2484 = vmatmul.bf16.gmra.mxu0 %v2335
    %v2485 = vpop.f32.mrf.mxu0
    %v2486 = vadd.f32 0.0, %v2485
    %v2487 = vpop.f32.mrf.mxu0
    %2488 = vdwg.mxu0
    %2489 = vmatpush.bf16.msra.mxu0 %v631
    %2490 = vmatpush.bf16.msra.mxu0 %v627
    %2491 = vmatpush.bf16.msra.mxu0 %v623
    %2492 = vmatpush.bf16.msra.mxu0 %v619
    %2493 = vmatpush.bf16.msra.mxu0 %v615
    %2494 = vmatpush.bf16.msra.mxu0 %v611
    %2495 = vmatpush.bf16.msra.mxu0 %v607
    %2496 = vmatpush.bf16.msra.mxu0 %v603
    %2497 = vmatmul.bf16.gmra.mxu0 %v2335
    %v2498 = vpop.f32.mrf.mxu0
    %v2499 = vadd.f32 0.0, %v2498
    %v2500 = vpop.f32.mrf.mxu0
    %2501 = vdwg.mxu0
    %2502 = vmatpush.bf16.msra.mxu0 %v632
    %2503 = vmatpush.bf16.msra.mxu0 %v628
    %2504 = vmatpush.bf16.msra.mxu0 %v624
    %2505 = vmatpush.bf16.msra.mxu0 %v620
    %2506 = vmatpush.bf16.msra.mxu0 %v616
    %2507 = vmatpush.bf16.msra.mxu0 %v612
    %2508 = vmatpush.bf16.msra.mxu0 %v608
    %2509 = vmatpush.bf16.msra.mxu0 %v604
    %2510 = vmatmul.bf16.gmra.mxu0 %v2335
    %v2511 = vpop.f32.mrf.mxu0
    %v2512 = vadd.f32 0.0, %v2511
    %v2513 = vpop.f32.mrf.mxu0
    %2514 = vdwg.mxu0
    %v2515 = vadd.f32 %v2459, %v2473
    %v2516 = vadd.f32 %v2460, %v2486
    %v2517 = vadd.f32 %v2461, %v2499
    %v2518 = vadd.f32 %v2462, %v2512
    %v2519 = vmul.f32 %v2515, 0.5
    %v2520 = vmul.f32 %v2516, 0.5
    %v2521 = vmul.f32 %v2517, 0.5
    %v2522 = vtanh.pop %v2519
    %v2523 = vtanh.pop %v2520
    %v2524 = vtanh.pop %v2521
    %v2525 = vmul.f32 %v2522, 0.5
    %v2526 = vmul.f32 %v2523, 0.5
    %v2527 = vmul.f32 %v2524, 0.5
    %v2528 = vadd.f32 %v2525, 0.5
    %v2529 = vadd.f32 %v2526, 0.5
    %v2530 = vadd.f32 %v2527, 0.5
    %v2531 = vtanh.pop %v2518
    %v2532 = vmul.f32 %v2529, %v2332
    %v2533 = vmul.f32 %v2528, %v2531
    %v2534 = vadd.f32 %v2532, %v2533
    %v2535 = vtanh.pop %v2534
    %v2536 = vmul.f32 %v2530, %v2535
    %v2537 = vpack.c.bf16 %v2536, %v2536
    %v2538 = vpack.c.bf16 %v2458, %v2458
    %2539 = vmatpush.bf16.msra.mxu0 %v1025
    %2540 = vmatpush.bf16.msra.mxu0 %v1021
    %2541 = vmatpush.bf16.msra.mxu0 %v1017
    %2542 = vmatpush.bf16.msra.mxu0 %v1013
    %2543 = vmatpush.bf16.msra.mxu0 %v1009
    %2544 = vmatpush.bf16.msra.mxu0 %v1005
    %2545 = vmatpush.bf16.msra.mxu0 %v1001
    %2546 = vmatpush.bf16.msra.mxu0 %v997
    %2547 = vmatmul.bf16.gmra.mxu0 %v2537
    %v2548 = vpop.f32.mrf.mxu0
    %v2549 = vadd.f32 %v461, %v2548
    %v2550 = vpop.f32.mrf.mxu0
    %2551 = vdwg.mxu0
    %2552 = vmatpush.bf16.msra.mxu0 %v1057
    %2553 = vmatpush.bf16.msra.mxu0 %v1053
    %2554 = vmatpush.bf16.msra.mxu0 %v1049
    %2555 = vmatpush.bf16.msra.mxu0 %v1045
    %2556 = vmatpush.bf16.msra.mxu0 %v1041
    %2557 = vmatpush.bf16.msra.mxu0 %v1037
    %2558 = vmatpush.bf16.msra.mxu0 %v1033
    %2559 = vmatpush.bf16.msra.mxu0 %v1029
    %2560 = vmatmul.bf16.gmra.mxu0 %v2538
    %v2561 = vpop.f32.mrf.mxu0
    %v2562 = vadd.f32 %v2549, %v2561
    %v2563 = vpop.f32.mrf.mxu0
    %2564 = vdwg.mxu0
    %2565 = vmatpush.bf16.msra.mxu0 %v1026
    %2566 = vmatpush.bf16.msra.mxu0 %v1022
    %2567 = vmatpush.bf16.msra.mxu0 %v1018
    %2568 = vmatpush.bf16.msra.mxu0 %v1014
    %2569 = vmatpush.bf16.msra.mxu0 %v1010
    %2570 = vmatpush.bf16.msra.mxu0 %v1006
    %2571 = vmatpush.bf16.msra.mxu0 %v1002
    %2572 = vmatpush.bf16.msra.mxu0 %v998
    %2573 = vmatmul.bf16.gmra.mxu0 %v2537
    %v2574 = vpop.f32.mrf.mxu0
    %v2575 = vadd.f32 %v462, %v2574
    %v2576 = vpop.f32.mrf.mxu0
    %2577 = vdwg.mxu0
    %2578 = vmatpush.bf16.msra.mxu0 %v1058
    %2579 = vmatpush.bf16.msra.mxu0 %v1054
    %2580 = vmatpush.bf16.msra.mxu0 %v1050
    %2581 = vmatpush.bf16.msra.mxu0 %v1046
    %2582 = vmatpush.bf16.msra.mxu0 %v1042
    %2583 = vmatpush.bf16.msra.mxu0 %v1038
    %2584 = vmatpush.bf16.msra.mxu0 %v1034
    %2585 = vmatpush.bf16.msra.mxu0 %v1030
    %2586 = vmatmul.bf16.gmra.mxu0 %v2538
    %v2587 = vpop.f32.mrf.mxu0
    %v2588 = vadd.f32 %v2575, %v2587
    %v2589 = vpop.f32.mrf.mxu0
    %2590 = vdwg.mxu0
    %2591 = vmatpush.bf16.msra.mxu0 %v1027
    %2592 = vmatpush.bf16.msra.mxu0 %v1023
    %2593 = vmatpush.bf16.msra.mxu0 %v1019
    %2594 = vmatpush.bf16.msra.mxu0 %v1015
    %2595 = vmatpush.bf16.msra.mxu0 %v1011
    %2596 = vmatpush.bf16.msra.mxu0 %v1007
    %2597 = vmatpush.bf16.msra.mxu0 %v1003
    %2598 = vmatpush.bf16.msra.mxu0 %v999
    %2599 = vmatmul.bf16.gmra.mxu0 %v2537
    %v2600 = vpop.f32.mrf.mxu0
    %v2601 = vadd.f32 %v463, %v2600
    %v2602 = vpop.f32.mrf.mxu0
    %2603 = vdwg.mxu0
    %2604 = vmatpush.bf16.msra.mxu0 %v1059
    %2605 = vmatpush.bf16.msra.mxu0 %v1055
    %2606 = vmatpush.bf16.msra.mxu0 %v1051
    %2607 = vmatpush.bf16.msra.mxu0 %v1047
    %2608 = vmatpush.bf16.msra.mxu0 %v1043
    %2609 = vmatpush.bf16.msra.mxu0 %v1039
    %2610 = vmatpush.bf16.msra.mxu0 %v1035
    %2611 = vmatpush.bf16.msra.mxu0 %v1031
    %2612 = vmatmul.bf16.gmra.mxu0 %v2538
    %v2613 = vpop.f32.mrf.mxu0
    %v2614 = vadd.f32 %v2601, %v2613
    %v2615 = vpop.f32.mrf.mxu0
    %2616 = vdwg.mxu0
    %2617 = vmatpush.bf16.msra.mxu0 %v1028
    %2618 = vmatpush.bf16.msra.mxu0 %v1024
    %2619 = vmatpush.bf16.msra.mxu0 %v1020
    %2620 = vmatpush.bf16.msra.mxu0 %v1016
    %2621 = vmatpush.bf16.msra.mxu0 %v1012
    %2622 = vmatpush.bf16.msra.mxu0 %v1008
    %2623 = vmatpush.bf16.msra.mxu0 %v1004
    %2624 = vmatpush.bf16.msra.mxu0 %v1000
    %2625 = vmatmul.bf16.gmra.mxu0 %v2537
    %v2626 = vpop.f32.mrf.mxu0
    %v2627 = vadd.f32 %v464, %v2626
    %v2628 = vpop.f32.mrf.mxu0
    %2629 = vdwg.mxu0
    %2630 = vmatpush.bf16.msra.mxu0 %v1060
    %2631 = vmatpush.bf16.msra.mxu0 %v1056
    %2632 = vmatpush.bf16.msra.mxu0 %v1052
    %2633 = vmatpush.bf16.msra.mxu0 %v1048
    %2634 = vmatpush.bf16.msra.mxu0 %v1044
    %2635 = vmatpush.bf16.msra.mxu0 %v1040
    %2636 = vmatpush.bf16.msra.mxu0 %v1036
    %2637 = vmatpush.bf16.msra.mxu0 %v1032
    %2638 = vmatmul.bf16.gmra.mxu0 %v2538
    %v2639 = vpop.f32.mrf.mxu0
    %v2640 = vadd.f32 %v2627, %v2639
    %v2641 = vpop.f32.mrf.mxu0
    %2642 = vdwg.mxu0
    %v2643 = vmul.f32 %v2562, 0.5
    %v2644 = vmul.f32 %v2588, 0.5
    %v2645 = vmul.f32 %v2614, 0.5
    %v2646 = vtanh.pop %v2643
    %v2647 = vtanh.pop %v2644
    %v2648 = vtanh.pop %v2645
    %v2649 = vmul.f32 %v2646, 0.5
    %v2650 = vmul.f32 %v2647, 0.5
    %v2651 = vmul.f32 %v2648, 0.5
    %v2652 = vadd.f32 %v2649, 0.5
    %v2653 = vadd.f32 %v2650, 0.5
    %v2654 = vadd.f32 %v2651, 0.5
    %v2655 = vtanh.pop %v2640
    %v2656 = vmul.f32 %v2653, %v2456
    %v2657 = vmul.f32 %v2652, %v2655
    %v2658 = vadd.f32 %v2656, %v2657
    %v2659 = vtanh.pop %v2658
    %v2660 = vmul.f32 %v2654, %v2659
    %v2661 = vpack.c.bf16 %v2660, %v2660
    %v2662 = vld [vmem:[%s6] sm:$0xf]
    %v2663 = vld [vmem:[%s6 + $0x4] sm:$0xf]
    %v2664 = vld [vmem:[%s6 + $0x8] sm:$0xf]
    %v2665 = vld [vmem:[%s6 + $0xc] sm:$0xf]
    %v2666 = vld [vmem:[%s6 + $0x10] sm:$0xf]
    %v2667 = vld [vmem:[%s6 + $0x14] sm:$0xf]
    %v2668 = vld [vmem:[%s6 + $0x18] sm:$0xf]
    %v2669 = vld [vmem:[%s6 + $0x1c] sm:$0xf]
    %v2670 = vld [vmem:[%s6 + $0x20] sm:$0xf]
    %v2671 = vld [vmem:[%s6 + $0x24] sm:$0xf]
    %v2672 = vld [vmem:[%s6 + $0x28] sm:$0xf]
    %v2673 = vld [vmem:[%s6 + $0x2c] sm:$0xf]
    %v2674 = vld [vmem:[%s6 + $0x30] sm:$0xf]
    %v2675 = vld [vmem:[%s6 + $0x34] sm:$0xf]
    %v2676 = vld [vmem:[%s6 + $0x38] sm:$0xf]
    %v2677 = vld [vmem:[%s6 + $0x3c] sm:$0xf]
    %v2678 = vld [vmem:[%s7] sm:$0x1]
    %v2680 = vperm.slane %v2678, 0
    %v2698 = vunpack.c.l.b16 %v2662
    %v2699 = vunpack.c.l.b16 %v2663
    %v2700 = vunpack.c.l.b16 %v2664
    %v2701 = vunpack.c.l.b16 %v2665
    %v2702 = vunpack.c.l.b16 %v2666
    %v2703 = vunpack.c.l.b16 %v2667
    %v2704 = vunpack.c.l.b16 %v2668
    %v2705 = vunpack.c.l.b16 %v2669
    %v2706 = vunpack.c.l.b16 %v2670
    %v2707 = vunpack.c.l.b16 %v2671
    %v2708 = vunpack.c.l.b16 %v2672
    %v2709 = vunpack.c.l.b16 %v2673
    %v2710 = vunpack.c.l.b16 %v2674
    %v2711 = vunpack.c.l.b16 %v2675
    %v2712 = vunpack.c.l.b16 %v2676
    %v2713 = vunpack.c.l.b16 %v2677
    %v2714 = vpack.c.b16 %v2699, %v2698
    %v2715 = vpack.c.b16 %v2701, %v2700
    %v2716 = vpack.c.b16 %v2703, %v2702
    %v2717 = vpack.c.b16 %v2705, %v2704
    %v2718 = vpack.c.b16 %v2707, %v2706
    %v2719 = vpack.c.b16 %v2709, %v2708
    %v2720 = vpack.c.b16 %v2711, %v2710
    %v2721 = vpack.c.b16 %v2713, %v2712
    %2730 = vmatpush.bf16.msra.mxu0 %v2721
    %2731 = vmatpush.bf16.msra.mxu0 %v2720
    %2732 = vmatpush.bf16.msra.mxu0 %v2719
    %2733 = vmatpush.bf16.msra.mxu0 %v2718
    %2734 = vmatpush.bf16.msra.mxu0 %v2717
    %2735 = vmatpush.bf16.msra.mxu0 %v2716
    %2736 = vmatpush.bf16.msra.mxu0 %v2715
    %2737 = vmatpush.bf16.msra.mxu0 %v2714
    %2738 = vmatmul.bf16.gmra.mxu0 %v2661
    %v2739 = vpop.f32.mrf.mxu0
    %v2740 = vadd.f32 %v2680, %v2739
    %v2741 = vpop.f32.mrf.mxu0
    %2742 = vdwg.mxu0
    %2743 = vst [vmem:[%s8] sm:$0xff] %v2740
    // Predicated region
    $region46: #{hand_gesture_lstm_forward.1} parent=1 // pred_check
      _
    $region47: #{hand_gesture_lstm_forward.1} parent=1 // pred_check_branch
      %2745 = sbr.rel (0) target = $region49
    $region48: #{hand_gesture_lstm_forward.1} parent=1 // pred_region
      _
    $region49: #{hand_gesture_lstm_forward.1} parent=1 // pred_fallthru
      _
    // Predicated region
    $region50: #{hand_gesture_lstm_forward.1} parent=1 // pred_check
      _
    $region51: #{hand_gesture_lstm_forward.1} parent=1 // pred_check_branch
      %2747 = sbr.rel (0) target = $region53
    $region52: #{hand_gesture_lstm_forward.1} parent=1 // pred_region
      _
    $region53: #{hand_gesture_lstm_forward.1} parent=1 // pred_fallthru
      _
    %2748 = vsyncpa [#allocation4], 1
    %2749 = vsyncpa [#allocation6], 1

</llo_original>
